<compile_context>
chip_gen: v6e
topology: v6e:2x2x1
jax: 0.10.0
libtpu: 0.0.40
codegen_flags: <defaults>
</compile_context>

<pallas_src>
import math

import jax
import jax.numpy as jnp
from jax.experimental import pallas as pl
from jax.experimental.pallas import tpu as pltpu

DROPOUT_P = 0.2
_DROP_THRESHOLD = int(DROPOUT_P * (1 << 32))   # keep element iff u32 bits >= this
_INV_KEEP = 1.0 / (1.0 - DROPOUT_P)


def _ffn_kernel(x_ref, w1_ref, b1_ref, w2_ref, b2_ref, rbits_ref, o_ref, acc_ref):
    """One (row-tile i, hidden-chunk j) grid step; hidden axis is the reduction."""
    j = pl.program_id(1)

    @pl.when(j == 0)
    def _():
        acc_ref[...] = jnp.zeros_like(acc_ref)

    # hidden chunk = relu(x @ W1[:, j] + b1[j]); bf16 MXU operands, f32 accumulate.
    h = jnp.dot(x_ref[...].astype(jnp.bfloat16), w1_ref[...],
                preferred_element_type=jnp.float32)
    h = jnp.maximum(h + b1_ref[...], 0.0)              # bias + ReLU in f32

    # Second matmul: accumulate this hidden chunk's contribution to (TM, C).
    acc_ref[...] += jnp.dot(h.astype(jnp.bfloat16), w2_ref[...],
                            preferred_element_type=jnp.float32)

    @pl.when(j == pl.num_programs(1) - 1)
    def _():
        y = acc_ref[...] + b2_ref[...]
        # Dropout (train-mode): integer-threshold compare, no int->float convert.
        keep = rbits_ref[...] >= jnp.uint32(_DROP_THRESHOLD)
        y = jnp.where(keep, y * _INV_KEEP, 0.0)
        o_ref[...] = y.astype(o_ref.dtype)


def _round_up(x, m):
    return (x + m - 1) // m * m


def feed_forward(x, w1, b1, w2, b2, *, dropout_key, return_keep_mask=False):
    """x: (B, T, C) f32.  w1: (C, 4C), b1: (1, 4C), w2: (4C, C), b2: (1, C).

    Weights are (in_features, out_features), i.e. transposed vs torch's
    nn.Linear.weight.  Dropout is always applied (training-mode forward).
    """
    B, T, C = x.shape
    H = w1.shape[1]
    M = B * T

    # Row tile: 128-aligned, big enough to keep the MXU fed and enable pipelining.
    TM = 256 if M >= 256 else 128
    # Hidden-chunk tile: bounds per-step VMEM regardless of model width.
    TH = next((t for t in (1024, 512, 256, 128) if H % t == 0), H)

    M_pad = _round_up(M, TM)
    x2 = x.reshape(M, C)
    if M_pad != M:
        x2 = jnp.pad(x2, ((0, M_pad - M), (0, 0)))

    # bf16 matmul operands (MXU-native); halves weight DMA and VMEM footprint.
    w1b = w1.astype(jnp.bfloat16)
    w2b = w2.astype(jnp.bfloat16)

    # Pre-generated dropout bits, one u32 per output element (distinct per row tile).
    rbits = jax.random.bits(dropout_key, (M_pad, C), dtype=jnp.uint32)

    grid = (M_pad // TM, H // TH)

    # Double-buffered VMEM estimate -> explicit limit (fails loudly at compile time
    # instead of tripping the 32 MiB default scoped limit as C grows).
    est = 2 * (TM * C * 4 + C * TH * 2 + TH * 4 + TH * C * 2 + C * 4
               + TM * C * 4 + TM * C * 4) + TM * C * 4
    vmem_limit = int(min(64 * 1024 * 1024, max(16 * 1024 * 1024, 2 * est)))

    out = pl.pallas_call(
        _ffn_kernel,
        out_shape=jax.ShapeDtypeStruct((M_pad, C), x.dtype),
        grid_spec=pltpu.PrefetchScalarGridSpec(
            num_scalar_prefetch=0,
            grid=grid,
            in_specs=[
                pl.BlockSpec((TM, C), lambda i, j: (i, 0)),   # x rows (resident over j)
                pl.BlockSpec((C, TH), lambda i, j: (0, j)),   # W1 hidden chunk
                pl.BlockSpec((1, TH), lambda i, j: (0, j)),   # b1 hidden chunk
                pl.BlockSpec((TH, C), lambda i, j: (j, 0)),   # W2 hidden chunk
                pl.BlockSpec((1, C), lambda i, j: (0, 0)),    # b2 (resident)
                pl.BlockSpec((TM, C), lambda i, j: (i, 0)),   # dropout bits
            ],
            out_specs=pl.BlockSpec((TM, C), lambda i, j: (i, 0)),
            scratch_shapes=[pltpu.VMEM((TM, C), jnp.float32)],
        ),
        compiler_params=pltpu.CompilerParams(
            dimension_semantics=("parallel", "arbitrary"),
            vmem_limit_bytes=vmem_limit,
        ),
    )(x2, w1b, b1, w2b, b2, rbits)

    y = out[:M].reshape(B, T, C)
    if return_keep_mask:
        keep = (rbits[:M] >= jnp.uint32(_DROP_THRESHOLD)).reshape(B, T, C)
        return y, keep
    return y


def init_params(key, n_embd):
    """nn.Linear-style init: U(-1/sqrt(fan_in), 1/sqrt(fan_in))."""
    hidden = 4 * n_embd
    k1, k2, k3, k4 = jax.random.split(key, 4)
    bound1 = 1.0 / math.sqrt(n_embd)
    bound2 = 1.0 / math.sqrt(hidden)
    w1 = jax.random.uniform(k1, (n_embd, hidden), jnp.float32, -bound1, bound1)
    b1 = jax.random.uniform(k2, (1, hidden), jnp.float32, -bound1, bound1)
    w2 = jax.random.uniform(k3, (hidden, n_embd), jnp.float32, -bound2, bound2)
    b2 = jax.random.uniform(k4, (1, n_embd), jnp.float32, -bound2, bound2)
    return w1, b1, w2, b2


if __name__ == "__main__":
    # Small shapes consistent with the module: batch=2, seq=8, n_embd=384 (hidden=1536).
    B, T, C = 2, 8, 384
    key = jax.random.PRNGKey(0)
    kx, kp, kd = jax.random.split(key, 3)
    x = jax.random.normal(kx, (B, T, C), dtype=jnp.float32)
    w1, b1, w2, b2 = init_params(kp, C)

    y, keep = feed_forward(x, w1, b1, w2, b2, dropout_key=kd, return_keep_mask=True)
    y = jax.block_until_ready(y)
    assert y.shape == (B, T, C)

    # Pure-JAX reference using the same bf16 matmul path and the same dropout mask.
    x2 = x.reshape(-1, C)
    h_ref = jnp.maximum(
        jnp.dot(x2.astype(jnp.bfloat16), w1.astype(jnp.bfloat16),
                preferred_element_type=jnp.float32) + b1, 0.0)
    y_ref = jnp.dot(h_ref.astype(jnp.bfloat16), w2.astype(jnp.bfloat16),
                    preferred_element_type=jnp.float32) + b2
    y_ref = jnp.where(keep.reshape(-1, C), y_ref * _INV_KEEP, 0.0).reshape(B, T, C)

    assert bool(jnp.allclose(y, y_ref, rtol=2e-2, atol=2e-2)), \
        float(jnp.max(jnp.abs(y - y_ref)))
    assert bool(jnp.any(y == 0.0))   # dropout produced exact zeros
    print("KERNEL_OK")
</pallas_src>

<mosaic_0001>
module attributes {stable_mosaic.version = 11 : i64} {
  func.func @_ffn_kernel(%arg0: i32, %arg1: i32, %arg2: memref<128x384xf32, #tpu.memory_space<vmem>>, %arg3: memref<384x512xbf16, #tpu.memory_space<vmem>>, %arg4: memref<1x512xf32, #tpu.memory_space<vmem>>, %arg5: memref<512x384xbf16, #tpu.memory_space<vmem>>, %arg6: memref<1x384xf32, #tpu.memory_space<vmem>>, %arg7: memref<128x384xi32, #tpu.memory_space<vmem>>, %arg8: memref<128x384xf32, #tpu.memory_space<vmem>>, %arg9: memref<128x384xf32, #tpu.memory_space<vmem>>) attributes {dimension_semantics = [#tpu.dimension_semantics<parallel>, #tpu.dimension_semantics<arbitrary>], iteration_bounds = array<i64: 1, 3>, scalar_prefetch = 0 : i64, scratch_operands = 1 : i64, tpu.core_type = #tpu.core_type<tc>, window_params = [{transform_indices = @transform_0, window_bounds = array<i64: 128, 384>}, {transform_indices = @transform_1, window_bounds = array<i64: 384, 512>}, {transform_indices = @transform_2, window_bounds = array<i64: 1, 512>}, {transform_indices = @transform_3, window_bounds = array<i64: 512, 384>}, {pipeline_mode = #tpu.pipeline_mode<synchronous>, transform_indices = @transform_4, window_bounds = array<i64: 1, 384>}, {transform_indices = @transform_5, window_bounds = array<i64: 128, 384>}, {transform_indices = @transform_6, window_bounds = array<i64: 128, 384>}]} {
    %c0_i32 = arith.constant 0 : i32
    %0 = arith.cmpi eq, %arg1, %c0_i32 : i32
    %1 = arith.extui %0 : i1 to i32
    %c0_i32_0 = arith.constant 0 : i32
    %2 = arith.cmpi ne, %1, %c0_i32_0 : i32
    scf.if %2 {
      %cst_15 = arith.constant 0.000000e+00 : f32
      %21 = vector.broadcast %cst_15 : f32 to vector<128x384xf32>
      %c0_16 = arith.constant 0 : index
      %c0_17 = arith.constant 0 : index
      %22 = vector.load %arg9[%c0_16, %c0_17] : memref<128x384xf32, #tpu.memory_space<vmem>>, vector<128x384xf32>
      tpu.vector_store %arg9[%c0_16, %c0_17], %21 {strides = array<i32>} : memref<128x384xf32, #tpu.memory_space<vmem>>, vector<128x384xf32>,
    } else {
    }
    %c0 = arith.constant 0 : index
    %c0_1 = arith.constant 0 : index
    %3 = vector.load %arg2[%c0, %c0_1] : memref<128x384xf32, #tpu.memory_space<vmem>>, vector<128x384xf32>
    %4 = arith.truncf %3 : vector<128x384xf32> to vector<128x384xbf16>
    %c0_2 = arith.constant 0 : index
    %c0_3 = arith.constant 0 : index
    %5 = vector.load %arg3[%c0_2, %c0_3] : memref<384x512xbf16, #tpu.memory_space<vmem>>, vector<384x512xbf16>
    %cst = arith.constant dense<0.000000e+00> : vector<128x512xf32>
    %6 = tpu.matmul %4, %5, %cst {dimension_numbers = #tpu.dot_dimension_numbers<[1], [0], [0], [1], [0, 0, 1, 1], [], []>} : vector<128x384xbf16>, vector<384x512xbf16>, vector<128x512xf32> -> vector<128x512xf32>
    %c0_4 = arith.constant 0 : index
    %c0_5 = arith.constant 0 : index
    %7 = vector.load %arg4[%c0_4, %c0_5] : memref<1x512xf32, #tpu.memory_space<vmem>>, vector<1x512xf32>
    %8 = vector.broadcast %7 : vector<1x512xf32> to vector<128x512xf32>
    %9 = arith.addf %6, %8 : vector<128x512xf32>
    %cst_6 = arith.constant 0.000000e+00 : f32
    %10 = vector.broadcast %cst_6 : f32 to vector<128x512xf32>
    %11 = arith.maximumf %9, %10 : vector<128x512xf32>
    %c0_7 = arith.constant 0 : index
    %c0_8 = arith.constant 0 : index
    %12 = vector.load %arg9[%c0_7, %c0_8] : memref<128x384xf32, #tpu.memory_space<vmem>>, vector<128x384xf32>
    %13 = arith.truncf %11 : vector<128x512xf32> to vector<128x512xbf16>
    %c0_9 = arith.constant 0 : index
    %c0_10 = arith.constant 0 : index
    %14 = vector.load %arg5[%c0_9, %c0_10] : memref<512x384xbf16, #tpu.memory_space<vmem>>, vector<512x384xbf16>
    %cst_11 = arith.constant dense<0.000000e+00> : vector<128x384xf32>
    %15 = tpu.matmul %13, %14, %cst_11 {dimension_numbers = #tpu.dot_dimension_numbers<[1], [0], [0], [1], [0, 0, 1, 1], [], []>} : vector<128x512xbf16>, vector<512x384xbf16>, vector<128x384xf32> -> vector<128x384xf32>
    %16 = arith.addf %12, %15 : vector<128x384xf32>
    %c0_12 = arith.constant 0 : index
    %c0_13 = arith.constant 0 : index
    %17 = vector.load %arg9[%c0_12, %c0_13] : memref<128x384xf32, #tpu.memory_space<vmem>>, vector<128x384xf32>
    tpu.vector_store %arg9[%c0_12, %c0_13], %16 {strides = array<i32>} : memref<128x384xf32, #tpu.memory_space<vmem>>, vector<128x384xf32>,
    %c2_i32 = arith.constant 2 : i32
    %18 = arith.cmpi eq, %arg1, %c2_i32 : i32
    %19 = arith.extui %18 : i1 to i32
    %c0_i32_14 = arith.constant 0 : i32
    %20 = arith.cmpi ne, %19, %c0_i32_14 : i32
    scf.if %20 {
      %c0_15 = arith.constant 0 : index
      %c0_16 = arith.constant 0 : index
      %21 = vector.load %arg9[%c0_15, %c0_16] : memref<128x384xf32, #tpu.memory_space<vmem>>, vector<128x384xf32>
      %c0_17 = arith.constant 0 : index
      %c0_18 = arith.constant 0 : index
      %22 = vector.load %arg6[%c0_17, %c0_18] : memref<1x384xf32, #tpu.memory_space<vmem>>, vector<1x384xf32>
      %23 = vector.broadcast %22 : vector<1x384xf32> to vector<128x384xf32>
      %24 = arith.addf %21, %23 : vector<128x384xf32>
      %c0_19 = arith.constant 0 : index
      %c0_20 = arith.constant 0 : index
      %25 = vector.load %arg7[%c0_19, %c0_20] : memref<128x384xi32, #tpu.memory_space<vmem>>, vector<128x384xi32>
      %c858993459_i32 = arith.constant 858993459 : i32
      %26 = vector.broadcast %c858993459_i32 : i32 to vector<128x384xi32>
      %27 = arith.cmpi uge, %25, %26 : vector<128x384xi32>
      %cst_21 = arith.constant 1.250000e+00 : f32
      %28 = vector.broadcast %cst_21 : f32 to vector<128x384xf32>
      %29 = arith.mulf %24, %28 : vector<128x384xf32>
      %cst_22 = arith.constant 0.000000e+00 : f32
      %30 = vector.broadcast %cst_22 : f32 to vector<128x384xf32>
      %31 = arith.select %27, %29, %30 : vector<128x384xi1>, vector<128x384xf32>
      %c0_23 = arith.constant 0 : index
      %c0_24 = arith.constant 0 : index
      %32 = vector.load %arg8[%c0_23, %c0_24] : memref<128x384xf32, #tpu.memory_space<vmem>>, vector<128x384xf32>
      tpu.vector_store %arg8[%c0_23, %c0_24], %31 {strides = array<i32>} : memref<128x384xf32, #tpu.memory_space<vmem>>, vector<128x384xf32>,
    } else {
    }
    return
  }
  func.func @transform_0(%arg0: i32, %arg1: i32) -> (i32, i32) {
    %c0_i32 = arith.constant 0 : i32
    %c0_i32_0 = arith.constant 0 : i32
    return %arg0, %c0_i32 : i32, i32
  }
  func.func @transform_1(%arg0: i32, %arg1: i32) -> (i32, i32) {
    %c0_i32 = arith.constant 0 : i32
    %c0_i32_0 = arith.constant 0 : i32
    return %c0_i32, %arg1 : i32, i32
  }
  func.func @transform_2(%arg0: i32, %arg1: i32) -> (i32, i32) {
    %c0_i32 = arith.constant 0 : i32
    %c0_i32_0 = arith.constant 0 : i32
    return %c0_i32, %arg1 : i32, i32
  }
  func.func @transform_3(%arg0: i32, %arg1: i32) -> (i32, i32) {
    %c0_i32 = arith.constant 0 : i32
    %c0_i32_0 = arith.constant 0 : i32
    return %arg1, %c0_i32 : i32, i32
  }
  func.func @transform_4(%arg0: i32, %arg1: i32) -> (i32, i32) {
    %c0_i32 = arith.constant 0 : i32
    %c0_i32_0 = arith.constant 0 : i32
    %c0_i32_1 = arith.constant 0 : i32
    return %c0_i32, %c0_i32_0 : i32, i32
  }
  func.func @transform_5(%arg0: i32, %arg1: i32) -> (i32, i32) {
    %c0_i32 = arith.constant 0 : i32
    %c0_i32_0 = arith.constant 0 : i32
    return %arg0, %c0_i32 : i32, i32
  }
  func.func @transform_6(%arg0: i32, %arg1: i32) -> (i32, i32) {
    %c0_i32 = arith.constant 0 : i32
    %c0_i32_0 = arith.constant 0 : i32
    return %arg0, %c0_i32 : i32, i32
  }
}

</mosaic_0001>

<llo_original>
// kernel: tpu_custom_call.1
$region0: #{tpu_custom_call.1}
  #allocation0 [shape = 'u32[]', space=smem, size = 0x4, offset = 0x4, fixed_abs, tag = 'smem constant byte address 0x4 - core index']
  #allocation1 [shape = 'u32[144,128]{1,0:T(1,128)}', space=vmem, size = 0x12000, scoped, tag = 'internal scratch']
  #allocation2 [shape = 'f32[128,384]{1,0:T(8,128)}', space=vmem, size = 0x30000, scoped, tag = 'scratch operand']
  %s0 = inlined_call_operand.hbm [shape: f32[128,384], index: 0, kind: input, shape index: {}]
  %s1 = inlined_call_operand.hbm [shape: bf16[384,1536], index: 1, kind: input, shape index: {}]
  %s2 = inlined_call_operand.hbm [shape: f32[1,1536], index: 2, kind: input, shape index: {}]
  %s3 = inlined_call_operand.hbm [shape: bf16[1536,384], index: 3, kind: input, shape index: {}]
  %s4 = inlined_call_operand.hbm [shape: f32[1,384], index: 4, kind: input, shape index: {}]
  %s5 = inlined_call_operand.hbm [shape: u32[128,384], index: 5, kind: input, shape index: {}]
  %s6 = inlined_call_operand.hbm [shape: f32[128,384], index: 6, kind: output, shape index: {}]
  %s7 = sld [smem:[#allocation0]]
  $region89: #{tpu_custom_call.1} parent=0
    _
  %s9 = ssub.s32 1, %s7
  %s10 = scalar_select 0, %s9, %s7
  $region1: #{tpu_custom_call.1} parent=0
    #allocation3 [shape = 'u8[196608]{0}', space=vmem, size = 0x30000, scoped, tag = 'input window, operand 0, single buffered']
    #allocation4 [shape = 's32[2]{0}', space=sflag, size = 0x8, scoped, tag = 'scoped memory for tpu_custom_call.1']
    #allocation5 [shape = 's32[2]{0}', space=sflag, size = 0x8, scoped, tag = 'scoped memory for tpu_custom_call.1']
    #allocation6 [shape = 'u8[786432]{0}', space=vmem, size = 0xc0000, scoped, tag = 'input window, operand 1']
    #allocation7 [shape = 's32[2]{0}', space=sflag, size = 0x8, scoped, tag = 'scoped memory for tpu_custom_call.1']
    #allocation8 [shape = 'u8[4096]{0}', space=vmem, size = 0x1000, scoped, tag = 'input window, operand 2']
    #allocation9 [shape = 'u8[786432]{0}', space=vmem, size = 0xc0000, scoped, tag = 'input window, operand 3']
    #allocation10 [shape = 's32[2]{0}', space=sflag, size = 0x8, scoped, tag = 'scoped memory for tpu_custom_call.1']
    #allocation11 [shape = 'u8[1536]{0}', space=vmem, size = 0x800, scoped, tag = 'input window, operand 4, single buffered']
    #allocation12 [shape = 'u8[196608]{0}', space=vmem, size = 0x30000, scoped, tag = 'input window, operand 5, single buffered']
    #allocation13 [shape = 's32[1]{0}', space=sflag, size = 0x4, scoped, tag = 'scoped memory for tpu_custom_call.1']
    #allocation14 [shape = 'u8[196608]{0}', space=vmem, size = 0x30000, scoped, tag = 'output window, operand 0, single buffered']
    %11 = vsyncpa [#allocation4], 0
    %12 = vsyncpa [#allocation7], 0
    %s13 = scalar_lea.sflag [#allocation7], 1
    %14 = vsyncpa %s13, 0
    %15 = vsyncpa [#allocation10], 0
    %s16 = scalar_lea.sflag [#allocation10], 1
    %17 = vsyncpa %s16, 0
    %18 = vsyncpa [#allocation13], 0
    %19 = vsyncpa [#allocation5], 0
    loop: start=0, step=1, limit=5
    $region2: #{tpu_custom_call.1} parent=1 // loop_pre_header
      _
    $region3: #{tpu_custom_call.1} parent=1 // loop_header
      %s21 = sphi 0, %s25
      %p22 = scmp.ge.s32.totalorder %s21, 5
      %s28 = sphi 0, %s40
      %s29 = sphi 0, %s36
      %s30 = sphi 0, %s28
      %s31 = sphi 0, %s29
      %s32 = sphi 0, %s30
      %s33 = sphi 0, %s31
      %s43 = sphi 0, %s45
      %s46 = sphi 0, %s43
      %s47 = sphi 0, %s46
      %s63 = sphi 0, %s47
      %s69 = sphi 0, %s71
      %s72 = sphi 0, %s69
      %s73 = sphi 0, %s72
      %s89 = sphi 0, %s73
      %s95 = sphi 0, %s97
      %s98 = sphi 0, %s95
      %s99 = sphi 0, %s98
      %s115 = sphi 0, %s99
      %s121 = sphi 0, %s123
      %s124 = sphi 0, %s121
      %s125 = sphi 0, %s124
      %s141 = sphi 0, %s125
      %s145 = sphi 0, %s145
      %s147 = sphi 0, %s145
      %s148 = sphi 0, %s147
      %s162 = sphi 0, %s148
      %s168 = sphi 0, %s170
      %s171 = sphi 0, %s168
      %s172 = sphi 0, %s171
      %s188 = sphi 0, %s172
      %s194 = sphi 0, %s196
      %s197 = sphi 0, %s194
      %s198 = sphi 0, %s197
      %s214 = sphi 0, %s198
    $region4: #{tpu_custom_call.1} parent=1 // loop_header_branch
      %24 = sbr.rel (%p22) target = $region8
    $region5: #{tpu_custom_call.1} parent=1 // loop_body
      %s26 = ssub.s32 %s21, 1
      %s27 = ssub.s32 %s21, 2
      %s34 = sadd.s32 1, %s29
      %p35 = scmp.ge.s32.totalorder %s34, 3
      %s36 = scalar_select %p35, 0, %s34
      %s37 = sadd.s32 1, %s28
      %s38 = scalar_select %p35, %s37, %s28
      %p39 = scmp.ge.s32.totalorder %s38, 1
      %s40 = scalar_select %p39, 0, %s38
      %s41 = ssub.s32 %s28, %s40
      %p42 = scmp.eq.s32.totalorder %s41, 0
      %s44 = sadd.s32 %s43, 1
      %s45 = scalar_select %p42, %s43, %s44
      %p48 = pneg %p42
      %p49 = scmp.eq.s32.totalorder %s21, 2
      %p50 = por %p48, %p49
      %p51 = scmp.ne.s32.totalorder %s43, %s46
      %p52 = scmp.eq.s32.totalorder %s21, 0
      %p53 = por %p51, %p52
      %p54 = scmp.ne.s32.totalorder %s43, %s46
      %p55 = scmp.eq.s32.totalorder %s26, 2
      %p56 = por %p54, %p55
      %p57 = scmp.ne.s32.totalorder %s46, %s47
      %p58 = scmp.eq.s32.totalorder %s26, 0
      %p59 = por %p57, %p58
      %p60 = scmp.ne.s32.totalorder %s46, %s47
      %p61 = scmp.eq.s32.totalorder %s27, 2
      %p62 = por %p60, %p61
      %p64 = scmp.ne.s32.totalorder %s47, %s63
      %p65 = scmp.eq.s32.totalorder %s27, 0
      %p66 = por %p64, %p65
      %s67 = ssub.s32 %s29, %s36
      %p68 = scmp.eq.s32.totalorder %s67, 0
      %s70 = sadd.s32 %s69, 1
      %s71 = scalar_select %p68, %s69, %s70
      %p74 = pneg %p68
      %p75 = scmp.eq.s32.totalorder %s21, 2
      %p76 = por %p74, %p75
      %p77 = scmp.ne.s32.totalorder %s69, %s72
      %p78 = scmp.eq.s32.totalorder %s21, 0
      %p79 = por %p77, %p78
      %p80 = scmp.ne.s32.totalorder %s69, %s72
      %p81 = scmp.eq.s32.totalorder %s26, 2
      %p82 = por %p80, %p81
      %p83 = scmp.ne.s32.totalorder %s72, %s73
      %p84 = scmp.eq.s32.totalorder %s26, 0
      %p85 = por %p83, %p84
      %p86 = scmp.ne.s32.totalorder %s72, %s73
      %p87 = scmp.eq.s32.totalorder %s27, 2
      %p88 = por %p86, %p87
      %p90 = scmp.ne.s32.totalorder %s73, %s89
      %p91 = scmp.eq.s32.totalorder %s27, 0
      %p92 = por %p90, %p91
      %s93 = ssub.s32 %s29, %s36
      %p94 = scmp.eq.s32.totalorder %s93, 0
      %s96 = sadd.s32 %s95, 1
      %s97 = scalar_select %p94, %s95, %s96
      %p100 = pneg %p94
      %p101 = scmp.eq.s32.totalorder %s21, 2
      %p102 = por %p100, %p101
      %p103 = scmp.ne.s32.totalorder %s95, %s98
      %p104 = scmp.eq.s32.totalorder %s21, 0
      %p105 = por %p103, %p104
      %p106 = scmp.ne.s32.totalorder %s95, %s98
      %p107 = scmp.eq.s32.totalorder %s26, 2
      %p108 = por %p106, %p107
      %p109 = scmp.ne.s32.totalorder %s98, %s99
      %p110 = scmp.eq.s32.totalorder %s26, 0
      %p111 = por %p109, %p110
      %p112 = scmp.ne.s32.totalorder %s98, %s99
      %p113 = scmp.eq.s32.totalorder %s27, 2
      %p114 = por %p112, %p113
      %p116 = scmp.ne.s32.totalorder %s99, %s115
      %p117 = scmp.eq.s32.totalorder %s27, 0
      %p118 = por %p116, %p117
      %s119 = ssub.s32 %s29, %s36
      %p120 = scmp.eq.s32.totalorder %s119, 0
      %s122 = sadd.s32 %s121, 1
      %s123 = scalar_select %p120, %s121, %s122
      %p126 = pneg %p120
      %p127 = scmp.eq.s32.totalorder %s21, 2
      %p128 = por %p126, %p127
      %p129 = scmp.ne.s32.totalorder %s121, %s124
      %p130 = scmp.eq.s32.totalorder %s21, 0
      %p131 = por %p129, %p130
      %p132 = scmp.ne.s32.totalorder %s121, %s124
      %p133 = scmp.eq.s32.totalorder %s26, 2
      %p134 = por %p132, %p133
      %p135 = scmp.ne.s32.totalorder %s124, %s125
      %p136 = scmp.eq.s32.totalorder %s26, 0
      %p137 = por %p135, %p136
      %p138 = scmp.ne.s32.totalorder %s124, %s125
      %p139 = scmp.eq.s32.totalorder %s27, 2
      %p140 = por %p138, %p139
      %p142 = scmp.ne.s32.totalorder %s125, %s141
      %p143 = scmp.eq.s32.totalorder %s27, 0
      %p144 = por %p142, %p143
      %s146 = sadd.s32 %s145, 1
      %p149 = scmp.eq.s32.totalorder %s21, 2
      %p150 = scmp.ne.s32.totalorder %s145, %s147
      %p151 = scmp.eq.s32.totalorder %s21, 0
      %p152 = por %p150, %p151
      %p153 = scmp.ne.s32.totalorder %s145, %s147
      %p154 = scmp.eq.s32.totalorder %s26, 2
      %p155 = por %p153, %p154
      %p156 = scmp.ne.s32.totalorder %s147, %s148
      %p157 = scmp.eq.s32.totalorder %s26, 0
      %p158 = por %p156, %p157
      %p159 = scmp.ne.s32.totalorder %s147, %s148
      %p160 = scmp.eq.s32.totalorder %s27, 2
      %p161 = por %p159, %p160
      %p163 = scmp.ne.s32.totalorder %s148, %s162
      %p164 = scmp.eq.s32.totalorder %s27, 0
      %p165 = por %p163, %p164
      %s166 = ssub.s32 %s28, %s40
      %p167 = scmp.eq.s32.totalorder %s166, 0
      %s169 = sadd.s32 %s168, 1
      %s170 = scalar_select %p167, %s168, %s169
      %p173 = pneg %p167
      %p174 = scmp.eq.s32.totalorder %s21, 2
      %p175 = por %p173, %p174
      %p176 = scmp.ne.s32.totalorder %s168, %s171
      %p177 = scmp.eq.s32.totalorder %s21, 0
      %p178 = por %p176, %p177
      %p179 = scmp.ne.s32.totalorder %s168, %s171
      %p180 = scmp.eq.s32.totalorder %s26, 2
      %p181 = por %p179, %p180
      %p182 = scmp.ne.s32.totalorder %s171, %s172
      %p183 = scmp.eq.s32.totalorder %s26, 0
      %p184 = por %p182, %p183
      %p185 = scmp.ne.s32.totalorder %s171, %s172
      %p186 = scmp.eq.s32.totalorder %s27, 2
      %p187 = por %p185, %p186
      %p189 = scmp.ne.s32.totalorder %s172, %s188
      %p190 = scmp.eq.s32.totalorder %s27, 0
      %p191 = por %p189, %p190
      %s192 = ssub.s32 %s28, %s40
      %p193 = scmp.eq.s32.totalorder %s192, 0
      %s195 = sadd.s32 %s194, 1
      %s196 = scalar_select %p193, %s194, %s195
      %p199 = pneg %p193
      %p200 = scmp.eq.s32.totalorder %s21, 2
      %p201 = por %p199, %p200
      %p202 = scmp.ne.s32.totalorder %s194, %s197
      %p203 = scmp.eq.s32.totalorder %s21, 0
      %p204 = por %p202, %p203
      %p205 = scmp.ne.s32.totalorder %s194, %s197
      %p206 = scmp.eq.s32.totalorder %s26, 2
      %p207 = por %p205, %p206
      %p208 = scmp.ne.s32.totalorder %s197, %s198
      %p209 = scmp.eq.s32.totalorder %s26, 0
      %p210 = por %p208, %p209
      %p211 = scmp.ne.s32.totalorder %s197, %s198
      %p212 = scmp.eq.s32.totalorder %s27, 2
      %p213 = por %p211, %p212
      %p215 = scmp.ne.s32.totalorder %s198, %s214
      %p216 = scmp.eq.s32.totalorder %s27, 0
      %p217 = por %p215, %p216
      %p218 = scmp.le.s32.totalorder 1, %s21
      %p219 = scmp.lt.s32.totalorder %s21, 4
      %p220 = pnand %p218, %p219
      %p221 = pneg %p220
      // Predicated region
      $region9: #{tpu_custom_call.1} parent=5 // pred_check
        _
      $region10: #{tpu_custom_call.1} parent=5 // pred_check_branch
        %223 = sbr.rel (%p220) target = $region12
      $region11: #{tpu_custom_call.1} parent=5 // pred_region
        %s224 = ssub.s32 %s21, 1
        // Predicated region
        $region13: #{tpu_custom_call.1} parent=11 // pred_check
          %p225 = pneg %p59
        $region14: #{tpu_custom_call.1} parent=11 // pred_check_branch
          %227 = sbr.rel (%p225) target = $region16
        $region15: #{tpu_custom_call.1} parent=11 // pred_region
          %s228 = smul.u32 16, %s30
          %s230 = ssub.s32 6144, 6144
          %231 = vsyncadd [#allocation4], %s230
          %s232 = smul.addr %s228, 3
          %s233 = smul.addr %s232, 128
          %s234 = scalar_lea.hbm %s0, %s233
          %s235 = sshll.u32 [#allocation3], 4
          %s236 = int_to_ptr.vmem [resolvable:$true] %s235
          %241 = dma.hbm_to_vmem [thread:$0]  %s234, 6144, %s236, [#allocation4], 384, 384, 24
        $region16: #{tpu_custom_call.1} parent=11 // pred_fallthru
          _
        // Predicated region
        $region17: #{tpu_custom_call.1} parent=11 // pred_check
          %p242 = pneg %p158
        $region18: #{tpu_custom_call.1} parent=11 // pred_check_branch
          %244 = sbr.rel (%p242) target = $region20
        $region19: #{tpu_custom_call.1} parent=11 // pred_region
          %s246 = ssub.s32 48, 48
          %247 = vsyncadd [#allocation10], %s246
          %s249 = sshll.u32 [#allocation11], 4
          %s250 = int_to_ptr.vmem [resolvable:$true] %s249
          %252 = dma.hbm_to_vmem [thread:$0]  %s4, 48, %s250, [#allocation10]
        $region20: #{tpu_custom_call.1} parent=11 // pred_fallthru
          _
        // Predicated region
        $region21: #{tpu_custom_call.1} parent=11 // pred_check
          %p253 = pneg %p184
        $region22: #{tpu_custom_call.1} parent=11 // pred_check_branch
          %255 = sbr.rel (%p253) target = $region24
        $region23: #{tpu_custom_call.1} parent=11 // pred_region
          %s256 = smul.u32 16, %s30
          %s258 = ssub.s32 6144, 6144
          %259 = vsyncadd [#allocation13], %s258
          %s260 = smul.addr %s256, 3
          %s261 = smul.addr %s260, 128
          %s262 = scalar_lea.hbm %s5, %s261
          %s263 = sshll.u32 [#allocation12], 4
          %s264 = int_to_ptr.vmem [resolvable:$true] %s263
          %269 = dma.hbm_to_vmem [thread:$0]  %s262, 6144, %s264, [#allocation13], 384, 384, 24
        $region24: #{tpu_custom_call.1} parent=11 // pred_fallthru
          _
      $region12: #{tpu_custom_call.1} parent=5 // pred_fallthru
        _
      %p270 = scmp.lt.s32.totalorder %s21, 3
      // Predicated region
      $region25: #{tpu_custom_call.1} parent=5 // pred_check
        %p271 = pneg %p270
      $region26: #{tpu_custom_call.1} parent=5 // pred_check_branch
        %273 = sbr.rel (%p271) target = $region28
      $region27: #{tpu_custom_call.1} parent=5 // pred_region
        // Predicated region
        $region29: #{tpu_custom_call.1} parent=27 // pred_check
          %p274 = pneg %p79
        $region30: #{tpu_custom_call.1} parent=27 // pred_check_branch
          %276 = sbr.rel (%p274) target = $region32
        $region31: #{tpu_custom_call.1} parent=27 // pred_region
          %s277 = sand.u32 %s21, 1
          %s278 = scalar_lea.sflag [#allocation7], %s277
          %s279 = sand.u32 %s69, 1
          %s280 = smul.addr %s279, 768
          %s281 = scalar_lea.vmem [#allocation6], %s280
          %s282 = smul.u32 4, %s29
          %s284 = ssub.s32 12288, 12288
          %285 = vsyncadd %s278, %s284
          %s286 = smul.addr %s282, 64
          %s287 = scalar_lea.hbm %s1, %s286
          %s288 = sshll.u32 %s281, 4
          %s289 = int_to_ptr.vmem [resolvable:$true] %s288
          %294 = dma.hbm_to_vmem [thread:$0]  %s287, 12288, %s289, %s278, 768, 256, 16
        $region32: #{tpu_custom_call.1} parent=27 // pred_fallthru
          _
        // Predicated region
        $region33: #{tpu_custom_call.1} parent=27 // pred_check
          %p295 = pneg %p105
        $region34: #{tpu_custom_call.1} parent=27 // pred_check_branch
          %297 = sbr.rel (%p295) target = $region36
        $region35: #{tpu_custom_call.1} parent=27 // pred_region
          %s298 = sand.u32 %s21, 1
          %s299 = scalar_lea.sflag [#allocation7], %s298
          %s300 = sand.u32 %s95, 1
          %s301 = smul.addr %s300, 4
          %s302 = scalar_lea.vmem [#allocation8], %s301
          %s303 = smul.u32 4, %s29
          %s305 = ssub.s32 64, 64
          %306 = vsyncadd %s299, %s305
          %s307 = smul.addr %s303, 16
          %s308 = scalar_lea.hbm %s2, %s307
          %s310 = sshll.u32 %s302, 4
          %s311 = int_to_ptr.vmem [resolvable:$true] %s310
          %313 = dma.hbm_to_vmem [thread:$0]  %s308, 64, %s311, %s299
        $region36: #{tpu_custom_call.1} parent=27 // pred_fallthru
          _
        // Predicated region
        $region37: #{tpu_custom_call.1} parent=27 // pred_check
          %p314 = pneg %p131
        $region38: #{tpu_custom_call.1} parent=27 // pred_check_branch
          %316 = sbr.rel (%p314) target = $region40
        $region39: #{tpu_custom_call.1} parent=27 // pred_region
          %s317 = sand.u32 %s21, 1
          %s318 = scalar_lea.sflag [#allocation10], %s317
          %s319 = sand.u32 %s121, 1
          %s320 = smul.addr %s319, 768
          %s321 = scalar_lea.vmem [#allocation9], %s320
          %s322 = smul.u32 64, %s29
          %s324 = ssub.s32 12288, 12288
          %325 = vsyncadd %s318, %s324
          %s326 = smul.addr %s322, 3
          %s327 = smul.addr %s326, 64
          %s328 = scalar_lea.hbm %s3, %s327
          %s329 = sshll.u32 %s321, 4
          %s330 = int_to_ptr.vmem [resolvable:$true] %s329
          %335 = dma.hbm_to_vmem [thread:$0]  %s328, 12288, %s330, %s318, 192, 192, 12
        $region40: #{tpu_custom_call.1} parent=27 // pred_fallthru
          _
      $region28: #{tpu_custom_call.1} parent=5 // pred_fallthru
        _
      %p336 = scmp.le.s32.totalorder 1, %s21
      %p337 = scmp.lt.s32.totalorder %s21, 4
      %p338 = pnand %p336, %p337
      %p339 = pneg %p338
      // Predicated region
      $region41: #{tpu_custom_call.1} parent=5 // pred_check
        _
      $region42: #{tpu_custom_call.1} parent=5 // pred_check_branch
        %341 = sbr.rel (%p338) target = $region44
      $region43: #{tpu_custom_call.1} parent=5 // pred_region
        %s342 = ssub.s32 %s21, 1
        // Predicated region
        $region45: #{tpu_custom_call.1} parent=43 // pred_check
          %p343 = pneg %p59
        $region46: #{tpu_custom_call.1} parent=43 // pred_check_branch
          %345 = sbr.rel (%p343) target = $region48
        $region47: #{tpu_custom_call.1} parent=43 // pred_region
          %346 = dma.done [#allocation4], 6144
        $region48: #{tpu_custom_call.1} parent=43 // pred_fallthru
          _
        %s347 = sand.u32 %s26, 1
        %s348 = scalar_lea.sflag [#allocation7], %s347
        %s349 = sand.u32 %s72, 1
        %s350 = smul.addr %s349, 768
        %s351 = scalar_lea.vmem [#allocation6], %s350
        // Predicated region
        $region49: #{tpu_custom_call.1} parent=43 // pred_check
          %p352 = pneg %p85
        $region50: #{tpu_custom_call.1} parent=43 // pred_check_branch
          %354 = sbr.rel (%p352) target = $region52
        $region51: #{tpu_custom_call.1} parent=43 // pred_region
          %355 = dma.done %s348, 12288
        $region52: #{tpu_custom_call.1} parent=43 // pred_fallthru
          _
        %s356 = sand.u32 %s26, 1
        %s357 = scalar_lea.sflag [#allocation7], %s356
        %s358 = sand.u32 %s98, 1
        %s359 = smul.addr %s358, 4
        %s360 = scalar_lea.vmem [#allocation8], %s359
        // Predicated region
        $region53: #{tpu_custom_call.1} parent=43 // pred_check
          %p361 = pneg %p111
        $region54: #{tpu_custom_call.1} parent=43 // pred_check_branch
          %363 = sbr.rel (%p361) target = $region56
        $region55: #{tpu_custom_call.1} parent=43 // pred_region
          %364 = dma.done %s357, 64
        $region56: #{tpu_custom_call.1} parent=43 // pred_fallthru
          _
        %s365 = sand.u32 %s26, 1
        %s366 = scalar_lea.sflag [#allocation10], %s365
        %s367 = sand.u32 %s124, 1
        %s368 = smul.addr %s367, 768
        %s369 = scalar_lea.vmem [#allocation9], %s368
        // Predicated region
        $region57: #{tpu_custom_call.1} parent=43 // pred_check
          %p370 = pneg %p137
        $region58: #{tpu_custom_call.1} parent=43 // pred_check_branch
          %372 = sbr.rel (%p370) target = $region60
        $region59: #{tpu_custom_call.1} parent=43 // pred_region
          %373 = dma.done %s366, 12288
        $region60: #{tpu_custom_call.1} parent=43 // pred_fallthru
          _
        // Predicated region
        $region61: #{tpu_custom_call.1} parent=43 // pred_check
          %p374 = pneg %p158
        $region62: #{tpu_custom_call.1} parent=43 // pred_check_branch
          %376 = sbr.rel (%p374) target = $region64
        $region63: #{tpu_custom_call.1} parent=43 // pred_region
          %377 = dma.done [#allocation10], 48
        $region64: #{tpu_custom_call.1} parent=43 // pred_fallthru
          _
        // Predicated region
        $region65: #{tpu_custom_call.1} parent=43 // pred_check
          %p378 = pneg %p184
        $region66: #{tpu_custom_call.1} parent=43 // pred_check_branch
          %380 = sbr.rel (%p378) target = $region68
        $region67: #{tpu_custom_call.1} parent=43 // pred_region
          %381 = dma.done [#allocation13], 6144
        $region68: #{tpu_custom_call.1} parent=43 // pred_fallthru
          _
        %p382 = pneg %p59
        %p383 = pneg %p56
        %s384 = sand.u32 %s26, 1
        %s385 = scalar_lea.sflag [#allocation7], %s384
        %s386 = sand.u32 %s72, 1
        %s387 = smul.addr %s386, 768
        %s388 = scalar_lea.vmem [#allocation6], %s387
        %p389 = pneg %p85
        %p390 = pneg %p82
        %s391 = sand.u32 %s26, 1
        %s392 = scalar_lea.sflag [#allocation7], %s391
        %s393 = sand.u32 %s98, 1
        %s394 = smul.addr %s393, 4
        %s395 = scalar_lea.vmem [#allocation8], %s394
        %p396 = pneg %p111
        %p397 = pneg %p108
        %s398 = sand.u32 %s26, 1
        %s399 = scalar_lea.sflag [#allocation10], %s398
        %s400 = sand.u32 %s124, 1
        %s401 = smul.addr %s400, 768
        %s402 = scalar_lea.vmem [#allocation9], %s401
        %p403 = pneg %p137
        %p404 = pneg %p134
        %p405 = pneg %p158
        %p406 = pneg %p155
        %p407 = pneg %p184
        %p408 = pneg %p181
        %p409 = pneg %p210
        %p410 = pneg %p207
        %s411 = smul.u32 16, %s30
        %s412 = smul.u32 4, %s31
        %s413 = smul.u32 4, %s31
        %s414 = smul.u32 64, %s31
        %s415 = smul.u32 16, %s30
        %s416 = smul.u32 16, %s30
        %p418 = scmp.eq.s32.totalorder %s31, 0
        // Predicated region
        $region69: #{tpu_custom_call.1} parent=43 // pred_check
          %p419 = pneg %p418
        $region70: #{tpu_custom_call.1} parent=43 // pred_check_branch
          %421 = sbr.rel (%p419) target = $region72
        $region71: #{tpu_custom_call.1} parent=43 // pred_region
          %422 = vst [vmem:[#allocation2] sm:$0xff] 0.0
          %423 = vst [vmem:[#allocation2 + $0x8] sm:$0xff] 0.0
          %424 = vst [vmem:[#allocation2 + $0x10] sm:$0xff] 0.0
          %425 = vst [vmem:[#allocation2 + $0x18] sm:$0xff] 0.0
          %426 = vst [vmem:[#allocation2 + $0x20] sm:$0xff] 0.0
          %427 = vst [vmem:[#allocation2 + $0x28] sm:$0xff] 0.0
          %428 = vst [vmem:[#allocation2 + $0x30] sm:$0xff] 0.0
          %429 = vst [vmem:[#allocation2 + $0x38] sm:$0xff] 0.0
          %430 = vst [vmem:[#allocation2 + $0x40] sm:$0xff] 0.0
          %431 = vst [vmem:[#allocation2 + $0x48] sm:$0xff] 0.0
          %432 = vst [vmem:[#allocation2 + $0x50] sm:$0xff] 0.0
          %433 = vst [vmem:[#allocation2 + $0x58] sm:$0xff] 0.0
          %434 = vst [vmem:[#allocation2 + $0x60] sm:$0xff] 0.0
          %435 = vst [vmem:[#allocation2 + $0x68] sm:$0xff] 0.0
          %436 = vst [vmem:[#allocation2 + $0x70] sm:$0xff] 0.0
          %437 = vst [vmem:[#allocation2 + $0x78] sm:$0xff] 0.0
          %438 = vst [vmem:[#allocation2 + $0x80] sm:$0xff] 0.0
          %439 = vst [vmem:[#allocation2 + $0x88] sm:$0xff] 0.0
          %440 = vst [vmem:[#allocation2 + $0x90] sm:$0xff] 0.0
          %441 = vst [vmem:[#allocation2 + $0x98] sm:$0xff] 0.0
          %442 = vst [vmem:[#allocation2 + $0xa0] sm:$0xff] 0.0
          %443 = vst [vmem:[#allocation2 + $0xa8] sm:$0xff] 0.0
          %444 = vst [vmem:[#allocation2 + $0xb0] sm:$0xff] 0.0
          %445 = vst [vmem:[#allocation2 + $0xb8] sm:$0xff] 0.0
          %446 = vst [vmem:[#allocation2 + $0xc0] sm:$0xff] 0.0
          %447 = vst [vmem:[#allocation2 + $0xc8] sm:$0xff] 0.0
          %448 = vst [vmem:[#allocation2 + $0xd0] sm:$0xff] 0.0
          %449 = vst [vmem:[#allocation2 + $0xd8] sm:$0xff] 0.0
          %450 = vst [vmem:[#allocation2 + $0xe0] sm:$0xff] 0.0
          %451 = vst [vmem:[#allocation2 + $0xe8] sm:$0xff] 0.0
          %452 = vst [vmem:[#allocation2 + $0xf0] sm:$0xff] 0.0
          %453 = vst [vmem:[#allocation2 + $0xf8] sm:$0xff] 0.0
          %454 = vst [vmem:[#allocation2 + $0x100] sm:$0xff] 0.0
          %455 = vst [vmem:[#allocation2 + $0x108] sm:$0xff] 0.0
          %456 = vst [vmem:[#allocation2 + $0x110] sm:$0xff] 0.0
          %457 = vst [vmem:[#allocation2 + $0x118] sm:$0xff] 0.0
          %458 = vst [vmem:[#allocation2 + $0x120] sm:$0xff] 0.0
          %459 = vst [vmem:[#allocation2 + $0x128] sm:$0xff] 0.0
          %460 = vst [vmem:[#allocation2 + $0x130] sm:$0xff] 0.0
          %461 = vst [vmem:[#allocation2 + $0x138] sm:$0xff] 0.0
          %462 = vst [vmem:[#allocation2 + $0x140] sm:$0xff] 0.0
          %463 = vst [vmem:[#allocation2 + $0x148] sm:$0xff] 0.0
          %464 = vst [vmem:[#allocation2 + $0x150] sm:$0xff] 0.0
          %465 = vst [vmem:[#allocation2 + $0x158] sm:$0xff] 0.0
          %466 = vst [vmem:[#allocation2 + $0x160] sm:$0xff] 0.0
          %467 = vst [vmem:[#allocation2 + $0x168] sm:$0xff] 0.0
          %468 = vst [vmem:[#allocation2 + $0x170] sm:$0xff] 0.0
          %469 = vst [vmem:[#allocation2 + $0x178] sm:$0xff] 0.0
        $region72: #{tpu_custom_call.1} parent=43 // pred_fallthru
          _
        %v470 = vld [vmem:[#allocation3] sm:$0xff]
        %v471 = vld [vmem:[#allocation3 + $0x8] sm:$0xff]
        %v472 = vld [vmem:[#allocation3 + $0x10] sm:$0xff]
        %v473 = vld [vmem:[#allocation3 + $0x18] sm:$0xff]
        %v474 = vld [vmem:[#allocation3 + $0x20] sm:$0xff]
        %v475 = vld [vmem:[#allocation3 + $0x28] sm:$0xff]
        %v476 = vld [vmem:[#allocation3 + $0x30] sm:$0xff]
        %v477 = vld [vmem:[#allocation3 + $0x38] sm:$0xff]
        %v478 = vld [vmem:[#allocation3 + $0x40] sm:$0xff]
        %v479 = vld [vmem:[#allocation3 + $0x48] sm:$0xff]
        %v480 = vld [vmem:[#allocation3 + $0x50] sm:$0xff]
        %v481 = vld [vmem:[#allocation3 + $0x58] sm:$0xff]
        %v482 = vld [vmem:[#allocation3 + $0x60] sm:$0xff]
        %v483 = vld [vmem:[#allocation3 + $0x68] sm:$0xff]
        %v484 = vld [vmem:[#allocation3 + $0x70] sm:$0xff]
        %v485 = vld [vmem:[#allocation3 + $0x78] sm:$0xff]
        %v486 = vld [vmem:[#allocation3 + $0x80] sm:$0xff]
        %v487 = vld [vmem:[#allocation3 + $0x88] sm:$0xff]
        %v488 = vld [vmem:[#allocation3 + $0x90] sm:$0xff]
        %v489 = vld [vmem:[#allocation3 + $0x98] sm:$0xff]
        %v490 = vld [vmem:[#allocation3 + $0xa0] sm:$0xff]
        %v491 = vld [vmem:[#allocation3 + $0xa8] sm:$0xff]
        %v492 = vld [vmem:[#allocation3 + $0xb0] sm:$0xff]
        %v493 = vld [vmem:[#allocation3 + $0xb8] sm:$0xff]
        %v494 = vld [vmem:[#allocation3 + $0xc0] sm:$0xff]
        %v495 = vld [vmem:[#allocation3 + $0xc8] sm:$0xff]
        %v496 = vld [vmem:[#allocation3 + $0xd0] sm:$0xff]
        %v497 = vld [vmem:[#allocation3 + $0xd8] sm:$0xff]
        %v498 = vld [vmem:[#allocation3 + $0xe0] sm:$0xff]
        %v499 = vld [vmem:[#allocation3 + $0xe8] sm:$0xff]
        %v500 = vld [vmem:[#allocation3 + $0xf0] sm:$0xff]
        %v501 = vld [vmem:[#allocation3 + $0xf8] sm:$0xff]
        %v502 = vld [vmem:[#allocation3 + $0x100] sm:$0xff]
        %v503 = vld [vmem:[#allocation3 + $0x108] sm:$0xff]
        %v504 = vld [vmem:[#allocation3 + $0x110] sm:$0xff]
        %v505 = vld [vmem:[#allocation3 + $0x118] sm:$0xff]
        %v506 = vld [vmem:[#allocation3 + $0x120] sm:$0xff]
        %v507 = vld [vmem:[#allocation3 + $0x128] sm:$0xff]
        %v508 = vld [vmem:[#allocation3 + $0x130] sm:$0xff]
        %v509 = vld [vmem:[#allocation3 + $0x138] sm:$0xff]
        %v510 = vld [vmem:[#allocation3 + $0x140] sm:$0xff]
        %v511 = vld [vmem:[#allocation3 + $0x148] sm:$0xff]
        %v512 = vld [vmem:[#allocation3 + $0x150] sm:$0xff]
        %v513 = vld [vmem:[#allocation3 + $0x158] sm:$0xff]
        %v514 = vld [vmem:[#allocation3 + $0x160] sm:$0xff]
        %v515 = vld [vmem:[#allocation3 + $0x168] sm:$0xff]
        %v516 = vld [vmem:[#allocation3 + $0x170] sm:$0xff]
        %v517 = vld [vmem:[#allocation3 + $0x178] sm:$0xff]
        %v518 = vpack.c.bf16 %v473, %v470
        %v519 = vpack.c.bf16 %v474, %v471
        %v520 = vpack.c.bf16 %v475, %v472
        %v521 = vpack.c.bf16 %v479, %v476
        %v522 = vpack.c.bf16 %v480, %v477
        %v523 = vpack.c.bf16 %v481, %v478
        %v524 = vpack.c.bf16 %v485, %v482
        %v525 = vpack.c.bf16 %v486, %v483
        %v526 = vpack.c.bf16 %v487, %v484
        %v527 = vpack.c.bf16 %v491, %v488
        %v528 = vpack.c.bf16 %v492, %v489
        %v529 = vpack.c.bf16 %v493, %v490
        %v530 = vpack.c.bf16 %v497, %v494
        %v531 = vpack.c.bf16 %v498, %v495
        %v532 = vpack.c.bf16 %v499, %v496
        %v533 = vpack.c.bf16 %v503, %v500
        %v534 = vpack.c.bf16 %v504, %v501
        %v535 = vpack.c.bf16 %v505, %v502
        %v536 = vpack.c.bf16 %v509, %v506
        %v537 = vpack.c.bf16 %v510, %v507
        %v538 = vpack.c.bf16 %v511, %v508
        %v539 = vpack.c.bf16 %v515, %v512
        %v540 = vpack.c.bf16 %v516, %v513
        %v541 = vpack.c.bf16 %v517, %v514
        %v542 = vld [vmem:[%s351] sm:$0xff]
        %v543 = vld [vmem:[%s351 + $0x8] sm:$0xff]
        %v544 = vld [vmem:[%s351 + $0x10] sm:$0xff]
        %v545 = vld [vmem:[%s351 + $0x18] sm:$0xff]
        %v546 = vld [vmem:[%s351 + $0x20] sm:$0xff]
        %v547 = vld [vmem:[%s351 + $0x28] sm:$0xff]
        %v548 = vld [vmem:[%s351 + $0x30] sm:$0xff]
        %v549 = vld [vmem:[%s351 + $0x38] sm:$0xff]
        %v550 = vld [vmem:[%s351 + $0x40] sm:$0xff]
        %v551 = vld [vmem:[%s351 + $0x48] sm:$0xff]
        %v552 = vld [vmem:[%s351 + $0x50] sm:$0xff]
        %v553 = vld [vmem:[%s351 + $0x58] sm:$0xff]
        %v554 = vld [vmem:[%s351 + $0x60] sm:$0xff]
        %v555 = vld [vmem:[%s351 + $0x68] sm:$0xff]
        %v556 = vld [vmem:[%s351 + $0x70] sm:$0xff]
        %v557 = vld [vmem:[%s351 + $0x78] sm:$0xff]
        %v558 = vld [vmem:[%s351 + $0x80] sm:$0xff]
        %v559 = vld [vmem:[%s351 + $0x88] sm:$0xff]
        %v560 = vld [vmem:[%s351 + $0x90] sm:$0xff]
        %v561 = vld [vmem:[%s351 + $0x98] sm:$0xff]
        %v562 = vld [vmem:[%s351 + $0xa0] sm:$0xff]
        %v563 = vld [vmem:[%s351 + $0xa8] sm:$0xff]
        %v564 = vld [vmem:[%s351 + $0xb0] sm:$0xff]
        %v565 = vld [vmem:[%s351 + $0xb8] sm:$0xff]
        %v566 = vld [vmem:[%s351 + $0xc0] sm:$0xff]
        %v567 = vld [vmem:[%s351 + $0xc8] sm:$0xff]
        %v568 = vld [vmem:[%s351 + $0xd0] sm:$0xff]
        %v569 = vld [vmem:[%s351 + $0xd8] sm:$0xff]
        %v570 = vld [vmem:[%s351 + $0xe0] sm:$0xff]
        %v571 = vld [vmem:[%s351 + $0xe8] sm:$0xff]
        %v572 = vld [vmem:[%s351 + $0xf0] sm:$0xff]
        %v573 = vld [vmem:[%s351 + $0xf8] sm:$0xff]
        %v574 = vld [vmem:[%s351 + $0x100] sm:$0xff]
        %v575 = vld [vmem:[%s351 + $0x108] sm:$0xff]
        %v576 = vld [vmem:[%s351 + $0x110] sm:$0xff]
        %v577 = vld [vmem:[%s351 + $0x118] sm:$0xff]
        %v578 = vld [vmem:[%s351 + $0x120] sm:$0xff]
        %v579 = vld [vmem:[%s351 + $0x128] sm:$0xff]
        %v580 = vld [vmem:[%s351 + $0x130] sm:$0xff]
        %v581 = vld [vmem:[%s351 + $0x138] sm:$0xff]
        %v582 = vld [vmem:[%s351 + $0x140] sm:$0xff]
        %v583 = vld [vmem:[%s351 + $0x148] sm:$0xff]
        %v584 = vld [vmem:[%s351 + $0x150] sm:$0xff]
        %v585 = vld [vmem:[%s351 + $0x158] sm:$0xff]
        %v586 = vld [vmem:[%s351 + $0x160] sm:$0xff]
        %v587 = vld [vmem:[%s351 + $0x168] sm:$0xff]
        %v588 = vld [vmem:[%s351 + $0x170] sm:$0xff]
        %v589 = vld [vmem:[%s351 + $0x178] sm:$0xff]
        %v590 = vld [vmem:[%s351 + $0x180] sm:$0xff]
        %v591 = vld [vmem:[%s351 + $0x188] sm:$0xff]
        %v592 = vld [vmem:[%s351 + $0x190] sm:$0xff]
        %v593 = vld [vmem:[%s351 + $0x198] sm:$0xff]
        %v594 = vld [vmem:[%s351 + $0x1a0] sm:$0xff]
        %v595 = vld [vmem:[%s351 + $0x1a8] sm:$0xff]
        %v596 = vld [vmem:[%s351 + $0x1b0] sm:$0xff]
        %v597 = vld [vmem:[%s351 + $0x1b8] sm:$0xff]
        %v598 = vld [vmem:[%s351 + $0x1c0] sm:$0xff]
        %v599 = vld [vmem:[%s351 + $0x1c8] sm:$0xff]
        %v600 = vld [vmem:[%s351 + $0x1d0] sm:$0xff]
        %v601 = vld [vmem:[%s351 + $0x1d8] sm:$0xff]
        %v602 = vld [vmem:[%s351 + $0x1e0] sm:$0xff]
        %v603 = vld [vmem:[%s351 + $0x1e8] sm:$0xff]
        %v604 = vld [vmem:[%s351 + $0x1f0] sm:$0xff]
        %v605 = vld [vmem:[%s351 + $0x1f8] sm:$0xff]
        %v606 = vld [vmem:[%s351 + $0x200] sm:$0xff]
        %v607 = vld [vmem:[%s351 + $0x208] sm:$0xff]
        %v608 = vld [vmem:[%s351 + $0x210] sm:$0xff]
        %v609 = vld [vmem:[%s351 + $0x218] sm:$0xff]
        %v610 = vld [vmem:[%s351 + $0x220] sm:$0xff]
        %v611 = vld [vmem:[%s351 + $0x228] sm:$0xff]
        %v612 = vld [vmem:[%s351 + $0x230] sm:$0xff]
        %v613 = vld [vmem:[%s351 + $0x238] sm:$0xff]
        %v614 = vld [vmem:[%s351 + $0x240] sm:$0xff]
        %v615 = vld [vmem:[%s351 + $0x248] sm:$0xff]
        %v616 = vld [vmem:[%s351 + $0x250] sm:$0xff]
        %v617 = vld [vmem:[%s351 + $0x258] sm:$0xff]
        %v618 = vld [vmem:[%s351 + $0x260] sm:$0xff]
        %v619 = vld [vmem:[%s351 + $0x268] sm:$0xff]
        %v620 = vld [vmem:[%s351 + $0x270] sm:$0xff]
        %v621 = vld [vmem:[%s351 + $0x278] sm:$0xff]
        %v622 = vld [vmem:[%s351 + $0x280] sm:$0xff]
        %v623 = vld [vmem:[%s351 + $0x288] sm:$0xff]
        %v624 = vld [vmem:[%s351 + $0x290] sm:$0xff]
        %v625 = vld [vmem:[%s351 + $0x298] sm:$0xff]
        %v626 = vld [vmem:[%s351 + $0x2a0] sm:$0xff]
        %v627 = vld [vmem:[%s351 + $0x2a8] sm:$0xff]
        %v628 = vld [vmem:[%s351 + $0x2b0] sm:$0xff]
        %v629 = vld [vmem:[%s351 + $0x2b8] sm:$0xff]
        %v630 = vld [vmem:[%s351 + $0x2c0] sm:$0xff]
        %v631 = vld [vmem:[%s351 + $0x2c8] sm:$0xff]
        %v632 = vld [vmem:[%s351 + $0x2d0] sm:$0xff]
        %v633 = vld [vmem:[%s351 + $0x2d8] sm:$0xff]
        %v634 = vld [vmem:[%s351 + $0x2e0] sm:$0xff]
        %v635 = vld [vmem:[%s351 + $0x2e8] sm:$0xff]
        %v636 = vld [vmem:[%s351 + $0x2f0] sm:$0xff]
        %v637 = vld [vmem:[%s351 + $0x2f8] sm:$0xff]
        %v638 = vld [vmem:[%s360] sm:$0xf]
        %v640 = vlaneseq
        %v641 = vshrl.u32 %v640, 7
        %v642 = vsub.s32 0, %v641
        %v643 = vrot.slane %v638, %v642
        %v644 = vlaneseq
        %v645 = vshrl.u32 %v644, 7
        %v646 = vsub.s32 1, %v645
        %v647 = vrot.slane %v638, %v646
        %v648 = vlaneseq
        %v649 = vshrl.u32 %v648, 7
        %v650 = vsub.s32 2, %v649
        %v651 = vrot.slane %v638, %v650
        %v652 = vlaneseq
        %v653 = vshrl.u32 %v652, 7
        %v654 = vsub.s32 3, %v653
        %v655 = vrot.slane %v638, %v654
        %v756 = vunpack.c.l.b16 %v542
        %v757 = vunpack.c.h.b16 %v542
        %v758 = vunpack.c.l.b16 %v543
        %v759 = vunpack.c.h.b16 %v543
        %v760 = vunpack.c.l.b16 %v544
        %v761 = vunpack.c.h.b16 %v544
        %v762 = vunpack.c.l.b16 %v545
        %v763 = vunpack.c.h.b16 %v545
        %v764 = vunpack.c.l.b16 %v546
        %v765 = vunpack.c.h.b16 %v546
        %v766 = vunpack.c.l.b16 %v547
        %v767 = vunpack.c.h.b16 %v547
        %v768 = vunpack.c.l.b16 %v548
        %v769 = vunpack.c.h.b16 %v548
        %v770 = vunpack.c.l.b16 %v549
        %v771 = vunpack.c.h.b16 %v549
        %v772 = vunpack.c.l.b16 %v550
        %v773 = vunpack.c.h.b16 %v550
        %v774 = vunpack.c.l.b16 %v551
        %v775 = vunpack.c.h.b16 %v551
        %v776 = vunpack.c.l.b16 %v552
        %v777 = vunpack.c.h.b16 %v552
        %v778 = vunpack.c.l.b16 %v553
        %v779 = vunpack.c.h.b16 %v553
        %v780 = vunpack.c.l.b16 %v554
        %v781 = vunpack.c.h.b16 %v554
        %v782 = vunpack.c.l.b16 %v555
        %v783 = vunpack.c.h.b16 %v555
        %v784 = vunpack.c.l.b16 %v556
        %v785 = vunpack.c.h.b16 %v556
        %v786 = vunpack.c.l.b16 %v557
        %v787 = vunpack.c.h.b16 %v557
        %v788 = vunpack.c.l.b16 %v558
        %v789 = vunpack.c.h.b16 %v558
        %v790 = vunpack.c.l.b16 %v559
        %v791 = vunpack.c.h.b16 %v559
        %v792 = vunpack.c.l.b16 %v560
        %v793 = vunpack.c.h.b16 %v560
        %v794 = vunpack.c.l.b16 %v561
        %v795 = vunpack.c.h.b16 %v561
        %v796 = vunpack.c.l.b16 %v562
        %v797 = vunpack.c.h.b16 %v562
        %v798 = vunpack.c.l.b16 %v563
        %v799 = vunpack.c.h.b16 %v563
        %v800 = vunpack.c.l.b16 %v564
        %v801 = vunpack.c.h.b16 %v564
        %v802 = vunpack.c.l.b16 %v565
        %v803 = vunpack.c.h.b16 %v565
        %v804 = vunpack.c.l.b16 %v566
        %v805 = vunpack.c.h.b16 %v566
        %v806 = vunpack.c.l.b16 %v567
        %v807 = vunpack.c.h.b16 %v567
        %v808 = vunpack.c.l.b16 %v568
        %v809 = vunpack.c.h.b16 %v568
        %v810 = vunpack.c.l.b16 %v569
        %v811 = vunpack.c.h.b16 %v569
        %v812 = vunpack.c.l.b16 %v570
        %v813 = vunpack.c.h.b16 %v570
        %v814 = vunpack.c.l.b16 %v571
        %v815 = vunpack.c.h.b16 %v571
        %v816 = vunpack.c.l.b16 %v572
        %v817 = vunpack.c.h.b16 %v572
        %v818 = vunpack.c.l.b16 %v573
        %v819 = vunpack.c.h.b16 %v573
        %v820 = vunpack.c.l.b16 %v574
        %v821 = vunpack.c.h.b16 %v574
        %v822 = vunpack.c.l.b16 %v575
        %v823 = vunpack.c.h.b16 %v575
        %v824 = vunpack.c.l.b16 %v576
        %v825 = vunpack.c.h.b16 %v576
        %v826 = vunpack.c.l.b16 %v577
        %v827 = vunpack.c.h.b16 %v577
        %v828 = vunpack.c.l.b16 %v578
        %v829 = vunpack.c.h.b16 %v578
        %v830 = vunpack.c.l.b16 %v579
        %v831 = vunpack.c.h.b16 %v579
        %v832 = vunpack.c.l.b16 %v580
        %v833 = vunpack.c.h.b16 %v580
        %v834 = vunpack.c.l.b16 %v581
        %v835 = vunpack.c.h.b16 %v581
        %v836 = vunpack.c.l.b16 %v582
        %v837 = vunpack.c.h.b16 %v582
        %v838 = vunpack.c.l.b16 %v583
        %v839 = vunpack.c.h.b16 %v583
        %v840 = vunpack.c.l.b16 %v584
        %v841 = vunpack.c.h.b16 %v584
        %v842 = vunpack.c.l.b16 %v585
        %v843 = vunpack.c.h.b16 %v585
        %v844 = vunpack.c.l.b16 %v586
        %v845 = vunpack.c.h.b16 %v586
        %v846 = vunpack.c.l.b16 %v587
        %v847 = vunpack.c.h.b16 %v587
        %v848 = vunpack.c.l.b16 %v588
        %v849 = vunpack.c.h.b16 %v588
        %v850 = vunpack.c.l.b16 %v589
        %v851 = vunpack.c.h.b16 %v589
        %v852 = vunpack.c.l.b16 %v590
        %v853 = vunpack.c.h.b16 %v590
        %v854 = vunpack.c.l.b16 %v591
        %v855 = vunpack.c.h.b16 %v591
        %v856 = vunpack.c.l.b16 %v592
        %v857 = vunpack.c.h.b16 %v592
        %v858 = vunpack.c.l.b16 %v593
        %v859 = vunpack.c.h.b16 %v593
        %v860 = vunpack.c.l.b16 %v594
        %v861 = vunpack.c.h.b16 %v594
        %v862 = vunpack.c.l.b16 %v595
        %v863 = vunpack.c.h.b16 %v595
        %v864 = vunpack.c.l.b16 %v596
        %v865 = vunpack.c.h.b16 %v596
        %v866 = vunpack.c.l.b16 %v597
        %v867 = vunpack.c.h.b16 %v597
        %v868 = vunpack.c.l.b16 %v598
        %v869 = vunpack.c.h.b16 %v598
        %v870 = vunpack.c.l.b16 %v599
        %v871 = vunpack.c.h.b16 %v599
        %v872 = vunpack.c.l.b16 %v600
        %v873 = vunpack.c.h.b16 %v600
        %v874 = vunpack.c.l.b16 %v601
        %v875 = vunpack.c.h.b16 %v601
        %v876 = vunpack.c.l.b16 %v602
        %v877 = vunpack.c.h.b16 %v602
        %v878 = vunpack.c.l.b16 %v603
        %v879 = vunpack.c.h.b16 %v603
        %v880 = vunpack.c.l.b16 %v604
        %v881 = vunpack.c.h.b16 %v604
        %v882 = vunpack.c.l.b16 %v605
        %v883 = vunpack.c.h.b16 %v605
        %v884 = vunpack.c.l.b16 %v606
        %v885 = vunpack.c.h.b16 %v606
        %v886 = vunpack.c.l.b16 %v607
        %v887 = vunpack.c.h.b16 %v607
        %v888 = vunpack.c.l.b16 %v608
        %v889 = vunpack.c.h.b16 %v608
        %v890 = vunpack.c.l.b16 %v609
        %v891 = vunpack.c.h.b16 %v609
        %v892 = vunpack.c.l.b16 %v610
        %v893 = vunpack.c.h.b16 %v610
        %v894 = vunpack.c.l.b16 %v611
        %v895 = vunpack.c.h.b16 %v611
        %v896 = vunpack.c.l.b16 %v612
        %v897 = vunpack.c.h.b16 %v612
        %v898 = vunpack.c.l.b16 %v613
        %v899 = vunpack.c.h.b16 %v613
        %v900 = vunpack.c.l.b16 %v614
        %v901 = vunpack.c.h.b16 %v614
        %v902 = vunpack.c.l.b16 %v615
        %v903 = vunpack.c.h.b16 %v615
        %v904 = vunpack.c.l.b16 %v616
        %v905 = vunpack.c.h.b16 %v616
        %v906 = vunpack.c.l.b16 %v617
        %v907 = vunpack.c.h.b16 %v617
        %v908 = vunpack.c.l.b16 %v618
        %v909 = vunpack.c.h.b16 %v618
        %v910 = vunpack.c.l.b16 %v619
        %v911 = vunpack.c.h.b16 %v619
        %v912 = vunpack.c.l.b16 %v620
        %v913 = vunpack.c.h.b16 %v620
        %v914 = vunpack.c.l.b16 %v621
        %v915 = vunpack.c.h.b16 %v621
        %v916 = vunpack.c.l.b16 %v622
        %v917 = vunpack.c.h.b16 %v622
        %v918 = vunpack.c.l.b16 %v623
        %v919 = vunpack.c.h.b16 %v623
        %v920 = vunpack.c.l.b16 %v624
        %v921 = vunpack.c.h.b16 %v624
        %v922 = vunpack.c.l.b16 %v625
        %v923 = vunpack.c.h.b16 %v625
        %v924 = vunpack.c.l.b16 %v626
        %v925 = vunpack.c.h.b16 %v626
        %v926 = vunpack.c.l.b16 %v627
        %v927 = vunpack.c.h.b16 %v627
        %v928 = vunpack.c.l.b16 %v628
        %v929 = vunpack.c.h.b16 %v628
        %v930 = vunpack.c.l.b16 %v629
        %v931 = vunpack.c.h.b16 %v629
        %v932 = vunpack.c.l.b16 %v630
        %v933 = vunpack.c.h.b16 %v630
        %v934 = vunpack.c.l.b16 %v631
        %v935 = vunpack.c.h.b16 %v631
        %v936 = vunpack.c.l.b16 %v632
        %v937 = vunpack.c.h.b16 %v632
        %v938 = vunpack.c.l.b16 %v633
        %v939 = vunpack.c.h.b16 %v633
        %v940 = vunpack.c.l.b16 %v634
        %v941 = vunpack.c.h.b16 %v634
        %v942 = vunpack.c.l.b16 %v635
        %v943 = vunpack.c.h.b16 %v635
        %v944 = vunpack.c.l.b16 %v636
        %v945 = vunpack.c.h.b16 %v636
        %v946 = vunpack.c.l.b16 %v637
        %v947 = vunpack.c.h.b16 %v637
        %v948 = vpack.c.b16 %v760, %v756
        %v949 = vpack.c.b16 %v761, %v757
        %v950 = vpack.c.b16 %v762, %v758
        %v951 = vpack.c.b16 %v763, %v759
        %v952 = vpack.c.b16 %v768, %v764
        %v953 = vpack.c.b16 %v769, %v765
        %v954 = vpack.c.b16 %v770, %v766
        %v955 = vpack.c.b16 %v771, %v767
        %v956 = vpack.c.b16 %v776, %v772
        %v957 = vpack.c.b16 %v777, %v773
        %v958 = vpack.c.b16 %v778, %v774
        %v959 = vpack.c.b16 %v779, %v775
        %v960 = vpack.c.b16 %v784, %v780
        %v961 = vpack.c.b16 %v785, %v781
        %v962 = vpack.c.b16 %v786, %v782
        %v963 = vpack.c.b16 %v787, %v783
        %v964 = vpack.c.b16 %v792, %v788
        %v965 = vpack.c.b16 %v793, %v789
        %v966 = vpack.c.b16 %v794, %v790
        %v967 = vpack.c.b16 %v795, %v791
        %v968 = vpack.c.b16 %v800, %v796
        %v969 = vpack.c.b16 %v801, %v797
        %v970 = vpack.c.b16 %v802, %v798
        %v971 = vpack.c.b16 %v803, %v799
        %v972 = vpack.c.b16 %v808, %v804
        %v973 = vpack.c.b16 %v809, %v805
        %v974 = vpack.c.b16 %v810, %v806
        %v975 = vpack.c.b16 %v811, %v807
        %v976 = vpack.c.b16 %v816, %v812
        %v977 = vpack.c.b16 %v817, %v813
        %v978 = vpack.c.b16 %v818, %v814
        %v979 = vpack.c.b16 %v819, %v815
        %v980 = vpack.c.b16 %v824, %v820
        %v981 = vpack.c.b16 %v825, %v821
        %v982 = vpack.c.b16 %v826, %v822
        %v983 = vpack.c.b16 %v827, %v823
        %v984 = vpack.c.b16 %v832, %v828
        %v985 = vpack.c.b16 %v833, %v829
        %v986 = vpack.c.b16 %v834, %v830
        %v987 = vpack.c.b16 %v835, %v831
        %v988 = vpack.c.b16 %v840, %v836
        %v989 = vpack.c.b16 %v841, %v837
        %v990 = vpack.c.b16 %v842, %v838
        %v991 = vpack.c.b16 %v843, %v839
        %v992 = vpack.c.b16 %v848, %v844
        %v993 = vpack.c.b16 %v849, %v845
        %v994 = vpack.c.b16 %v850, %v846
        %v995 = vpack.c.b16 %v851, %v847
        %v996 = vpack.c.b16 %v856, %v852
        %v997 = vpack.c.b16 %v857, %v853
        %v998 = vpack.c.b16 %v858, %v854
        %v999 = vpack.c.b16 %v859, %v855
        %v1000 = vpack.c.b16 %v864, %v860
        %v1001 = vpack.c.b16 %v865, %v861
        %v1002 = vpack.c.b16 %v866, %v862
        %v1003 = vpack.c.b16 %v867, %v863
        %v1004 = vpack.c.b16 %v872, %v868
        %v1005 = vpack.c.b16 %v873, %v869
        %v1006 = vpack.c.b16 %v874, %v870
        %v1007 = vpack.c.b16 %v875, %v871
        %v1008 = vpack.c.b16 %v880, %v876
        %v1009 = vpack.c.b16 %v881, %v877
        %v1010 = vpack.c.b16 %v882, %v878
        %v1011 = vpack.c.b16 %v883, %v879
        %v1012 = vpack.c.b16 %v888, %v884
        %v1013 = vpack.c.b16 %v889, %v885
        %v1014 = vpack.c.b16 %v890, %v886
        %v1015 = vpack.c.b16 %v891, %v887
        %v1016 = vpack.c.b16 %v896, %v892
        %v1017 = vpack.c.b16 %v897, %v893
        %v1018 = vpack.c.b16 %v898, %v894
        %v1019 = vpack.c.b16 %v899, %v895
        %v1020 = vpack.c.b16 %v904, %v900
        %v1021 = vpack.c.b16 %v905, %v901
        %v1022 = vpack.c.b16 %v906, %v902
        %v1023 = vpack.c.b16 %v907, %v903
        %v1024 = vpack.c.b16 %v912, %v908
        %v1025 = vpack.c.b16 %v913, %v909
        %v1026 = vpack.c.b16 %v914, %v910
        %v1027 = vpack.c.b16 %v915, %v911
        %v1028 = vpack.c.b16 %v920, %v916
        %v1029 = vpack.c.b16 %v921, %v917
        %v1030 = vpack.c.b16 %v922, %v918
        %v1031 = vpack.c.b16 %v923, %v919
        %v1032 = vpack.c.b16 %v928, %v924
        %v1033 = vpack.c.b16 %v929, %v925
        %v1034 = vpack.c.b16 %v930, %v926
        %v1035 = vpack.c.b16 %v931, %v927
        %v1036 = vpack.c.b16 %v936, %v932
        %v1037 = vpack.c.b16 %v937, %v933
        %v1038 = vpack.c.b16 %v938, %v934
        %v1039 = vpack.c.b16 %v939, %v935
        %v1040 = vpack.c.b16 %v944, %v940
        %v1041 = vpack.c.b16 %v945, %v941
        %v1042 = vpack.c.b16 %v946, %v942
        %v1043 = vpack.c.b16 %v947, %v943
        %1140 = vmatprep.subr.bf16.mxu0 %v977
        %1141 = vmatpush1.bf16.msra.mxu0 %v976
        %1142 = vmatprep.subr.bf16.mxu0 %v973
        %1143 = vmatpush1.bf16.msra.mxu0 %v972
        %1144 = vmatprep.subr.bf16.mxu0 %v969
        %1145 = vmatpush1.bf16.msra.mxu0 %v968
        %1146 = vmatprep.subr.bf16.mxu0 %v965
        %1147 = vmatpush1.bf16.msra.mxu0 %v964
        %1148 = vmatprep.subr.bf16.mxu0 %v961
        %1149 = vmatpush1.bf16.msra.mxu0 %v960
        %1150 = vmatprep.subr.bf16.mxu0 %v957
        %1151 = vmatpush1.bf16.msra.mxu0 %v956
        %1152 = vmatprep.subr.bf16.mxu0 %v953
        %1153 = vmatpush1.bf16.msra.mxu0 %v952
        %1154 = vmatprep.subr.bf16.mxu0 %v949
        %1155 = vmatpush1.bf16.msra.mxu0 %v948
        %1156 = vmatprep.subr.bf16.mxu0 %v1009
        %1157 = vmatpush2.bf16.msra.mxu0 %v1008
        %1158 = vmatprep.subr.bf16.mxu0 %v1005
        %1159 = vmatpush2.bf16.msra.mxu0 %v1004
        %1160 = vmatprep.subr.bf16.mxu0 %v1001
        %1161 = vmatpush2.bf16.msra.mxu0 %v1000
        %1162 = vmatprep.subr.bf16.mxu0 %v997
        %1163 = vmatpush2.bf16.msra.mxu0 %v996
        %1164 = vmatprep.subr.bf16.mxu0 %v993
        %1165 = vmatpush2.bf16.msra.mxu0 %v992
        %1166 = vmatprep.subr.bf16.mxu0 %v989
        %1167 = vmatpush2.bf16.msra.mxu0 %v988
        %1168 = vmatprep.subr.bf16.mxu0 %v985
        %1169 = vmatpush2.bf16.msra.mxu0 %v984
        %1170 = vmatprep.subr.bf16.mxu0 %v981
        %1171 = vmatpush2.bf16.msra.mxu0 %v980
        %1172 = vmatprep.mubr.bf16.mxu0 %v519
        %1173 = vmatmul.mubr.bf16.gmra.mxu0 %v518
        %v1174 = vpop.f32.mrf.mxu0
        %v1175 = vadd.f32 %v643, %v1174
        %v1176 = vpop.f32.mrf.mxu0
        %v1177 = vadd.f32 %v647, %v1176
        %v1178 = vpop.f32.mrf.mxu0
        %v1179 = vadd.f32 %v643, %v1178
        %v1180 = vpop.f32.mrf.mxu0
        %v1181 = vadd.f32 %v647, %v1180
        %1182 = vmatprep.mubr.bf16.mxu0 %v522
        %1183 = vmatmul.mubr.bf16.gmra.mxu0 %v521
        %v1184 = vpop.f32.mrf.mxu0
        %v1185 = vadd.f32 %v643, %v1184
        %v1186 = vpop.f32.mrf.mxu0
        %v1187 = vadd.f32 %v647, %v1186
        %v1188 = vpop.f32.mrf.mxu0
        %v1189 = vadd.f32 %v643, %v1188
        %v1190 = vpop.f32.mrf.mxu0
        %v1191 = vadd.f32 %v647, %v1190
        %1192 = vmatprep.mubr.bf16.mxu0 %v525
        %1193 = vmatmul.mubr.bf16.gmra.mxu0 %v524
        %v1194 = vpop.f32.mrf.mxu0
        %v1195 = vadd.f32 %v643, %v1194
        %v1196 = vpop.f32.mrf.mxu0
        %v1197 = vadd.f32 %v647, %v1196
        %v1198 = vpop.f32.mrf.mxu0
        %v1199 = vadd.f32 %v643, %v1198
        %v1200 = vpop.f32.mrf.mxu0
        %v1201 = vadd.f32 %v647, %v1200
        %1202 = vmatprep.mubr.bf16.mxu0 %v528
        %1203 = vmatmul.mubr.bf16.gmra.mxu0 %v527
        %v1204 = vpop.f32.mrf.mxu0
        %v1205 = vadd.f32 %v643, %v1204
        %v1206 = vpop.f32.mrf.mxu0
        %v1207 = vadd.f32 %v647, %v1206
        %v1208 = vpop.f32.mrf.mxu0
        %v1209 = vadd.f32 %v643, %v1208
        %v1210 = vpop.f32.mrf.mxu0
        %v1211 = vadd.f32 %v647, %v1210
        %1212 = vmatprep.mubr.bf16.mxu0 %v531
        %1213 = vmatmul.mubr.bf16.gmra.mxu0 %v530
        %v1214 = vpop.f32.mrf.mxu0
        %v1215 = vadd.f32 %v643, %v1214
        %v1216 = vpop.f32.mrf.mxu0
        %v1217 = vadd.f32 %v647, %v1216
        %v1218 = vpop.f32.mrf.mxu0
        %v1219 = vadd.f32 %v643, %v1218
        %v1220 = vpop.f32.mrf.mxu0
        %v1221 = vadd.f32 %v647, %v1220
        %1222 = vmatprep.mubr.bf16.mxu0 %v534
        %1223 = vmatmul.mubr.bf16.gmra.mxu0 %v533
        %v1224 = vpop.f32.mrf.mxu0
        %v1225 = vadd.f32 %v643, %v1224
        %v1226 = vpop.f32.mrf.mxu0
        %v1227 = vadd.f32 %v647, %v1226
        %v1228 = vpop.f32.mrf.mxu0
        %v1229 = vadd.f32 %v643, %v1228
        %v1230 = vpop.f32.mrf.mxu0
        %v1231 = vadd.f32 %v647, %v1230
        %1232 = vmatprep.mubr.bf16.mxu0 %v537
        %1233 = vmatmul.mubr.bf16.gmra.mxu0 %v536
        %v1234 = vpop.f32.mrf.mxu0
        %v1235 = vadd.f32 %v643, %v1234
        %v1236 = vpop.f32.mrf.mxu0
        %v1237 = vadd.f32 %v647, %v1236
        %v1238 = vpop.f32.mrf.mxu0
        %v1239 = vadd.f32 %v643, %v1238
        %v1240 = vpop.f32.mrf.mxu0
        %v1241 = vadd.f32 %v647, %v1240
        %1242 = vmatprep.mubr.bf16.mxu0 %v540
        %1243 = vmatmul.mubr.bf16.gmra.mxu0 %v539
        %v1244 = vpop.f32.mrf.mxu0
        %v1245 = vadd.f32 %v643, %v1244
        %v1246 = vpop.f32.mrf.mxu0
        %v1247 = vadd.f32 %v647, %v1246
        %v1248 = vpop.f32.mrf.mxu0
        %v1249 = vadd.f32 %v643, %v1248
        %v1250 = vpop.f32.mrf.mxu0
        %v1251 = vadd.f32 %v647, %v1250
        %1252 = vdwg.mxu0
        %1253 = vmatprep.subr.bf16.mxu0 %v1041
        %1254 = vmatpush1.bf16.msra.mxu0 %v1040
        %1255 = vmatprep.subr.bf16.mxu0 %v1037
        %1256 = vmatpush1.bf16.msra.mxu0 %v1036
        %1257 = vmatprep.subr.bf16.mxu0 %v1033
        %1258 = vmatpush1.bf16.msra.mxu0 %v1032
        %1259 = vmatprep.subr.bf16.mxu0 %v1029
        %1260 = vmatpush1.bf16.msra.mxu0 %v1028
        %1261 = vmatprep.subr.bf16.mxu0 %v1025
        %1262 = vmatpush1.bf16.msra.mxu0 %v1024
        %1263 = vmatprep.subr.bf16.mxu0 %v1021
        %1264 = vmatpush1.bf16.msra.mxu0 %v1020
        %1265 = vmatprep.subr.bf16.mxu0 %v1017
        %1266 = vmatpush1.bf16.msra.mxu0 %v1016
        %1267 = vmatprep.subr.bf16.mxu0 %v1013
        %1268 = vmatpush1.bf16.msra.mxu0 %v1012
        %1269 = vmatprep.subr.bf16.mxu0 0
        %1270 = vmatpush2.bf16.msra.mxu0 0
        %1271 = vmatprep.subr.bf16.mxu0 0
        %1272 = vmatpush2.bf16.msra.mxu0 0
        %1273 = vmatprep.subr.bf16.mxu0 0
        %1274 = vmatpush2.bf16.msra.mxu0 0
        %1275 = vmatprep.subr.bf16.mxu0 0
        %1276 = vmatpush2.bf16.msra.mxu0 0
        %1277 = vmatprep.subr.bf16.mxu0 0
        %1278 = vmatpush2.bf16.msra.mxu0 0
        %1279 = vmatprep.subr.bf16.mxu0 0
        %1280 = vmatpush2.bf16.msra.mxu0 0
        %1281 = vmatprep.subr.bf16.mxu0 0
        %1282 = vmatpush2.bf16.msra.mxu0 0
        %1283 = vmatprep.subr.bf16.mxu0 0
        %1284 = vmatpush2.bf16.msra.mxu0 0
        %1285 = vmatprep.mubr.bf16.mxu0 0
        %1286 = vmatmul.mubr.bf16.gmra.mxu0 %v520
        %v1287 = vpop.f32.mrf.mxu0
        %v1288 = vadd.f32 %v1175, %v1287
        %v1289 = vpop.f32.mrf.mxu0
        %v1290 = vadd.f32 %v1177, %v1289
        %v1291 = vpop.f32.mrf.mxu0
        %v1292 = vadd.f32 %v1179, %v1291
        %v1293 = vpop.f32.mrf.mxu0
        %v1294 = vadd.f32 %v1181, %v1293
        %1295 = vmatprep.mubr.bf16.mxu0 0
        %1296 = vmatmul.mubr.bf16.gmra.mxu0 %v523
        %v1297 = vpop.f32.mrf.mxu0
        %v1298 = vadd.f32 %v1185, %v1297
        %v1299 = vpop.f32.mrf.mxu0
        %v1300 = vadd.f32 %v1187, %v1299
        %v1301 = vpop.f32.mrf.mxu0
        %v1302 = vadd.f32 %v1189, %v1301
        %v1303 = vpop.f32.mrf.mxu0
        %v1304 = vadd.f32 %v1191, %v1303
        %1305 = vmatprep.mubr.bf16.mxu0 0
        %1306 = vmatmul.mubr.bf16.gmra.mxu0 %v526
        %v1307 = vpop.f32.mrf.mxu0
        %v1308 = vadd.f32 %v1195, %v1307
        %v1309 = vpop.f32.mrf.mxu0
        %v1310 = vadd.f32 %v1197, %v1309
        %v1311 = vpop.f32.mrf.mxu0
        %v1312 = vadd.f32 %v1199, %v1311
        %v1313 = vpop.f32.mrf.mxu0
        %v1314 = vadd.f32 %v1201, %v1313
        %1315 = vmatprep.mubr.bf16.mxu0 0
        %1316 = vmatmul.mubr.bf16.gmra.mxu0 %v529
        %v1317 = vpop.f32.mrf.mxu0
        %v1318 = vadd.f32 %v1205, %v1317
        %v1319 = vpop.f32.mrf.mxu0
        %v1320 = vadd.f32 %v1207, %v1319
        %v1321 = vpop.f32.mrf.mxu0
        %v1322 = vadd.f32 %v1209, %v1321
        %v1323 = vpop.f32.mrf.mxu0
        %v1324 = vadd.f32 %v1211, %v1323
        %1325 = vmatprep.mubr.bf16.mxu0 0
        %1326 = vmatmul.mubr.bf16.gmra.mxu0 %v532
        %v1327 = vpop.f32.mrf.mxu0
        %v1328 = vadd.f32 %v1215, %v1327
        %v1329 = vpop.f32.mrf.mxu0
        %v1330 = vadd.f32 %v1217, %v1329
        %v1331 = vpop.f32.mrf.mxu0
        %v1332 = vadd.f32 %v1219, %v1331
        %v1333 = vpop.f32.mrf.mxu0
        %v1334 = vadd.f32 %v1221, %v1333
        %1335 = vmatprep.mubr.bf16.mxu0 0
        %1336 = vmatmul.mubr.bf16.gmra.mxu0 %v535
        %v1337 = vpop.f32.mrf.mxu0
        %v1338 = vadd.f32 %v1225, %v1337
        %v1339 = vpop.f32.mrf.mxu0
        %v1340 = vadd.f32 %v1227, %v1339
        %v1341 = vpop.f32.mrf.mxu0
        %v1342 = vadd.f32 %v1229, %v1341
        %v1343 = vpop.f32.mrf.mxu0
        %v1344 = vadd.f32 %v1231, %v1343
        %1345 = vmatprep.mubr.bf16.mxu0 0
        %1346 = vmatmul.mubr.bf16.gmra.mxu0 %v538
        %v1347 = vpop.f32.mrf.mxu0
        %v1348 = vadd.f32 %v1235, %v1347
        %v1349 = vpop.f32.mrf.mxu0
        %v1350 = vadd.f32 %v1237, %v1349
        %v1351 = vpop.f32.mrf.mxu0
        %v1352 = vadd.f32 %v1239, %v1351
        %v1353 = vpop.f32.mrf.mxu0
        %v1354 = vadd.f32 %v1241, %v1353
        %1355 = vmatprep.mubr.bf16.mxu0 0
        %1356 = vmatmul.mubr.bf16.gmra.mxu0 %v541
        %v1357 = vpop.f32.mrf.mxu0
        %v1358 = vadd.f32 %v1245, %v1357
        %v1359 = vpop.f32.mrf.mxu0
        %v1360 = vadd.f32 %v1247, %v1359
        %v1361 = vpop.f32.mrf.mxu0
        %v1362 = vadd.f32 %v1249, %v1361
        %v1363 = vpop.f32.mrf.mxu0
        %v1364 = vadd.f32 %v1251, %v1363
        %1365 = vdwg.mxu0
        %1366 = vmatprep.subr.bf16.mxu0 %v979
        %1367 = vmatpush1.bf16.msra.mxu0 %v978
        %1368 = vmatprep.subr.bf16.mxu0 %v975
        %1369 = vmatpush1.bf16.msra.mxu0 %v974
        %1370 = vmatprep.subr.bf16.mxu0 %v971
        %1371 = vmatpush1.bf16.msra.mxu0 %v970
        %1372 = vmatprep.subr.bf16.mxu0 %v967
        %1373 = vmatpush1.bf16.msra.mxu0 %v966
        %1374 = vmatprep.subr.bf16.mxu0 %v963
        %1375 = vmatpush1.bf16.msra.mxu0 %v962
        %1376 = vmatprep.subr.bf16.mxu0 %v959
        %1377 = vmatpush1.bf16.msra.mxu0 %v958
        %1378 = vmatprep.subr.bf16.mxu0 %v955
        %1379 = vmatpush1.bf16.msra.mxu0 %v954
        %1380 = vmatprep.subr.bf16.mxu0 %v951
        %1381 = vmatpush1.bf16.msra.mxu0 %v950
        %1382 = vmatprep.subr.bf16.mxu0 %v1011
        %1383 = vmatpush2.bf16.msra.mxu0 %v1010
        %1384 = vmatprep.subr.bf16.mxu0 %v1007
        %1385 = vmatpush2.bf16.msra.mxu0 %v1006
        %1386 = vmatprep.subr.bf16.mxu0 %v1003
        %1387 = vmatpush2.bf16.msra.mxu0 %v1002
        %1388 = vmatprep.subr.bf16.mxu0 %v999
        %1389 = vmatpush2.bf16.msra.mxu0 %v998
        %1390 = vmatprep.subr.bf16.mxu0 %v995
        %1391 = vmatpush2.bf16.msra.mxu0 %v994
        %1392 = vmatprep.subr.bf16.mxu0 %v991
        %1393 = vmatpush2.bf16.msra.mxu0 %v990
        %1394 = vmatprep.subr.bf16.mxu0 %v987
        %1395 = vmatpush2.bf16.msra.mxu0 %v986
        %1396 = vmatprep.subr.bf16.mxu0 %v983
        %1397 = vmatpush2.bf16.msra.mxu0 %v982
        %1398 = vmatprep.mubr.bf16.mxu0 %v519
        %1399 = vmatmul.mubr.bf16.gmra.mxu0 %v518
        %v1400 = vpop.f32.mrf.mxu0
        %v1401 = vadd.f32 %v651, %v1400
        %v1402 = vpop.f32.mrf.mxu0
        %v1403 = vadd.f32 %v655, %v1402
        %v1404 = vpop.f32.mrf.mxu0
        %v1405 = vadd.f32 %v651, %v1404
        %v1406 = vpop.f32.mrf.mxu0
        %v1407 = vadd.f32 %v655, %v1406
        %1408 = vmatprep.mubr.bf16.mxu0 %v522
        %1409 = vmatmul.mubr.bf16.gmra.mxu0 %v521
        %v1410 = vpop.f32.mrf.mxu0
        %v1411 = vadd.f32 %v651, %v1410
        %v1412 = vpop.f32.mrf.mxu0
        %v1413 = vadd.f32 %v655, %v1412
        %v1414 = vpop.f32.mrf.mxu0
        %v1415 = vadd.f32 %v651, %v1414
        %v1416 = vpop.f32.mrf.mxu0
        %v1417 = vadd.f32 %v655, %v1416
        %1418 = vmatprep.mubr.bf16.mxu0 %v525
        %1419 = vmatmul.mubr.bf16.gmra.mxu0 %v524
        %v1420 = vpop.f32.mrf.mxu0
        %v1421 = vadd.f32 %v651, %v1420
        %v1422 = vpop.f32.mrf.mxu0
        %v1423 = vadd.f32 %v655, %v1422
        %v1424 = vpop.f32.mrf.mxu0
        %v1425 = vadd.f32 %v651, %v1424
        %v1426 = vpop.f32.mrf.mxu0
        %v1427 = vadd.f32 %v655, %v1426
        %1428 = vmatprep.mubr.bf16.mxu0 %v528
        %1429 = vmatmul.mubr.bf16.gmra.mxu0 %v527
        %v1430 = vpop.f32.mrf.mxu0
        %v1431 = vadd.f32 %v651, %v1430
        %v1432 = vpop.f32.mrf.mxu0
        %v1433 = vadd.f32 %v655, %v1432
        %v1434 = vpop.f32.mrf.mxu0
        %v1435 = vadd.f32 %v651, %v1434
        %v1436 = vpop.f32.mrf.mxu0
        %v1437 = vadd.f32 %v655, %v1436
        %1438 = vmatprep.mubr.bf16.mxu0 %v531
        %1439 = vmatmul.mubr.bf16.gmra.mxu0 %v530
        %v1440 = vpop.f32.mrf.mxu0
        %v1441 = vadd.f32 %v651, %v1440
        %v1442 = vpop.f32.mrf.mxu0
        %v1443 = vadd.f32 %v655, %v1442
        %v1444 = vpop.f32.mrf.mxu0
        %v1445 = vadd.f32 %v651, %v1444
        %v1446 = vpop.f32.mrf.mxu0
        %v1447 = vadd.f32 %v655, %v1446
        %1448 = vmatprep.mubr.bf16.mxu0 %v534
        %1449 = vmatmul.mubr.bf16.gmra.mxu0 %v533
        %v1450 = vpop.f32.mrf.mxu0
        %v1451 = vadd.f32 %v651, %v1450
        %v1452 = vpop.f32.mrf.mxu0
        %v1453 = vadd.f32 %v655, %v1452
        %v1454 = vpop.f32.mrf.mxu0
        %v1455 = vadd.f32 %v651, %v1454
        %v1456 = vpop.f32.mrf.mxu0
        %v1457 = vadd.f32 %v655, %v1456
        %1458 = vmatprep.mubr.bf16.mxu0 %v537
        %1459 = vmatmul.mubr.bf16.gmra.mxu0 %v536
        %v1460 = vpop.f32.mrf.mxu0
        %v1461 = vadd.f32 %v651, %v1460
        %v1462 = vpop.f32.mrf.mxu0
        %v1463 = vadd.f32 %v655, %v1462
        %v1464 = vpop.f32.mrf.mxu0
        %v1465 = vadd.f32 %v651, %v1464
        %v1466 = vpop.f32.mrf.mxu0
        %v1467 = vadd.f32 %v655, %v1466
        %1468 = vmatprep.mubr.bf16.mxu0 %v540
        %1469 = vmatmul.mubr.bf16.gmra.mxu0 %v539
        %v1470 = vpop.f32.mrf.mxu0
        %v1471 = vadd.f32 %v651, %v1470
        %v1472 = vpop.f32.mrf.mxu0
        %v1473 = vadd.f32 %v655, %v1472
        %v1474 = vpop.f32.mrf.mxu0
        %v1475 = vadd.f32 %v651, %v1474
        %v1476 = vpop.f32.mrf.mxu0
        %v1477 = vadd.f32 %v655, %v1476
        %1478 = vdwg.mxu0
        %1479 = vmatprep.subr.bf16.mxu0 %v1043
        %1480 = vmatpush1.bf16.msra.mxu0 %v1042
        %1481 = vmatprep.subr.bf16.mxu0 %v1039
        %1482 = vmatpush1.bf16.msra.mxu0 %v1038
        %1483 = vmatprep.subr.bf16.mxu0 %v1035
        %1484 = vmatpush1.bf16.msra.mxu0 %v1034
        %1485 = vmatprep.subr.bf16.mxu0 %v1031
        %1486 = vmatpush1.bf16.msra.mxu0 %v1030
        %1487 = vmatprep.subr.bf16.mxu0 %v1027
        %1488 = vmatpush1.bf16.msra.mxu0 %v1026
        %1489 = vmatprep.subr.bf16.mxu0 %v1023
        %1490 = vmatpush1.bf16.msra.mxu0 %v1022
        %1491 = vmatprep.subr.bf16.mxu0 %v1019
        %1492 = vmatpush1.bf16.msra.mxu0 %v1018
        %1493 = vmatprep.subr.bf16.mxu0 %v1015
        %1494 = vmatpush1.bf16.msra.mxu0 %v1014
        %1495 = vmatprep.subr.bf16.mxu0 0
        %1496 = vmatpush2.bf16.msra.mxu0 0
        %1497 = vmatprep.subr.bf16.mxu0 0
        %1498 = vmatpush2.bf16.msra.mxu0 0
        %1499 = vmatprep.subr.bf16.mxu0 0
        %1500 = vmatpush2.bf16.msra.mxu0 0
        %1501 = vmatprep.subr.bf16.mxu0 0
        %1502 = vmatpush2.bf16.msra.mxu0 0
        %1503 = vmatprep.subr.bf16.mxu0 0
        %1504 = vmatpush2.bf16.msra.mxu0 0
        %1505 = vmatprep.subr.bf16.mxu0 0
        %1506 = vmatpush2.bf16.msra.mxu0 0
        %1507 = vmatprep.subr.bf16.mxu0 0
        %1508 = vmatpush2.bf16.msra.mxu0 0
        %1509 = vmatprep.subr.bf16.mxu0 0
        %1510 = vmatpush2.bf16.msra.mxu0 0
        %1511 = vmatprep.mubr.bf16.mxu0 0
        %1512 = vmatmul.mubr.bf16.gmra.mxu0 %v520
        %v1513 = vpop.f32.mrf.mxu0
        %v1514 = vadd.f32 %v1401, %v1513
        %v1515 = vpop.f32.mrf.mxu0
        %v1516 = vadd.f32 %v1403, %v1515
        %v1517 = vpop.f32.mrf.mxu0
        %v1518 = vadd.f32 %v1405, %v1517
        %v1519 = vpop.f32.mrf.mxu0
        %v1520 = vadd.f32 %v1407, %v1519
        %1521 = vmatprep.mubr.bf16.mxu0 0
        %1522 = vmatmul.mubr.bf16.gmra.mxu0 %v523
        %v1523 = vpop.f32.mrf.mxu0
        %v1524 = vadd.f32 %v1411, %v1523
        %v1525 = vpop.f32.mrf.mxu0
        %v1526 = vadd.f32 %v1413, %v1525
        %v1527 = vpop.f32.mrf.mxu0
        %v1528 = vadd.f32 %v1415, %v1527
        %v1529 = vpop.f32.mrf.mxu0
        %v1530 = vadd.f32 %v1417, %v1529
        %1531 = vmatprep.mubr.bf16.mxu0 0
        %1532 = vmatmul.mubr.bf16.gmra.mxu0 %v526
        %v1533 = vpop.f32.mrf.mxu0
        %v1534 = vadd.f32 %v1421, %v1533
        %v1535 = vpop.f32.mrf.mxu0
        %v1536 = vadd.f32 %v1423, %v1535
        %v1537 = vpop.f32.mrf.mxu0
        %v1538 = vadd.f32 %v1425, %v1537
        %v1539 = vpop.f32.mrf.mxu0
        %v1540 = vadd.f32 %v1427, %v1539
        %1541 = vmatprep.mubr.bf16.mxu0 0
        %1542 = vmatmul.mubr.bf16.gmra.mxu0 %v529
        %v1543 = vpop.f32.mrf.mxu0
        %v1544 = vadd.f32 %v1431, %v1543
        %v1545 = vpop.f32.mrf.mxu0
        %v1546 = vadd.f32 %v1433, %v1545
        %v1547 = vpop.f32.mrf.mxu0
        %v1548 = vadd.f32 %v1435, %v1547
        %v1549 = vpop.f32.mrf.mxu0
        %v1550 = vadd.f32 %v1437, %v1549
        %1551 = vmatprep.mubr.bf16.mxu0 0
        %1552 = vmatmul.mubr.bf16.gmra.mxu0 %v532
        %v1553 = vpop.f32.mrf.mxu0
        %v1554 = vadd.f32 %v1441, %v1553
        %v1555 = vpop.f32.mrf.mxu0
        %v1556 = vadd.f32 %v1443, %v1555
        %v1557 = vpop.f32.mrf.mxu0
        %v1558 = vadd.f32 %v1445, %v1557
        %v1559 = vpop.f32.mrf.mxu0
        %v1560 = vadd.f32 %v1447, %v1559
        %1561 = vmatprep.mubr.bf16.mxu0 0
        %1562 = vmatmul.mubr.bf16.gmra.mxu0 %v535
        %v1563 = vpop.f32.mrf.mxu0
        %v1564 = vadd.f32 %v1451, %v1563
        %v1565 = vpop.f32.mrf.mxu0
        %v1566 = vadd.f32 %v1453, %v1565
        %v1567 = vpop.f32.mrf.mxu0
        %v1568 = vadd.f32 %v1455, %v1567
        %v1569 = vpop.f32.mrf.mxu0
        %v1570 = vadd.f32 %v1457, %v1569
        %1571 = vmatprep.mubr.bf16.mxu0 0
        %1572 = vmatmul.mubr.bf16.gmra.mxu0 %v538
        %v1573 = vpop.f32.mrf.mxu0
        %v1574 = vadd.f32 %v1461, %v1573
        %v1575 = vpop.f32.mrf.mxu0
        %v1576 = vadd.f32 %v1463, %v1575
        %v1577 = vpop.f32.mrf.mxu0
        %v1578 = vadd.f32 %v1465, %v1577
        %v1579 = vpop.f32.mrf.mxu0
        %v1580 = vadd.f32 %v1467, %v1579
        %1581 = vmatprep.mubr.bf16.mxu0 0
        %1582 = vmatmul.mubr.bf16.gmra.mxu0 %v541
        %v1583 = vpop.f32.mrf.mxu0
        %v1584 = vadd.f32 %v1471, %v1583
        %v1585 = vpop.f32.mrf.mxu0
        %v1586 = vadd.f32 %v1473, %v1585
        %v1587 = vpop.f32.mrf.mxu0
        %v1588 = vadd.f32 %v1475, %v1587
        %v1589 = vpop.f32.mrf.mxu0
        %v1590 = vadd.f32 %v1477, %v1589
        %1591 = vdwg.mxu0
        %v1592 = vmax.f32 %v1288, 0.0
        %v1593 = vmax.f32 %v1290, 0.0
        %v1594 = vmax.f32 %v1514, 0.0
        %v1595 = vmax.f32 %v1516, 0.0
        %v1596 = vmax.f32 %v1292, 0.0
        %v1597 = vmax.f32 %v1294, 0.0
        %v1598 = vmax.f32 %v1518, 0.0
        %v1599 = vmax.f32 %v1520, 0.0
        %v1600 = vmax.f32 %v1298, 0.0
        %v1601 = vmax.f32 %v1300, 0.0
        %v1602 = vmax.f32 %v1524, 0.0
        %v1603 = vmax.f32 %v1526, 0.0
        %v1604 = vmax.f32 %v1302, 0.0
        %v1605 = vmax.f32 %v1304, 0.0
        %v1606 = vmax.f32 %v1528, 0.0
        %v1607 = vmax.f32 %v1530, 0.0
        %v1608 = vmax.f32 %v1308, 0.0
        %v1609 = vmax.f32 %v1310, 0.0
        %v1610 = vmax.f32 %v1534, 0.0
        %v1611 = vmax.f32 %v1536, 0.0
        %v1612 = vmax.f32 %v1312, 0.0
        %v1613 = vmax.f32 %v1314, 0.0
        %v1614 = vmax.f32 %v1538, 0.0
        %v1615 = vmax.f32 %v1540, 0.0
        %v1616 = vmax.f32 %v1318, 0.0
        %v1617 = vmax.f32 %v1320, 0.0
        %v1618 = vmax.f32 %v1544, 0.0
        %v1619 = vmax.f32 %v1546, 0.0
        %v1620 = vmax.f32 %v1322, 0.0
        %v1621 = vmax.f32 %v1324, 0.0
        %v1622 = vmax.f32 %v1548, 0.0
        %v1623 = vmax.f32 %v1550, 0.0
        %v1624 = vmax.f32 %v1328, 0.0
        %v1625 = vmax.f32 %v1330, 0.0
        %v1626 = vmax.f32 %v1554, 0.0
        %v1627 = vmax.f32 %v1556, 0.0
        %v1628 = vmax.f32 %v1332, 0.0
        %v1629 = vmax.f32 %v1334, 0.0
        %v1630 = vmax.f32 %v1558, 0.0
        %v1631 = vmax.f32 %v1560, 0.0
        %v1632 = vmax.f32 %v1338, 0.0
        %v1633 = vmax.f32 %v1340, 0.0
        %v1634 = vmax.f32 %v1564, 0.0
        %v1635 = vmax.f32 %v1566, 0.0
        %v1636 = vmax.f32 %v1342, 0.0
        %v1637 = vmax.f32 %v1344, 0.0
        %v1638 = vmax.f32 %v1568, 0.0
        %v1639 = vmax.f32 %v1570, 0.0
        %v1640 = vmax.f32 %v1348, 0.0
        %v1641 = vmax.f32 %v1350, 0.0
        %v1642 = vmax.f32 %v1574, 0.0
        %v1643 = vmax.f32 %v1576, 0.0
        %v1644 = vmax.f32 %v1352, 0.0
        %v1645 = vmax.f32 %v1354, 0.0
        %v1646 = vmax.f32 %v1578, 0.0
        %v1647 = vmax.f32 %v1580, 0.0
        %v1648 = vmax.f32 %v1358, 0.0
        %v1649 = vmax.f32 %v1360, 0.0
        %v1650 = vmax.f32 %v1584, 0.0
        %v1651 = vmax.f32 %v1586, 0.0
        %v1652 = vmax.f32 %v1362, 0.0
        %v1653 = vmax.f32 %v1364, 0.0
        %v1654 = vmax.f32 %v1588, 0.0
        %v1655 = vmax.f32 %v1590, 0.0
        %v1656 = vld [vmem:[#allocation2] sm:$0xff]
        %v1657 = vld [vmem:[#allocation2 + $0x8] sm:$0xff]
        %v1658 = vld [vmem:[#allocation2 + $0x10] sm:$0xff]
        %v1659 = vld [vmem:[#allocation2 + $0x18] sm:$0xff]
        %v1660 = vld [vmem:[#allocation2 + $0x20] sm:$0xff]
        %v1661 = vld [vmem:[#allocation2 + $0x28] sm:$0xff]
        %v1662 = vld [vmem:[#allocation2 + $0x30] sm:$0xff]
        %v1663 = vld [vmem:[#allocation2 + $0x38] sm:$0xff]
        %v1664 = vld [vmem:[#allocation2 + $0x40] sm:$0xff]
        %v1665 = vld [vmem:[#allocation2 + $0x48] sm:$0xff]
        %v1666 = vld [vmem:[#allocation2 + $0x50] sm:$0xff]
        %v1667 = vld [vmem:[#allocation2 + $0x58] sm:$0xff]
        %v1668 = vld [vmem:[#allocation2 + $0x60] sm:$0xff]
        %v1669 = vld [vmem:[#allocation2 + $0x68] sm:$0xff]
        %v1670 = vld [vmem:[#allocation2 + $0x70] sm:$0xff]
        %v1671 = vld [vmem:[#allocation2 + $0x78] sm:$0xff]
        %v1672 = vld [vmem:[#allocation2 + $0x80] sm:$0xff]
        %v1673 = vld [vmem:[#allocation2 + $0x88] sm:$0xff]
        %v1674 = vld [vmem:[#allocation2 + $0x90] sm:$0xff]
        %v1675 = vld [vmem:[#allocation2 + $0x98] sm:$0xff]
        %v1676 = vld [vmem:[#allocation2 + $0xa0] sm:$0xff]
        %v1677 = vld [vmem:[#allocation2 + $0xa8] sm:$0xff]
        %v1678 = vld [vmem:[#allocation2 + $0xb0] sm:$0xff]
        %v1679 = vld [vmem:[#allocation2 + $0xb8] sm:$0xff]
        %v1680 = vld [vmem:[#allocation2 + $0xc0] sm:$0xff]
        %v1681 = vld [vmem:[#allocation2 + $0xc8] sm:$0xff]
        %v1682 = vld [vmem:[#allocation2 + $0xd0] sm:$0xff]
        %v1683 = vld [vmem:[#allocation2 + $0xd8] sm:$0xff]
        %v1684 = vld [vmem:[#allocation2 + $0xe0] sm:$0xff]
        %v1685 = vld [vmem:[#allocation2 + $0xe8] sm:$0xff]
        %v1686 = vld [vmem:[#allocation2 + $0xf0] sm:$0xff]
        %v1687 = vld [vmem:[#allocation2 + $0xf8] sm:$0xff]
        %v1688 = vld [vmem:[#allocation2 + $0x100] sm:$0xff]
        %v1689 = vld [vmem:[#allocation2 + $0x108] sm:$0xff]
        %v1690 = vld [vmem:[#allocation2 + $0x110] sm:$0xff]
        %v1691 = vld [vmem:[#allocation2 + $0x118] sm:$0xff]
        %v1692 = vld [vmem:[#allocation2 + $0x120] sm:$0xff]
        %v1693 = vld [vmem:[#allocation2 + $0x128] sm:$0xff]
        %v1694 = vld [vmem:[#allocation2 + $0x130] sm:$0xff]
        %v1695 = vld [vmem:[#allocation2 + $0x138] sm:$0xff]
        %v1696 = vld [vmem:[#allocation2 + $0x140] sm:$0xff]
        %v1697 = vld [vmem:[#allocation2 + $0x148] sm:$0xff]
        %v1698 = vld [vmem:[#allocation2 + $0x150] sm:$0xff]
        %v1699 = vld [vmem:[#allocation2 + $0x158] sm:$0xff]
        %v1700 = vld [vmem:[#allocation2 + $0x160] sm:$0xff]
        %v1701 = vld [vmem:[#allocation2 + $0x168] sm:$0xff]
        %v1702 = vld [vmem:[#allocation2 + $0x170] sm:$0xff]
        %v1703 = vld [vmem:[#allocation2 + $0x178] sm:$0xff]
        %v1704 = vpack.c.bf16 %v1596, %v1592
        %v1705 = vpack.c.bf16 %v1597, %v1593
        %v1706 = vpack.c.bf16 %v1598, %v1594
        %v1707 = vpack.c.bf16 %v1599, %v1595
        %v1708 = vpack.c.bf16 %v1604, %v1600
        %v1709 = vpack.c.bf16 %v1605, %v1601
        %v1710 = vpack.c.bf16 %v1606, %v1602
        %v1711 = vpack.c.bf16 %v1607, %v1603
        %v1712 = vpack.c.bf16 %v1612, %v1608
        %v1713 = vpack.c.bf16 %v1613, %v1609
        %v1714 = vpack.c.bf16 %v1614, %v1610
        %v1715 = vpack.c.bf16 %v1615, %v1611
        %v1716 = vpack.c.bf16 %v1620, %v1616
        %v1717 = vpack.c.bf16 %v1621, %v1617
        %v1718 = vpack.c.bf16 %v1622, %v1618
        %v1719 = vpack.c.bf16 %v1623, %v1619
        %v1720 = vpack.c.bf16 %v1628, %v1624
        %v1721 = vpack.c.bf16 %v1629, %v1625
        %v1722 = vpack.c.bf16 %v1630, %v1626
        %v1723 = vpack.c.bf16 %v1631, %v1627
        %v1724 = vpack.c.bf16 %v1636, %v1632
        %v1725 = vpack.c.bf16 %v1637, %v1633
        %v1726 = vpack.c.bf16 %v1638, %v1634
        %v1727 = vpack.c.bf16 %v1639, %v1635
        %v1728 = vpack.c.bf16 %v1644, %v1640
        %v1729 = vpack.c.bf16 %v1645, %v1641
        %v1730 = vpack.c.bf16 %v1646, %v1642
        %v1731 = vpack.c.bf16 %v1647, %v1643
        %v1732 = vpack.c.bf16 %v1652, %v1648
        %v1733 = vpack.c.bf16 %v1653, %v1649
        %v1734 = vpack.c.bf16 %v1654, %v1650
        %v1735 = vpack.c.bf16 %v1655, %v1651
        %v1736 = vld [vmem:[%s369] sm:$0xff]
        %v1737 = vld [vmem:[%s369 + $0x8] sm:$0xf]
        %v1738 = vld [vmem:[%s369 + $0xc] sm:$0xff]
        %v1739 = vld [vmem:[%s369 + $0x14] sm:$0xf]
        %v1740 = vld [vmem:[%s369 + $0x18] sm:$0xff]
        %v1741 = vld [vmem:[%s369 + $0x20] sm:$0xf]
        %v1742 = vld [vmem:[%s369 + $0x24] sm:$0xff]
        %v1743 = vld [vmem:[%s369 + $0x2c] sm:$0xf]
        %v1744 = vld [vmem:[%s369 + $0x30] sm:$0xff]
        %v1745 = vld [vmem:[%s369 + $0x38] sm:$0xf]
        %v1746 = vld [vmem:[%s369 + $0x3c] sm:$0xff]
        %v1747 = vld [vmem:[%s369 + $0x44] sm:$0xf]
        %v1748 = vld [vmem:[%s369 + $0x48] sm:$0xff]
        %v1749 = vld [vmem:[%s369 + $0x50] sm:$0xf]
        %v1750 = vld [vmem:[%s369 + $0x54] sm:$0xff]
        %v1751 = vld [vmem:[%s369 + $0x5c] sm:$0xf]
        %v1752 = vld [vmem:[%s369 + $0x60] sm:$0xff]
        %v1753 = vld [vmem:[%s369 + $0x68] sm:$0xf]
        %v1754 = vld [vmem:[%s369 + $0x6c] sm:$0xff]
        %v1755 = vld [vmem:[%s369 + $0x74] sm:$0xf]
        %v1756 = vld [vmem:[%s369 + $0x78] sm:$0xff]
        %v1757 = vld [vmem:[%s369 + $0x80] sm:$0xf]
        %v1758 = vld [vmem:[%s369 + $0x84] sm:$0xff]
        %v1759 = vld [vmem:[%s369 + $0x8c] sm:$0xf]
        %v1760 = vld [vmem:[%s369 + $0x90] sm:$0xff]
        %v1761 = vld [vmem:[%s369 + $0x98] sm:$0xf]
        %v1762 = vld [vmem:[%s369 + $0x9c] sm:$0xff]
        %v1763 = vld [vmem:[%s369 + $0xa4] sm:$0xf]
        %v1764 = vld [vmem:[%s369 + $0xa8] sm:$0xff]
        %v1765 = vld [vmem:[%s369 + $0xb0] sm:$0xf]
        %v1766 = vld [vmem:[%s369 + $0xb4] sm:$0xff]
        %v1767 = vld [vmem:[%s369 + $0xbc] sm:$0xf]
        %v1768 = vld [vmem:[%s369 + $0xc0] sm:$0xff]
        %v1769 = vld [vmem:[%s369 + $0xc8] sm:$0xf]
        %v1770 = vld [vmem:[%s369 + $0xcc] sm:$0xff]
        %v1771 = vld [vmem:[%s369 + $0xd4] sm:$0xf]
        %v1772 = vld [vmem:[%s369 + $0xd8] sm:$0xff]
        %v1773 = vld [vmem:[%s369 + $0xe0] sm:$0xf]
        %v1774 = vld [vmem:[%s369 + $0xe4] sm:$0xff]
        %v1775 = vld [vmem:[%s369 + $0xec] sm:$0xf]
        %v1776 = vld [vmem:[%s369 + $0xf0] sm:$0xff]
        %v1777 = vld [vmem:[%s369 + $0xf8] sm:$0xf]
        %v1778 = vld [vmem:[%s369 + $0xfc] sm:$0xff]
        %v1779 = vld [vmem:[%s369 + $0x104] sm:$0xf]
        %v1780 = vld [vmem:[%s369 + $0x108] sm:$0xff]
        %v1781 = vld [vmem:[%s369 + $0x110] sm:$0xf]
        %v1782 = vld [vmem:[%s369 + $0x114] sm:$0xff]
        %v1783 = vld [vmem:[%s369 + $0x11c] sm:$0xf]
        %v1784 = vld [vmem:[%s369 + $0x120] sm:$0xff]
        %v1785 = vld [vmem:[%s369 + $0x128] sm:$0xf]
        %v1786 = vld [vmem:[%s369 + $0x12c] sm:$0xff]
        %v1787 = vld [vmem:[%s369 + $0x134] sm:$0xf]
        %v1788 = vld [vmem:[%s369 + $0x138] sm:$0xff]
        %v1789 = vld [vmem:[%s369 + $0x140] sm:$0xf]
        %v1790 = vld [vmem:[%s369 + $0x144] sm:$0xff]
        %v1791 = vld [vmem:[%s369 + $0x14c] sm:$0xf]
        %v1792 = vld [vmem:[%s369 + $0x150] sm:$0xff]
        %v1793 = vld [vmem:[%s369 + $0x158] sm:$0xf]
        %v1794 = vld [vmem:[%s369 + $0x15c] sm:$0xff]
        %v1795 = vld [vmem:[%s369 + $0x164] sm:$0xf]
        %v1796 = vld [vmem:[%s369 + $0x168] sm:$0xff]
        %v1797 = vld [vmem:[%s369 + $0x170] sm:$0xf]
        %v1798 = vld [vmem:[%s369 + $0x174] sm:$0xff]
        %v1799 = vld [vmem:[%s369 + $0x17c] sm:$0xf]
        %v1800 = vld [vmem:[%s369 + $0x180] sm:$0xff]
        %v1801 = vld [vmem:[%s369 + $0x188] sm:$0xf]
        %v1802 = vld [vmem:[%s369 + $0x18c] sm:$0xff]
        %v1803 = vld [vmem:[%s369 + $0x194] sm:$0xf]
        %v1804 = vld [vmem:[%s369 + $0x198] sm:$0xff]
        %v1805 = vld [vmem:[%s369 + $0x1a0] sm:$0xf]
        %v1806 = vld [vmem:[%s369 + $0x1a4] sm:$0xff]
        %v1807 = vld [vmem:[%s369 + $0x1ac] sm:$0xf]
        %v1808 = vld [vmem:[%s369 + $0x1b0] sm:$0xff]
        %v1809 = vld [vmem:[%s369 + $0x1b8] sm:$0xf]
        %v1810 = vld [vmem:[%s369 + $0x1bc] sm:$0xff]
        %v1811 = vld [vmem:[%s369 + $0x1c4] sm:$0xf]
        %v1812 = vld [vmem:[%s369 + $0x1c8] sm:$0xff]
        %v1813 = vld [vmem:[%s369 + $0x1d0] sm:$0xf]
        %v1814 = vld [vmem:[%s369 + $0x1d4] sm:$0xff]
        %v1815 = vld [vmem:[%s369 + $0x1dc] sm:$0xf]
        %v1816 = vld [vmem:[%s369 + $0x1e0] sm:$0xff]
        %v1817 = vld [vmem:[%s369 + $0x1e8] sm:$0xf]
        %v1818 = vld [vmem:[%s369 + $0x1ec] sm:$0xff]
        %v1819 = vld [vmem:[%s369 + $0x1f4] sm:$0xf]
        %v1820 = vld [vmem:[%s369 + $0x1f8] sm:$0xff]
        %v1821 = vld [vmem:[%s369 + $0x200] sm:$0xf]
        %v1822 = vld [vmem:[%s369 + $0x204] sm:$0xff]
        %v1823 = vld [vmem:[%s369 + $0x20c] sm:$0xf]
        %v1824 = vld [vmem:[%s369 + $0x210] sm:$0xff]
        %v1825 = vld [vmem:[%s369 + $0x218] sm:$0xf]
        %v1826 = vld [vmem:[%s369 + $0x21c] sm:$0xff]
        %v1827 = vld [vmem:[%s369 + $0x224] sm:$0xf]
        %v1828 = vld [vmem:[%s369 + $0x228] sm:$0xff]
        %v1829 = vld [vmem:[%s369 + $0x230] sm:$0xf]
        %v1830 = vld [vmem:[%s369 + $0x234] sm:$0xff]
        %v1831 = vld [vmem:[%s369 + $0x23c] sm:$0xf]
        %v1832 = vld [vmem:[%s369 + $0x240] sm:$0xff]
        %v1833 = vld [vmem:[%s369 + $0x248] sm:$0xf]
        %v1834 = vld [vmem:[%s369 + $0x24c] sm:$0xff]
        %v1835 = vld [vmem:[%s369 + $0x254] sm:$0xf]
        %v1836 = vld [vmem:[%s369 + $0x258] sm:$0xff]
        %v1837 = vld [vmem:[%s369 + $0x260] sm:$0xf]
        %v1838 = vld [vmem:[%s369 + $0x264] sm:$0xff]
        %v1839 = vld [vmem:[%s369 + $0x26c] sm:$0xf]
        %v1840 = vld [vmem:[%s369 + $0x270] sm:$0xff]
        %v1841 = vld [vmem:[%s369 + $0x278] sm:$0xf]
        %v1842 = vld [vmem:[%s369 + $0x27c] sm:$0xff]
        %v1843 = vld [vmem:[%s369 + $0x284] sm:$0xf]
        %v1844 = vld [vmem:[%s369 + $0x288] sm:$0xff]
        %v1845 = vld [vmem:[%s369 + $0x290] sm:$0xf]
        %v1846 = vld [vmem:[%s369 + $0x294] sm:$0xff]
        %v1847 = vld [vmem:[%s369 + $0x29c] sm:$0xf]
        %v1848 = vld [vmem:[%s369 + $0x2a0] sm:$0xff]
        %v1849 = vld [vmem:[%s369 + $0x2a8] sm:$0xf]
        %v1850 = vld [vmem:[%s369 + $0x2ac] sm:$0xff]
        %v1851 = vld [vmem:[%s369 + $0x2b4] sm:$0xf]
        %v1852 = vld [vmem:[%s369 + $0x2b8] sm:$0xff]
        %v1853 = vld [vmem:[%s369 + $0x2c0] sm:$0xf]
        %v1854 = vld [vmem:[%s369 + $0x2c4] sm:$0xff]
        %v1855 = vld [vmem:[%s369 + $0x2cc] sm:$0xf]
        %v1856 = vld [vmem:[%s369 + $0x2d0] sm:$0xff]
        %v1857 = vld [vmem:[%s369 + $0x2d8] sm:$0xf]
        %v1858 = vld [vmem:[%s369 + $0x2dc] sm:$0xff]
        %v1859 = vld [vmem:[%s369 + $0x2e4] sm:$0xf]
        %v1860 = vld [vmem:[%s369 + $0x2e8] sm:$0xff]
        %v1861 = vld [vmem:[%s369 + $0x2f0] sm:$0xf]
        %v1862 = vld [vmem:[%s369 + $0x2f4] sm:$0xff]
        %v1863 = vld [vmem:[%s369 + $0x2fc] sm:$0xf]
        %v1992 = vunpack.c.l.b16 %v1736
        %v1993 = vunpack.c.h.b16 %v1736
        %v1994 = vunpack.c.l.b16 %v1737
        %v1995 = vunpack.c.l.b16 %v1738
        %v1996 = vunpack.c.h.b16 %v1738
        %v1997 = vunpack.c.l.b16 %v1739
        %v1998 = vunpack.c.l.b16 %v1740
        %v1999 = vunpack.c.h.b16 %v1740
        %v2000 = vunpack.c.l.b16 %v1741
        %v2001 = vunpack.c.l.b16 %v1742
        %v2002 = vunpack.c.h.b16 %v1742
        %v2003 = vunpack.c.l.b16 %v1743
        %v2004 = vunpack.c.l.b16 %v1744
        %v2005 = vunpack.c.h.b16 %v1744
        %v2006 = vunpack.c.l.b16 %v1745
        %v2007 = vunpack.c.l.b16 %v1746
        %v2008 = vunpack.c.h.b16 %v1746
        %v2009 = vunpack.c.l.b16 %v1747
        %v2010 = vunpack.c.l.b16 %v1748
        %v2011 = vunpack.c.h.b16 %v1748
        %v2012 = vunpack.c.l.b16 %v1749
        %v2013 = vunpack.c.l.b16 %v1750
        %v2014 = vunpack.c.h.b16 %v1750
        %v2015 = vunpack.c.l.b16 %v1751
        %v2016 = vunpack.c.l.b16 %v1752
        %v2017 = vunpack.c.h.b16 %v1752
        %v2018 = vunpack.c.l.b16 %v1753
        %v2019 = vunpack.c.l.b16 %v1754
        %v2020 = vunpack.c.h.b16 %v1754
        %v2021 = vunpack.c.l.b16 %v1755
        %v2022 = vunpack.c.l.b16 %v1756
        %v2023 = vunpack.c.h.b16 %v1756
        %v2024 = vunpack.c.l.b16 %v1757
        %v2025 = vunpack.c.l.b16 %v1758
        %v2026 = vunpack.c.h.b16 %v1758
        %v2027 = vunpack.c.l.b16 %v1759
        %v2028 = vunpack.c.l.b16 %v1760
        %v2029 = vunpack.c.h.b16 %v1760
        %v2030 = vunpack.c.l.b16 %v1761
        %v2031 = vunpack.c.l.b16 %v1762
        %v2032 = vunpack.c.h.b16 %v1762
        %v2033 = vunpack.c.l.b16 %v1763
        %v2034 = vunpack.c.l.b16 %v1764
        %v2035 = vunpack.c.h.b16 %v1764
        %v2036 = vunpack.c.l.b16 %v1765
        %v2037 = vunpack.c.l.b16 %v1766
        %v2038 = vunpack.c.h.b16 %v1766
        %v2039 = vunpack.c.l.b16 %v1767
        %v2040 = vunpack.c.l.b16 %v1768
        %v2041 = vunpack.c.h.b16 %v1768
        %v2042 = vunpack.c.l.b16 %v1769
        %v2043 = vunpack.c.l.b16 %v1770
        %v2044 = vunpack.c.h.b16 %v1770
        %v2045 = vunpack.c.l.b16 %v1771
        %v2046 = vunpack.c.l.b16 %v1772
        %v2047 = vunpack.c.h.b16 %v1772
        %v2048 = vunpack.c.l.b16 %v1773
        %v2049 = vunpack.c.l.b16 %v1774
        %v2050 = vunpack.c.h.b16 %v1774
        %v2051 = vunpack.c.l.b16 %v1775
        %v2052 = vunpack.c.l.b16 %v1776
        %v2053 = vunpack.c.h.b16 %v1776
        %v2054 = vunpack.c.l.b16 %v1777
        %v2055 = vunpack.c.l.b16 %v1778
        %v2056 = vunpack.c.h.b16 %v1778
        %v2057 = vunpack.c.l.b16 %v1779
        %v2058 = vunpack.c.l.b16 %v1780
        %v2059 = vunpack.c.h.b16 %v1780
        %v2060 = vunpack.c.l.b16 %v1781
        %v2061 = vunpack.c.l.b16 %v1782
        %v2062 = vunpack.c.h.b16 %v1782
        %v2063 = vunpack.c.l.b16 %v1783
        %v2064 = vunpack.c.l.b16 %v1784
        %v2065 = vunpack.c.h.b16 %v1784
        %v2066 = vunpack.c.l.b16 %v1785
        %v2067 = vunpack.c.l.b16 %v1786
        %v2068 = vunpack.c.h.b16 %v1786
        %v2069 = vunpack.c.l.b16 %v1787
        %v2070 = vunpack.c.l.b16 %v1788
        %v2071 = vunpack.c.h.b16 %v1788
        %v2072 = vunpack.c.l.b16 %v1789
        %v2073 = vunpack.c.l.b16 %v1790
        %v2074 = vunpack.c.h.b16 %v1790
        %v2075 = vunpack.c.l.b16 %v1791
        %v2076 = vunpack.c.l.b16 %v1792
        %v2077 = vunpack.c.h.b16 %v1792
        %v2078 = vunpack.c.l.b16 %v1793
        %v2079 = vunpack.c.l.b16 %v1794
        %v2080 = vunpack.c.h.b16 %v1794
        %v2081 = vunpack.c.l.b16 %v1795
        %v2082 = vunpack.c.l.b16 %v1796
        %v2083 = vunpack.c.h.b16 %v1796
        %v2084 = vunpack.c.l.b16 %v1797
        %v2085 = vunpack.c.l.b16 %v1798
        %v2086 = vunpack.c.h.b16 %v1798
        %v2087 = vunpack.c.l.b16 %v1799
        %v2088 = vunpack.c.l.b16 %v1800
        %v2089 = vunpack.c.h.b16 %v1800
        %v2090 = vunpack.c.l.b16 %v1801
        %v2091 = vunpack.c.l.b16 %v1802
        %v2092 = vunpack.c.h.b16 %v1802
        %v2093 = vunpack.c.l.b16 %v1803
        %v2094 = vunpack.c.l.b16 %v1804
        %v2095 = vunpack.c.h.b16 %v1804
        %v2096 = vunpack.c.l.b16 %v1805
        %v2097 = vunpack.c.l.b16 %v1806
        %v2098 = vunpack.c.h.b16 %v1806
        %v2099 = vunpack.c.l.b16 %v1807
        %v2100 = vunpack.c.l.b16 %v1808
        %v2101 = vunpack.c.h.b16 %v1808
        %v2102 = vunpack.c.l.b16 %v1809
        %v2103 = vunpack.c.l.b16 %v1810
        %v2104 = vunpack.c.h.b16 %v1810
        %v2105 = vunpack.c.l.b16 %v1811
        %v2106 = vunpack.c.l.b16 %v1812
        %v2107 = vunpack.c.h.b16 %v1812
        %v2108 = vunpack.c.l.b16 %v1813
        %v2109 = vunpack.c.l.b16 %v1814
        %v2110 = vunpack.c.h.b16 %v1814
        %v2111 = vunpack.c.l.b16 %v1815
        %v2112 = vunpack.c.l.b16 %v1816
        %v2113 = vunpack.c.h.b16 %v1816
        %v2114 = vunpack.c.l.b16 %v1817
        %v2115 = vunpack.c.l.b16 %v1818
        %v2116 = vunpack.c.h.b16 %v1818
        %v2117 = vunpack.c.l.b16 %v1819
        %v2118 = vunpack.c.l.b16 %v1820
        %v2119 = vunpack.c.h.b16 %v1820
        %v2120 = vunpack.c.l.b16 %v1821
        %v2121 = vunpack.c.l.b16 %v1822
        %v2122 = vunpack.c.h.b16 %v1822
        %v2123 = vunpack.c.l.b16 %v1823
        %v2124 = vunpack.c.l.b16 %v1824
        %v2125 = vunpack.c.h.b16 %v1824
        %v2126 = vunpack.c.l.b16 %v1825
        %v2127 = vunpack.c.l.b16 %v1826
        %v2128 = vunpack.c.h.b16 %v1826
        %v2129 = vunpack.c.l.b16 %v1827
        %v2130 = vunpack.c.l.b16 %v1828
        %v2131 = vunpack.c.h.b16 %v1828
        %v2132 = vunpack.c.l.b16 %v1829
        %v2133 = vunpack.c.l.b16 %v1830
        %v2134 = vunpack.c.h.b16 %v1830
        %v2135 = vunpack.c.l.b16 %v1831
        %v2136 = vunpack.c.l.b16 %v1832
        %v2137 = vunpack.c.h.b16 %v1832
        %v2138 = vunpack.c.l.b16 %v1833
        %v2139 = vunpack.c.l.b16 %v1834
        %v2140 = vunpack.c.h.b16 %v1834
        %v2141 = vunpack.c.l.b16 %v1835
        %v2142 = vunpack.c.l.b16 %v1836
        %v2143 = vunpack.c.h.b16 %v1836
        %v2144 = vunpack.c.l.b16 %v1837
        %v2145 = vunpack.c.l.b16 %v1838
        %v2146 = vunpack.c.h.b16 %v1838
        %v2147 = vunpack.c.l.b16 %v1839
        %v2148 = vunpack.c.l.b16 %v1840
        %v2149 = vunpack.c.h.b16 %v1840
        %v2150 = vunpack.c.l.b16 %v1841
        %v2151 = vunpack.c.l.b16 %v1842
        %v2152 = vunpack.c.h.b16 %v1842
        %v2153 = vunpack.c.l.b16 %v1843
        %v2154 = vunpack.c.l.b16 %v1844
        %v2155 = vunpack.c.h.b16 %v1844
        %v2156 = vunpack.c.l.b16 %v1845
        %v2157 = vunpack.c.l.b16 %v1846
        %v2158 = vunpack.c.h.b16 %v1846
        %v2159 = vunpack.c.l.b16 %v1847
        %v2160 = vunpack.c.l.b16 %v1848
        %v2161 = vunpack.c.h.b16 %v1848
        %v2162 = vunpack.c.l.b16 %v1849
        %v2163 = vunpack.c.l.b16 %v1850
        %v2164 = vunpack.c.h.b16 %v1850
        %v2165 = vunpack.c.l.b16 %v1851
        %v2166 = vunpack.c.l.b16 %v1852
        %v2167 = vunpack.c.h.b16 %v1852
        %v2168 = vunpack.c.l.b16 %v1853
        %v2169 = vunpack.c.l.b16 %v1854
        %v2170 = vunpack.c.h.b16 %v1854
        %v2171 = vunpack.c.l.b16 %v1855
        %v2172 = vunpack.c.l.b16 %v1856
        %v2173 = vunpack.c.h.b16 %v1856
        %v2174 = vunpack.c.l.b16 %v1857
        %v2175 = vunpack.c.l.b16 %v1858
        %v2176 = vunpack.c.h.b16 %v1858
        %v2177 = vunpack.c.l.b16 %v1859
        %v2178 = vunpack.c.l.b16 %v1860
        %v2179 = vunpack.c.h.b16 %v1860
        %v2180 = vunpack.c.l.b16 %v1861
        %v2181 = vunpack.c.l.b16 %v1862
        %v2182 = vunpack.c.h.b16 %v1862
        %v2183 = vunpack.c.l.b16 %v1863
        %v2184 = vpack.c.b16 %v1995, %v1992
        %v2185 = vpack.c.b16 %v1996, %v1993
        %v2186 = vpack.c.b16 %v1997, %v1994
        %v2187 = vpack.c.b16 %v2001, %v1998
        %v2188 = vpack.c.b16 %v2002, %v1999
        %v2189 = vpack.c.b16 %v2003, %v2000
        %v2190 = vpack.c.b16 %v2007, %v2004
        %v2191 = vpack.c.b16 %v2008, %v2005
        %v2192 = vpack.c.b16 %v2009, %v2006
        %v2193 = vpack.c.b16 %v2013, %v2010
        %v2194 = vpack.c.b16 %v2014, %v2011
        %v2195 = vpack.c.b16 %v2015, %v2012
        %v2196 = vpack.c.b16 %v2019, %v2016
        %v2197 = vpack.c.b16 %v2020, %v2017
        %v2198 = vpack.c.b16 %v2021, %v2018
        %v2199 = vpack.c.b16 %v2025, %v2022
        %v2200 = vpack.c.b16 %v2026, %v2023
        %v2201 = vpack.c.b16 %v2027, %v2024
        %v2202 = vpack.c.b16 %v2031, %v2028
        %v2203 = vpack.c.b16 %v2032, %v2029
        %v2204 = vpack.c.b16 %v2033, %v2030
        %v2205 = vpack.c.b16 %v2037, %v2034
        %v2206 = vpack.c.b16 %v2038, %v2035
        %v2207 = vpack.c.b16 %v2039, %v2036
        %v2208 = vpack.c.b16 %v2043, %v2040
        %v2209 = vpack.c.b16 %v2044, %v2041
        %v2210 = vpack.c.b16 %v2045, %v2042
        %v2211 = vpack.c.b16 %v2049, %v2046
        %v2212 = vpack.c.b16 %v2050, %v2047
        %v2213 = vpack.c.b16 %v2051, %v2048
        %v2214 = vpack.c.b16 %v2055, %v2052
        %v2215 = vpack.c.b16 %v2056, %v2053
        %v2216 = vpack.c.b16 %v2057, %v2054
        %v2217 = vpack.c.b16 %v2061, %v2058
        %v2218 = vpack.c.b16 %v2062, %v2059
        %v2219 = vpack.c.b16 %v2063, %v2060
        %v2220 = vpack.c.b16 %v2067, %v2064
        %v2221 = vpack.c.b16 %v2068, %v2065
        %v2222 = vpack.c.b16 %v2069, %v2066
        %v2223 = vpack.c.b16 %v2073, %v2070
        %v2224 = vpack.c.b16 %v2074, %v2071
        %v2225 = vpack.c.b16 %v2075, %v2072
        %v2226 = vpack.c.b16 %v2079, %v2076
        %v2227 = vpack.c.b16 %v2080, %v2077
        %v2228 = vpack.c.b16 %v2081, %v2078
        %v2229 = vpack.c.b16 %v2085, %v2082
        %v2230 = vpack.c.b16 %v2086, %v2083
        %v2231 = vpack.c.b16 %v2087, %v2084
        %v2232 = vpack.c.b16 %v2091, %v2088
        %v2233 = vpack.c.b16 %v2092, %v2089
        %v2234 = vpack.c.b16 %v2093, %v2090
        %v2235 = vpack.c.b16 %v2097, %v2094
        %v2236 = vpack.c.b16 %v2098, %v2095
        %v2237 = vpack.c.b16 %v2099, %v2096
        %v2238 = vpack.c.b16 %v2103, %v2100
        %v2239 = vpack.c.b16 %v2104, %v2101
        %v2240 = vpack.c.b16 %v2105, %v2102
        %v2241 = vpack.c.b16 %v2109, %v2106
        %v2242 = vpack.c.b16 %v2110, %v2107
        %v2243 = vpack.c.b16 %v2111, %v2108
        %v2244 = vpack.c.b16 %v2115, %v2112
        %v2245 = vpack.c.b16 %v2116, %v2113
        %v2246 = vpack.c.b16 %v2117, %v2114
        %v2247 = vpack.c.b16 %v2121, %v2118
        %v2248 = vpack.c.b16 %v2122, %v2119
        %v2249 = vpack.c.b16 %v2123, %v2120
        %v2250 = vpack.c.b16 %v2127, %v2124
        %v2251 = vpack.c.b16 %v2128, %v2125
        %v2252 = vpack.c.b16 %v2129, %v2126
        %v2253 = vpack.c.b16 %v2133, %v2130
        %v2254 = vpack.c.b16 %v2134, %v2131
        %v2255 = vpack.c.b16 %v2135, %v2132
        %v2256 = vpack.c.b16 %v2139, %v2136
        %v2257 = vpack.c.b16 %v2140, %v2137
        %v2258 = vpack.c.b16 %v2141, %v2138
        %v2259 = vpack.c.b16 %v2145, %v2142
        %v2260 = vpack.c.b16 %v2146, %v2143
        %v2261 = vpack.c.b16 %v2147, %v2144
        %v2262 = vpack.c.b16 %v2151, %v2148
        %v2263 = vpack.c.b16 %v2152, %v2149
        %v2264 = vpack.c.b16 %v2153, %v2150
        %v2265 = vpack.c.b16 %v2157, %v2154
        %v2266 = vpack.c.b16 %v2158, %v2155
        %v2267 = vpack.c.b16 %v2159, %v2156
        %v2268 = vpack.c.b16 %v2163, %v2160
        %v2269 = vpack.c.b16 %v2164, %v2161
        %v2270 = vpack.c.b16 %v2165, %v2162
        %v2271 = vpack.c.b16 %v2169, %v2166
        %v2272 = vpack.c.b16 %v2170, %v2167
        %v2273 = vpack.c.b16 %v2171, %v2168
        %v2274 = vpack.c.b16 %v2175, %v2172
        %v2275 = vpack.c.b16 %v2176, %v2173
        %v2276 = vpack.c.b16 %v2177, %v2174
        %v2277 = vpack.c.b16 %v2181, %v2178
        %v2278 = vpack.c.b16 %v2182, %v2179
        %v2279 = vpack.c.b16 %v2183, %v2180
        %2376 = vmatprep.subr.bf16.mxu0 %v2206
        %2377 = vmatpush1.bf16.msra.mxu0 %v2205
        %2378 = vmatprep.subr.bf16.mxu0 %v2203
        %2379 = vmatpush1.bf16.msra.mxu0 %v2202
        %2380 = vmatprep.subr.bf16.mxu0 %v2200
        %2381 = vmatpush1.bf16.msra.mxu0 %v2199
        %2382 = vmatprep.subr.bf16.mxu0 %v2197
        %2383 = vmatpush1.bf16.msra.mxu0 %v2196
        %2384 = vmatprep.subr.bf16.mxu0 %v2194
        %2385 = vmatpush1.bf16.msra.mxu0 %v2193
        %2386 = vmatprep.subr.bf16.mxu0 %v2191
        %2387 = vmatpush1.bf16.msra.mxu0 %v2190
        %2388 = vmatprep.subr.bf16.mxu0 %v2188
        %2389 = vmatpush1.bf16.msra.mxu0 %v2187
        %2390 = vmatprep.subr.bf16.mxu0 %v2185
        %2391 = vmatpush1.bf16.msra.mxu0 %v2184
        %2392 = vmatprep.subr.bf16.mxu0 %v2230
        %2393 = vmatpush2.bf16.msra.mxu0 %v2229
        %2394 = vmatprep.subr.bf16.mxu0 %v2227
        %2395 = vmatpush2.bf16.msra.mxu0 %v2226
        %2396 = vmatprep.subr.bf16.mxu0 %v2224
        %2397 = vmatpush2.bf16.msra.mxu0 %v2223
        %2398 = vmatprep.subr.bf16.mxu0 %v2221
        %2399 = vmatpush2.bf16.msra.mxu0 %v2220
        %2400 = vmatprep.subr.bf16.mxu0 %v2218
        %2401 = vmatpush2.bf16.msra.mxu0 %v2217
        %2402 = vmatprep.subr.bf16.mxu0 %v2215
        %2403 = vmatpush2.bf16.msra.mxu0 %v2214
        %2404 = vmatprep.subr.bf16.mxu0 %v2212
        %2405 = vmatpush2.bf16.msra.mxu0 %v2211
        %2406 = vmatprep.subr.bf16.mxu0 %v2209
        %2407 = vmatpush2.bf16.msra.mxu0 %v2208
        %2408 = vmatprep.mubr.bf16.mxu0 %v1705
        %2409 = vmatmul.mubr.bf16.gmra.mxu0 %v1704
        %v2410 = vpop.f32.mrf.mxu0
        %v2411 = vadd.f32 0.0, %v2410
        %v2412 = vpop.f32.mrf.mxu0
        %v2413 = vadd.f32 0.0, %v2412
        %v2414 = vpop.f32.mrf.mxu0
        %v2415 = vadd.f32 0.0, %v2414
        %v2416 = vpop.f32.mrf.mxu0
        %v2417 = vadd.f32 0.0, %v2416
        %2418 = vmatprep.mubr.bf16.mxu0 %v1709
        %2419 = vmatmul.mubr.bf16.gmra.mxu0 %v1708
        %v2420 = vpop.f32.mrf.mxu0
        %v2421 = vadd.f32 0.0, %v2420
        %v2422 = vpop.f32.mrf.mxu0
        %v2423 = vadd.f32 0.0, %v2422
        %v2424 = vpop.f32.mrf.mxu0
        %v2425 = vadd.f32 0.0, %v2424
        %v2426 = vpop.f32.mrf.mxu0
        %v2427 = vadd.f32 0.0, %v2426
        %2428 = vmatprep.mubr.bf16.mxu0 %v1713
        %2429 = vmatmul.mubr.bf16.gmra.mxu0 %v1712
        %v2430 = vpop.f32.mrf.mxu0
        %v2431 = vadd.f32 0.0, %v2430
        %v2432 = vpop.f32.mrf.mxu0
        %v2433 = vadd.f32 0.0, %v2432
        %v2434 = vpop.f32.mrf.mxu0
        %v2435 = vadd.f32 0.0, %v2434
        %v2436 = vpop.f32.mrf.mxu0
        %v2437 = vadd.f32 0.0, %v2436
        %2438 = vmatprep.mubr.bf16.mxu0 %v1717
        %2439 = vmatmul.mubr.bf16.gmra.mxu0 %v1716
        %v2440 = vpop.f32.mrf.mxu0
        %v2441 = vadd.f32 0.0, %v2440
        %v2442 = vpop.f32.mrf.mxu0
        %v2443 = vadd.f32 0.0, %v2442
        %v2444 = vpop.f32.mrf.mxu0
        %v2445 = vadd.f32 0.0, %v2444
        %v2446 = vpop.f32.mrf.mxu0
        %v2447 = vadd.f32 0.0, %v2446
        %2448 = vmatprep.mubr.bf16.mxu0 %v1721
        %2449 = vmatmul.mubr.bf16.gmra.mxu0 %v1720
        %v2450 = vpop.f32.mrf.mxu0
        %v2451 = vadd.f32 0.0, %v2450
        %v2452 = vpop.f32.mrf.mxu0
        %v2453 = vadd.f32 0.0, %v2452
        %v2454 = vpop.f32.mrf.mxu0
        %v2455 = vadd.f32 0.0, %v2454
        %v2456 = vpop.f32.mrf.mxu0
        %v2457 = vadd.f32 0.0, %v2456
        %2458 = vmatprep.mubr.bf16.mxu0 %v1725
        %2459 = vmatmul.mubr.bf16.gmra.mxu0 %v1724
        %v2460 = vpop.f32.mrf.mxu0
        %v2461 = vadd.f32 0.0, %v2460
        %v2462 = vpop.f32.mrf.mxu0
        %v2463 = vadd.f32 0.0, %v2462
        %v2464 = vpop.f32.mrf.mxu0
        %v2465 = vadd.f32 0.0, %v2464
        %v2466 = vpop.f32.mrf.mxu0
        %v2467 = vadd.f32 0.0, %v2466
        %2468 = vmatprep.mubr.bf16.mxu0 %v1729
        %2469 = vmatmul.mubr.bf16.gmra.mxu0 %v1728
        %v2470 = vpop.f32.mrf.mxu0
        %v2471 = vadd.f32 0.0, %v2470
        %v2472 = vpop.f32.mrf.mxu0
        %v2473 = vadd.f32 0.0, %v2472
        %v2474 = vpop.f32.mrf.mxu0
        %v2475 = vadd.f32 0.0, %v2474
        %v2476 = vpop.f32.mrf.mxu0
        %v2477 = vadd.f32 0.0, %v2476
        %2478 = vmatprep.mubr.bf16.mxu0 %v1733
        %2479 = vmatmul.mubr.bf16.gmra.mxu0 %v1732
        %v2480 = vpop.f32.mrf.mxu0
        %v2481 = vadd.f32 0.0, %v2480
        %v2482 = vpop.f32.mrf.mxu0
        %v2483 = vadd.f32 0.0, %v2482
        %v2484 = vpop.f32.mrf.mxu0
        %v2485 = vadd.f32 0.0, %v2484
        %v2486 = vpop.f32.mrf.mxu0
        %v2487 = vadd.f32 0.0, %v2486
        %2488 = vdwg.mxu0
        %2489 = vmatprep.subr.bf16.mxu0 %v2254
        %2490 = vmatpush1.bf16.msra.mxu0 %v2253
        %2491 = vmatprep.subr.bf16.mxu0 %v2251
        %2492 = vmatpush1.bf16.msra.mxu0 %v2250
        %2493 = vmatprep.subr.bf16.mxu0 %v2248
        %2494 = vmatpush1.bf16.msra.mxu0 %v2247
        %2495 = vmatprep.subr.bf16.mxu0 %v2245
        %2496 = vmatpush1.bf16.msra.mxu0 %v2244
        %2497 = vmatprep.subr.bf16.mxu0 %v2242
        %2498 = vmatpush1.bf16.msra.mxu0 %v2241
        %2499 = vmatprep.subr.bf16.mxu0 %v2239
        %2500 = vmatpush1.bf16.msra.mxu0 %v2238
        %2501 = vmatprep.subr.bf16.mxu0 %v2236
        %2502 = vmatpush1.bf16.msra.mxu0 %v2235
        %2503 = vmatprep.subr.bf16.mxu0 %v2233
        %2504 = vmatpush1.bf16.msra.mxu0 %v2232
        %2505 = vmatprep.subr.bf16.mxu0 %v2278
        %2506 = vmatpush2.bf16.msra.mxu0 %v2277
        %2507 = vmatprep.subr.bf16.mxu0 %v2275
        %2508 = vmatpush2.bf16.msra.mxu0 %v2274
        %2509 = vmatprep.subr.bf16.mxu0 %v2272
        %2510 = vmatpush2.bf16.msra.mxu0 %v2271
        %2511 = vmatprep.subr.bf16.mxu0 %v2269
        %2512 = vmatpush2.bf16.msra.mxu0 %v2268
        %2513 = vmatprep.subr.bf16.mxu0 %v2266
        %2514 = vmatpush2.bf16.msra.mxu0 %v2265
        %2515 = vmatprep.subr.bf16.mxu0 %v2263
        %2516 = vmatpush2.bf16.msra.mxu0 %v2262
        %2517 = vmatprep.subr.bf16.mxu0 %v2260
        %2518 = vmatpush2.bf16.msra.mxu0 %v2259
        %2519 = vmatprep.subr.bf16.mxu0 %v2257
        %2520 = vmatpush2.bf16.msra.mxu0 %v2256
        %2521 = vmatprep.mubr.bf16.mxu0 %v1707
        %2522 = vmatmul.mubr.bf16.gmra.mxu0 %v1706
        %v2523 = vpop.f32.mrf.mxu0
        %v2524 = vadd.f32 %v2411, %v2523
        %v2525 = vpop.f32.mrf.mxu0
        %v2526 = vadd.f32 %v2413, %v2525
        %v2527 = vpop.f32.mrf.mxu0
        %v2528 = vadd.f32 %v2415, %v2527
        %v2529 = vpop.f32.mrf.mxu0
        %v2530 = vadd.f32 %v2417, %v2529
        %2531 = vmatprep.mubr.bf16.mxu0 %v1711
        %2532 = vmatmul.mubr.bf16.gmra.mxu0 %v1710
        %v2533 = vpop.f32.mrf.mxu0
        %v2534 = vadd.f32 %v2421, %v2533
        %v2535 = vpop.f32.mrf.mxu0
        %v2536 = vadd.f32 %v2423, %v2535
        %v2537 = vpop.f32.mrf.mxu0
        %v2538 = vadd.f32 %v2425, %v2537
        %v2539 = vpop.f32.mrf.mxu0
        %v2540 = vadd.f32 %v2427, %v2539
        %2541 = vmatprep.mubr.bf16.mxu0 %v1715
        %2542 = vmatmul.mubr.bf16.gmra.mxu0 %v1714
        %v2543 = vpop.f32.mrf.mxu0
        %v2544 = vadd.f32 %v2431, %v2543
        %v2545 = vpop.f32.mrf.mxu0
        %v2546 = vadd.f32 %v2433, %v2545
        %v2547 = vpop.f32.mrf.mxu0
        %v2548 = vadd.f32 %v2435, %v2547
        %v2549 = vpop.f32.mrf.mxu0
        %v2550 = vadd.f32 %v2437, %v2549
        %2551 = vmatprep.mubr.bf16.mxu0 %v1719
        %2552 = vmatmul.mubr.bf16.gmra.mxu0 %v1718
        %v2553 = vpop.f32.mrf.mxu0
        %v2554 = vadd.f32 %v2441, %v2553
        %v2555 = vpop.f32.mrf.mxu0
        %v2556 = vadd.f32 %v2443, %v2555
        %v2557 = vpop.f32.mrf.mxu0
        %v2558 = vadd.f32 %v2445, %v2557
        %v2559 = vpop.f32.mrf.mxu0
        %v2560 = vadd.f32 %v2447, %v2559
        %2561 = vmatprep.mubr.bf16.mxu0 %v1723
        %2562 = vmatmul.mubr.bf16.gmra.mxu0 %v1722
        %v2563 = vpop.f32.mrf.mxu0
        %v2564 = vadd.f32 %v2451, %v2563
        %v2565 = vpop.f32.mrf.mxu0
        %v2566 = vadd.f32 %v2453, %v2565
        %v2567 = vpop.f32.mrf.mxu0
        %v2568 = vadd.f32 %v2455, %v2567
        %v2569 = vpop.f32.mrf.mxu0
        %v2570 = vadd.f32 %v2457, %v2569
        %2571 = vmatprep.mubr.bf16.mxu0 %v1727
        %2572 = vmatmul.mubr.bf16.gmra.mxu0 %v1726
        %v2573 = vpop.f32.mrf.mxu0
        %v2574 = vadd.f32 %v2461, %v2573
        %v2575 = vpop.f32.mrf.mxu0
        %v2576 = vadd.f32 %v2463, %v2575
        %v2577 = vpop.f32.mrf.mxu0
        %v2578 = vadd.f32 %v2465, %v2577
        %v2579 = vpop.f32.mrf.mxu0
        %v2580 = vadd.f32 %v2467, %v2579
        %2581 = vmatprep.mubr.bf16.mxu0 %v1731
        %2582 = vmatmul.mubr.bf16.gmra.mxu0 %v1730
        %v2583 = vpop.f32.mrf.mxu0
        %v2584 = vadd.f32 %v2471, %v2583
        %v2585 = vpop.f32.mrf.mxu0
        %v2586 = vadd.f32 %v2473, %v2585
        %v2587 = vpop.f32.mrf.mxu0
        %v2588 = vadd.f32 %v2475, %v2587
        %v2589 = vpop.f32.mrf.mxu0
        %v2590 = vadd.f32 %v2477, %v2589
        %2591 = vmatprep.mubr.bf16.mxu0 %v1735
        %2592 = vmatmul.mubr.bf16.gmra.mxu0 %v1734
        %v2593 = vpop.f32.mrf.mxu0
        %v2594 = vadd.f32 %v2481, %v2593
        %v2595 = vpop.f32.mrf.mxu0
        %v2596 = vadd.f32 %v2483, %v2595
        %v2597 = vpop.f32.mrf.mxu0
        %v2598 = vadd.f32 %v2485, %v2597
        %v2599 = vpop.f32.mrf.mxu0
        %v2600 = vadd.f32 %v2487, %v2599
        %2601 = vdwg.mxu0
        %2602 = vmatprep.subr.bf16.mxu0 0
        %2603 = vmatpush1.bf16.msra.mxu0 %v2207
        %2604 = vmatprep.subr.bf16.mxu0 0
        %2605 = vmatpush1.bf16.msra.mxu0 %v2204
        %2606 = vmatprep.subr.bf16.mxu0 0
        %2607 = vmatpush1.bf16.msra.mxu0 %v2201
        %2608 = vmatprep.subr.bf16.mxu0 0
        %2609 = vmatpush1.bf16.msra.mxu0 %v2198
        %2610 = vmatprep.subr.bf16.mxu0 0
        %2611 = vmatpush1.bf16.msra.mxu0 %v2195
        %2612 = vmatprep.subr.bf16.mxu0 0
        %2613 = vmatpush1.bf16.msra.mxu0 %v2192
        %2614 = vmatprep.subr.bf16.mxu0 0
        %2615 = vmatpush1.bf16.msra.mxu0 %v2189
        %2616 = vmatprep.subr.bf16.mxu0 0
        %2617 = vmatpush1.bf16.msra.mxu0 %v2186
        %2618 = vmatprep.subr.bf16.mxu0 0
        %2619 = vmatpush2.bf16.msra.mxu0 %v2231
        %2620 = vmatprep.subr.bf16.mxu0 0
        %2621 = vmatpush2.bf16.msra.mxu0 %v2228
        %2622 = vmatprep.subr.bf16.mxu0 0
        %2623 = vmatpush2.bf16.msra.mxu0 %v2225
        %2624 = vmatprep.subr.bf16.mxu0 0
        %2625 = vmatpush2.bf16.msra.mxu0 %v2222
        %2626 = vmatprep.subr.bf16.mxu0 0
        %2627 = vmatpush2.bf16.msra.mxu0 %v2219
        %2628 = vmatprep.subr.bf16.mxu0 0
        %2629 = vmatpush2.bf16.msra.mxu0 %v2216
        %2630 = vmatprep.subr.bf16.mxu0 0
        %2631 = vmatpush2.bf16.msra.mxu0 %v2213
        %2632 = vmatprep.subr.bf16.mxu0 0
        %2633 = vmatpush2.bf16.msra.mxu0 %v2210
        %2634 = vmatprep.mubr.bf16.mxu0 %v1705
        %2635 = vmatmul.mubr.bf16.gmra.mxu0 %v1704
        %v2636 = vpop.f32.mrf.mxu0
        %v2637 = vadd.f32 0.0, %v2636
        %v2638 = vpop.f32.mrf.mxu0
        %v2639 = vpop.f32.mrf.mxu0
        %v2640 = vadd.f32 0.0, %v2639
        %v2641 = vpop.f32.mrf.mxu0
        %2642 = vmatprep.mubr.bf16.mxu0 %v1709
        %2643 = vmatmul.mubr.bf16.gmra.mxu0 %v1708
        %v2644 = vpop.f32.mrf.mxu0
        %v2645 = vadd.f32 0.0, %v2644
        %v2646 = vpop.f32.mrf.mxu0
        %v2647 = vpop.f32.mrf.mxu0
        %v2648 = vadd.f32 0.0, %v2647
        %v2649 = vpop.f32.mrf.mxu0
        %2650 = vmatprep.mubr.bf16.mxu0 %v1713
        %2651 = vmatmul.mubr.bf16.gmra.mxu0 %v1712
        %v2652 = vpop.f32.mrf.mxu0
        %v2653 = vadd.f32 0.0, %v2652
        %v2654 = vpop.f32.mrf.mxu0
        %v2655 = vpop.f32.mrf.mxu0
        %v2656 = vadd.f32 0.0, %v2655
        %v2657 = vpop.f32.mrf.mxu0
        %2658 = vmatprep.mubr.bf16.mxu0 %v1717
        %2659 = vmatmul.mubr.bf16.gmra.mxu0 %v1716
        %v2660 = vpop.f32.mrf.mxu0
        %v2661 = vadd.f32 0.0, %v2660
        %v2662 = vpop.f32.mrf.mxu0
        %v2663 = vpop.f32.mrf.mxu0
        %v2664 = vadd.f32 0.0, %v2663
        %v2665 = vpop.f32.mrf.mxu0
        %2666 = vmatprep.mubr.bf16.mxu0 %v1721
        %2667 = vmatmul.mubr.bf16.gmra.mxu0 %v1720
        %v2668 = vpop.f32.mrf.mxu0
        %v2669 = vadd.f32 0.0, %v2668
        %v2670 = vpop.f32.mrf.mxu0
        %v2671 = vpop.f32.mrf.mxu0
        %v2672 = vadd.f32 0.0, %v2671
        %v2673 = vpop.f32.mrf.mxu0
        %2674 = vmatprep.mubr.bf16.mxu0 %v1725
        %2675 = vmatmul.mubr.bf16.gmra.mxu0 %v1724
        %v2676 = vpop.f32.mrf.mxu0
        %v2677 = vadd.f32 0.0, %v2676
        %v2678 = vpop.f32.mrf.mxu0
        %v2679 = vpop.f32.mrf.mxu0
        %v2680 = vadd.f32 0.0, %v2679
        %v2681 = vpop.f32.mrf.mxu0
        %2682 = vmatprep.mubr.bf16.mxu0 %v1729
        %2683 = vmatmul.mubr.bf16.gmra.mxu0 %v1728
        %v2684 = vpop.f32.mrf.mxu0
        %v2685 = vadd.f32 0.0, %v2684
        %v2686 = vpop.f32.mrf.mxu0
        %v2687 = vpop.f32.mrf.mxu0
        %v2688 = vadd.f32 0.0, %v2687
        %v2689 = vpop.f32.mrf.mxu0
        %2690 = vmatprep.mubr.bf16.mxu0 %v1733
        %2691 = vmatmul.mubr.bf16.gmra.mxu0 %v1732
        %v2692 = vpop.f32.mrf.mxu0
        %v2693 = vadd.f32 0.0, %v2692
        %v2694 = vpop.f32.mrf.mxu0
        %v2695 = vpop.f32.mrf.mxu0
        %v2696 = vadd.f32 0.0, %v2695
        %v2697 = vpop.f32.mrf.mxu0
        %2698 = vdwg.mxu0
        %2699 = vmatprep.subr.bf16.mxu0 0
        %2700 = vmatpush1.bf16.msra.mxu0 %v2255
        %2701 = vmatprep.subr.bf16.mxu0 0
        %2702 = vmatpush1.bf16.msra.mxu0 %v2252
        %2703 = vmatprep.subr.bf16.mxu0 0
        %2704 = vmatpush1.bf16.msra.mxu0 %v2249
        %2705 = vmatprep.subr.bf16.mxu0 0
        %2706 = vmatpush1.bf16.msra.mxu0 %v2246
        %2707 = vmatprep.subr.bf16.mxu0 0
        %2708 = vmatpush1.bf16.msra.mxu0 %v2243
        %2709 = vmatprep.subr.bf16.mxu0 0
        %2710 = vmatpush1.bf16.msra.mxu0 %v2240
        %2711 = vmatprep.subr.bf16.mxu0 0
        %2712 = vmatpush1.bf16.msra.mxu0 %v2237
        %2713 = vmatprep.subr.bf16.mxu0 0
        %2714 = vmatpush1.bf16.msra.mxu0 %v2234
        %2715 = vmatprep.subr.bf16.mxu0 0
        %2716 = vmatpush2.bf16.msra.mxu0 %v2279
        %2717 = vmatprep.subr.bf16.mxu0 0
        %2718 = vmatpush2.bf16.msra.mxu0 %v2276
        %2719 = vmatprep.subr.bf16.mxu0 0
        %2720 = vmatpush2.bf16.msra.mxu0 %v2273
        %2721 = vmatprep.subr.bf16.mxu0 0
        %2722 = vmatpush2.bf16.msra.mxu0 %v2270
        %2723 = vmatprep.subr.bf16.mxu0 0
        %2724 = vmatpush2.bf16.msra.mxu0 %v2267
        %2725 = vmatprep.subr.bf16.mxu0 0
        %2726 = vmatpush2.bf16.msra.mxu0 %v2264
        %2727 = vmatprep.subr.bf16.mxu0 0
        %2728 = vmatpush2.bf16.msra.mxu0 %v2261
        %2729 = vmatprep.subr.bf16.mxu0 0
        %2730 = vmatpush2.bf16.msra.mxu0 %v2258
        %2731 = vmatprep.mubr.bf16.mxu0 %v1707
        %2732 = vmatmul.mubr.bf16.gmra.mxu0 %v1706
        %v2733 = vpop.f32.mrf.mxu0
        %v2734 = vadd.f32 %v2637, %v2733
        %v2735 = vpop.f32.mrf.mxu0
        %v2736 = vpop.f32.mrf.mxu0
        %v2737 = vadd.f32 %v2640, %v2736
        %v2738 = vpop.f32.mrf.mxu0
        %2739 = vmatprep.mubr.bf16.mxu0 %v1711
        %2740 = vmatmul.mubr.bf16.gmra.mxu0 %v1710
        %v2741 = vpop.f32.mrf.mxu0
        %v2742 = vadd.f32 %v2645, %v2741
        %v2743 = vpop.f32.mrf.mxu0
        %v2744 = vpop.f32.mrf.mxu0
        %v2745 = vadd.f32 %v2648, %v2744
        %v2746 = vpop.f32.mrf.mxu0
        %2747 = vmatprep.mubr.bf16.mxu0 %v1715
        %2748 = vmatmul.mubr.bf16.gmra.mxu0 %v1714
        %v2749 = vpop.f32.mrf.mxu0
        %v2750 = vadd.f32 %v2653, %v2749
        %v2751 = vpop.f32.mrf.mxu0
        %v2752 = vpop.f32.mrf.mxu0
        %v2753 = vadd.f32 %v2656, %v2752
        %v2754 = vpop.f32.mrf.mxu0
        %2755 = vmatprep.mubr.bf16.mxu0 %v1719
        %2756 = vmatmul.mubr.bf16.gmra.mxu0 %v1718
        %v2757 = vpop.f32.mrf.mxu0
        %v2758 = vadd.f32 %v2661, %v2757
        %v2759 = vpop.f32.mrf.mxu0
        %v2760 = vpop.f32.mrf.mxu0
        %v2761 = vadd.f32 %v2664, %v2760
        %v2762 = vpop.f32.mrf.mxu0
        %2763 = vmatprep.mubr.bf16.mxu0 %v1723
        %2764 = vmatmul.mubr.bf16.gmra.mxu0 %v1722
        %v2765 = vpop.f32.mrf.mxu0
        %v2766 = vadd.f32 %v2669, %v2765
        %v2767 = vpop.f32.mrf.mxu0
        %v2768 = vpop.f32.mrf.mxu0
        %v2769 = vadd.f32 %v2672, %v2768
        %v2770 = vpop.f32.mrf.mxu0
        %2771 = vmatprep.mubr.bf16.mxu0 %v1727
        %2772 = vmatmul.mubr.bf16.gmra.mxu0 %v1726
        %v2773 = vpop.f32.mrf.mxu0
        %v2774 = vadd.f32 %v2677, %v2773
        %v2775 = vpop.f32.mrf.mxu0
        %v2776 = vpop.f32.mrf.mxu0
        %v2777 = vadd.f32 %v2680, %v2776
        %v2778 = vpop.f32.mrf.mxu0
        %2779 = vmatprep.mubr.bf16.mxu0 %v1731
        %2780 = vmatmul.mubr.bf16.gmra.mxu0 %v1730
        %v2781 = vpop.f32.mrf.mxu0
        %v2782 = vadd.f32 %v2685, %v2781
        %v2783 = vpop.f32.mrf.mxu0
        %v2784 = vpop.f32.mrf.mxu0
        %v2785 = vadd.f32 %v2688, %v2784
        %v2786 = vpop.f32.mrf.mxu0
        %2787 = vmatprep.mubr.bf16.mxu0 %v1735
        %2788 = vmatmul.mubr.bf16.gmra.mxu0 %v1734
        %v2789 = vpop.f32.mrf.mxu0
        %v2790 = vadd.f32 %v2693, %v2789
        %v2791 = vpop.f32.mrf.mxu0
        %v2792 = vpop.f32.mrf.mxu0
        %v2793 = vadd.f32 %v2696, %v2792
        %v2794 = vpop.f32.mrf.mxu0
        %2795 = vdwg.mxu0
        %v2796 = vadd.f32 %v1656, %v2524
        %v2797 = vadd.f32 %v1657, %v2526
        %v2798 = vadd.f32 %v1658, %v2734
        %v2799 = vadd.f32 %v1659, %v2528
        %v2800 = vadd.f32 %v1660, %v2530
        %v2801 = vadd.f32 %v1661, %v2737
        %v2802 = vadd.f32 %v1662, %v2534
        %v2803 = vadd.f32 %v1663, %v2536
        %v2804 = vadd.f32 %v1664, %v2742
        %v2805 = vadd.f32 %v1665, %v2538
        %v2806 = vadd.f32 %v1666, %v2540
        %v2807 = vadd.f32 %v1667, %v2745
        %v2808 = vadd.f32 %v1668, %v2544
        %v2809 = vadd.f32 %v1669, %v2546
        %v2810 = vadd.f32 %v1670, %v2750
        %v2811 = vadd.f32 %v1671, %v2548
        %v2812 = vadd.f32 %v1672, %v2550
        %v2813 = vadd.f32 %v1673, %v2753
        %v2814 = vadd.f32 %v1674, %v2554
        %v2815 = vadd.f32 %v1675, %v2556
        %v2816 = vadd.f32 %v1676, %v2758
        %v2817 = vadd.f32 %v1677, %v2558
        %v2818 = vadd.f32 %v1678, %v2560
        %v2819 = vadd.f32 %v1679, %v2761
        %v2820 = vadd.f32 %v1680, %v2564
        %v2821 = vadd.f32 %v1681, %v2566
        %v2822 = vadd.f32 %v1682, %v2766
        %v2823 = vadd.f32 %v1683, %v2568
        %v2824 = vadd.f32 %v1684, %v2570
        %v2825 = vadd.f32 %v1685, %v2769
        %v2826 = vadd.f32 %v1686, %v2574
        %v2827 = vadd.f32 %v1687, %v2576
        %v2828 = vadd.f32 %v1688, %v2774
        %v2829 = vadd.f32 %v1689, %v2578
        %v2830 = vadd.f32 %v1690, %v2580
        %v2831 = vadd.f32 %v1691, %v2777
        %v2832 = vadd.f32 %v1692, %v2584
        %v2833 = vadd.f32 %v1693, %v2586
        %v2834 = vadd.f32 %v1694, %v2782
        %v2835 = vadd.f32 %v1695, %v2588
        %v2836 = vadd.f32 %v1696, %v2590
        %v2837 = vadd.f32 %v1697, %v2785
        %v2838 = vadd.f32 %v1698, %v2594
        %v2839 = vadd.f32 %v1699, %v2596
        %v2840 = vadd.f32 %v1700, %v2790
        %v2841 = vadd.f32 %v1701, %v2598
        %v2842 = vadd.f32 %v1702, %v2600
        %v2843 = vadd.f32 %v1703, %v2793
        %2844 = vst [vmem:[#allocation2] sm:$0xff] %v2796
        %2845 = vst [vmem:[#allocation2 + $0x8] sm:$0xff] %v2797
        %2846 = vst [vmem:[#allocation2 + $0x10] sm:$0xff] %v2798
        %2847 = vst [vmem:[#allocation2 + $0x18] sm:$0xff] %v2799
        %2848 = vst [vmem:[#allocation2 + $0x20] sm:$0xff] %v2800
        %2849 = vst [vmem:[#allocation2 + $0x28] sm:$0xff] %v2801
        %2850 = vst [vmem:[#allocation2 + $0x30] sm:$0xff] %v2802
        %2851 = vst [vmem:[#allocation2 + $0x38] sm:$0xff] %v2803
        %2852 = vst [vmem:[#allocation2 + $0x40] sm:$0xff] %v2804
        %2853 = vst [vmem:[#allocation2 + $0x48] sm:$0xff] %v2805
        %2854 = vst [vmem:[#allocation2 + $0x50] sm:$0xff] %v2806
        %2855 = vst [vmem:[#allocation2 + $0x58] sm:$0xff] %v2807
        %2856 = vst [vmem:[#allocation2 + $0x60] sm:$0xff] %v2808
        %2857 = vst [vmem:[#allocation2 + $0x68] sm:$0xff] %v2809
        %2858 = vst [vmem:[#allocation2 + $0x70] sm:$0xff] %v2810
        %2859 = vst [vmem:[#allocation2 + $0x78] sm:$0xff] %v2811
        %2860 = vst [vmem:[#allocation2 + $0x80] sm:$0xff] %v2812
        %2861 = vst [vmem:[#allocation2 + $0x88] sm:$0xff] %v2813
        %2862 = vst [vmem:[#allocation2 + $0x90] sm:$0xff] %v2814
        %2863 = vst [vmem:[#allocation2 + $0x98] sm:$0xff] %v2815
        %2864 = vst [vmem:[#allocation2 + $0xa0] sm:$0xff] %v2816
        %2865 = vst [vmem:[#allocation2 + $0xa8] sm:$0xff] %v2817
        %2866 = vst [vmem:[#allocation2 + $0xb0] sm:$0xff] %v2818
        %2867 = vst [vmem:[#allocation2 + $0xb8] sm:$0xff] %v2819
        %2868 = vst [vmem:[#allocation2 + $0xc0] sm:$0xff] %v2820
        %2869 = vst [vmem:[#allocation2 + $0xc8] sm:$0xff] %v2821
        %2870 = vst [vmem:[#allocation2 + $0xd0] sm:$0xff] %v2822
        %2871 = vst [vmem:[#allocation2 + $0xd8] sm:$0xff] %v2823
        %2872 = vst [vmem:[#allocation2 + $0xe0] sm:$0xff] %v2824
        %2873 = vst [vmem:[#allocation2 + $0xe8] sm:$0xff] %v2825
        %2874 = vst [vmem:[#allocation2 + $0xf0] sm:$0xff] %v2826
        %2875 = vst [vmem:[#allocation2 + $0xf8] sm:$0xff] %v2827
        %2876 = vst [vmem:[#allocation2 + $0x100] sm:$0xff] %v2828
        %2877 = vst [vmem:[#allocation2 + $0x108] sm:$0xff] %v2829
        %2878 = vst [vmem:[#allocation2 + $0x110] sm:$0xff] %v2830
        %2879 = vst [vmem:[#allocation2 + $0x118] sm:$0xff] %v2831
        %2880 = vst [vmem:[#allocation2 + $0x120] sm:$0xff] %v2832
        %2881 = vst [vmem:[#allocation2 + $0x128] sm:$0xff] %v2833
        %2882 = vst [vmem:[#allocation2 + $0x130] sm:$0xff] %v2834
        %2883 = vst [vmem:[#allocation2 + $0x138] sm:$0xff] %v2835
        %2884 = vst [vmem:[#allocation2 + $0x140] sm:$0xff] %v2836
        %2885 = vst [vmem:[#allocation2 + $0x148] sm:$0xff] %v2837
        %2886 = vst [vmem:[#allocation2 + $0x150] sm:$0xff] %v2838
        %2887 = vst [vmem:[#allocation2 + $0x158] sm:$0xff] %v2839
        %2888 = vst [vmem:[#allocation2 + $0x160] sm:$0xff] %v2840
        %2889 = vst [vmem:[#allocation2 + $0x168] sm:$0xff] %v2841
        %2890 = vst [vmem:[#allocation2 + $0x170] sm:$0xff] %v2842
        %2891 = vst [vmem:[#allocation2 + $0x178] sm:$0xff] %v2843
        %p2892 = scmp.eq.s32.totalorder %s31, 2
        // Predicated region
        $region73: #{tpu_custom_call.1} parent=43 // pred_check
          %p2893 = pneg %p2892
        $region74: #{tpu_custom_call.1} parent=43 // pred_check_branch
          %2895 = sbr.rel (%p2893) target = $region76
        $region75: #{tpu_custom_call.1} parent=43 // pred_region
          %v2896 = vld [vmem:[#allocation2] sm:$0xff]
          %v2897 = vld [vmem:[#allocation2 + $0x8] sm:$0xff]
          %v2898 = vld [vmem:[#allocation2 + $0x10] sm:$0xff]
          %v2899 = vld [vmem:[#allocation2 + $0x18] sm:$0xff]
          %v2900 = vld [vmem:[#allocation2 + $0x20] sm:$0xff]
          %v2901 = vld [vmem:[#allocation2 + $0x28] sm:$0xff]
          %v2902 = vld [vmem:[#allocation2 + $0x30] sm:$0xff]
          %v2903 = vld [vmem:[#allocation2 + $0x38] sm:$0xff]
          %v2904 = vld [vmem:[#allocation2 + $0x40] sm:$0xff]
          %v2905 = vld [vmem:[#allocation2 + $0x48] sm:$0xff]
          %v2906 = vld [vmem:[#allocation2 + $0x50] sm:$0xff]
          %v2907 = vld [vmem:[#allocation2 + $0x58] sm:$0xff]
          %v2908 = vld [vmem:[#allocation2 + $0x60] sm:$0xff]
          %v2909 = vld [vmem:[#allocation2 + $0x68] sm:$0xff]
          %v2910 = vld [vmem:[#allocation2 + $0x70] sm:$0xff]
          %v2911 = vld [vmem:[#allocation2 + $0x78] sm:$0xff]
          %v2912 = vld [vmem:[#allocation2 + $0x80] sm:$0xff]
          %v2913 = vld [vmem:[#allocation2 + $0x88] sm:$0xff]
          %v2914 = vld [vmem:[#allocation2 + $0x90] sm:$0xff]
          %v2915 = vld [vmem:[#allocation2 + $0x98] sm:$0xff]
          %v2916 = vld [vmem:[#allocation2 + $0xa0] sm:$0xff]
          %v2917 = vld [vmem:[#allocation2 + $0xa8] sm:$0xff]
          %v2918 = vld [vmem:[#allocation2 + $0xb0] sm:$0xff]
          %v2919 = vld [vmem:[#allocation2 + $0xb8] sm:$0xff]
          %v2920 = vld [vmem:[#allocation2 + $0xc0] sm:$0xff]
          %v2921 = vld [vmem:[#allocation2 + $0xc8] sm:$0xff]
          %v2922 = vld [vmem:[#allocation2 + $0xd0] sm:$0xff]
          %v2923 = vld [vmem:[#allocation2 + $0xd8] sm:$0xff]
          %v2924 = vld [vmem:[#allocation2 + $0xe0] sm:$0xff]
          %v2925 = vld [vmem:[#allocation2 + $0xe8] sm:$0xff]
          %v2926 = vld [vmem:[#allocation2 + $0xf0] sm:$0xff]
          %v2927 = vld [vmem:[#allocation2 + $0xf8] sm:$0xff]
          %v2928 = vld [vmem:[#allocation2 + $0x100] sm:$0xff]
          %v2929 = vld [vmem:[#allocation2 + $0x108] sm:$0xff]
          %v2930 = vld [vmem:[#allocation2 + $0x110] sm:$0xff]
          %v2931 = vld [vmem:[#allocation2 + $0x118] sm:$0xff]
          %v2932 = vld [vmem:[#allocation2 + $0x120] sm:$0xff]
          %v2933 = vld [vmem:[#allocation2 + $0x128] sm:$0xff]
          %v2934 = vld [vmem:[#allocation2 + $0x130] sm:$0xff]
          %v2935 = vld [vmem:[#allocation2 + $0x138] sm:$0xff]
          %v2936 = vld [vmem:[#allocation2 + $0x140] sm:$0xff]
          %v2937 = vld [vmem:[#allocation2 + $0x148] sm:$0xff]
          %v2938 = vld [vmem:[#allocation2 + $0x150] sm:$0xff]
          %v2939 = vld [vmem:[#allocation2 + $0x158] sm:$0xff]
          %v2940 = vld [vmem:[#allocation2 + $0x160] sm:$0xff]
          %v2941 = vld [vmem:[#allocation2 + $0x168] sm:$0xff]
          %v2942 = vld [vmem:[#allocation2 + $0x170] sm:$0xff]
          %v2943 = vld [vmem:[#allocation2 + $0x178] sm:$0xff]
          %v2944 = vld [vmem:[#allocation11] sm:$0x7]
          %v2946 = vlaneseq
          %v2947 = vshrl.u32 %v2946, 7
          %v2948 = vsub.s32 0, %v2947
          %v2949 = vrot.slane %v2944, %v2948
          %v2950 = vlaneseq
          %v2951 = vshrl.u32 %v2950, 7
          %v2952 = vsub.s32 1, %v2951
          %v2953 = vrot.slane %v2944, %v2952
          %v2954 = vlaneseq
          %v2955 = vshrl.u32 %v2954, 7
          %v2956 = vsub.s32 2, %v2955
          %v2957 = vrot.slane %v2944, %v2956
          %v2961 = vadd.f32 %v2896, %v2949
          %v2962 = vadd.f32 %v2897, %v2953
          %v2963 = vadd.f32 %v2898, %v2957
          %v2964 = vadd.f32 %v2899, %v2949
          %v2965 = vadd.f32 %v2900, %v2953
          %v2966 = vadd.f32 %v2901, %v2957
          %v2967 = vadd.f32 %v2902, %v2949
          %v2968 = vadd.f32 %v2903, %v2953
          %v2969 = vadd.f32 %v2904, %v2957
          %v2970 = vadd.f32 %v2905, %v2949
          %v2971 = vadd.f32 %v2906, %v2953
          %v2972 = vadd.f32 %v2907, %v2957
          %v2973 = vadd.f32 %v2908, %v2949
          %v2974 = vadd.f32 %v2909, %v2953
          %v2975 = vadd.f32 %v2910, %v2957
          %v2976 = vadd.f32 %v2911, %v2949
          %v2977 = vadd.f32 %v2912, %v2953
          %v2978 = vadd.f32 %v2913, %v2957
          %v2979 = vadd.f32 %v2914, %v2949
          %v2980 = vadd.f32 %v2915, %v2953
          %v2981 = vadd.f32 %v2916, %v2957
          %v2982 = vadd.f32 %v2917, %v2949
          %v2983 = vadd.f32 %v2918, %v2953
          %v2984 = vadd.f32 %v2919, %v2957
          %v2985 = vadd.f32 %v2920, %v2949
          %v2986 = vadd.f32 %v2921, %v2953
          %v2987 = vadd.f32 %v2922, %v2957
          %v2988 = vadd.f32 %v2923, %v2949
          %v2989 = vadd.f32 %v2924, %v2953
          %v2990 = vadd.f32 %v2925, %v2957
          %v2991 = vadd.f32 %v2926, %v2949
          %v2992 = vadd.f32 %v2927, %v2953
          %v2993 = vadd.f32 %v2928, %v2957
          %v2994 = vadd.f32 %v2929, %v2949
          %v2995 = vadd.f32 %v2930, %v2953
          %v2996 = vadd.f32 %v2931, %v2957
          %v2997 = vadd.f32 %v2932, %v2949
          %v2998 = vadd.f32 %v2933, %v2953
          %v2999 = vadd.f32 %v2934, %v2957
          %v3000 = vadd.f32 %v2935, %v2949
          %v3001 = vadd.f32 %v2936, %v2953
          %v3002 = vadd.f32 %v2937, %v2957
          %v3003 = vadd.f32 %v2938, %v2949
          %v3004 = vadd.f32 %v2939, %v2953
          %v3005 = vadd.f32 %v2940, %v2957
          %v3006 = vadd.f32 %v2941, %v2949
          %v3007 = vadd.f32 %v2942, %v2953
          %v3008 = vadd.f32 %v2943, %v2957
          %v3009 = vld [vmem:[#allocation12] sm:$0xff]
          %v3010 = vld [vmem:[#allocation12 + $0x8] sm:$0xff]
          %v3011 = vld [vmem:[#allocation12 + $0x10] sm:$0xff]
          %v3012 = vld [vmem:[#allocation12 + $0x18] sm:$0xff]
          %v3013 = vld [vmem:[#allocation12 + $0x20] sm:$0xff]
          %v3014 = vld [vmem:[#allocation12 + $0x28] sm:$0xff]
          %v3015 = vld [vmem:[#allocation12 + $0x30] sm:$0xff]
          %v3016 = vld [vmem:[#allocation12 + $0x38] sm:$0xff]
          %v3017 = vld [vmem:[#allocation12 + $0x40] sm:$0xff]
          %v3018 = vld [vmem:[#allocation12 + $0x48] sm:$0xff]
          %v3019 = vld [vmem:[#allocation12 + $0x50] sm:$0xff]
          %v3020 = vld [vmem:[#allocation12 + $0x58] sm:$0xff]
          %v3021 = vld [vmem:[#allocation12 + $0x60] sm:$0xff]
          %v3022 = vld [vmem:[#allocation12 + $0x68] sm:$0xff]
          %v3023 = vld [vmem:[#allocation12 + $0x70] sm:$0xff]
          %v3024 = vld [vmem:[#allocation12 + $0x78] sm:$0xff]
          %v3025 = vld [vmem:[#allocation12 + $0x80] sm:$0xff]
          %v3026 = vld [vmem:[#allocation12 + $0x88] sm:$0xff]
          %v3027 = vld [vmem:[#allocation12 + $0x90] sm:$0xff]
          %v3028 = vld [vmem:[#allocation12 + $0x98] sm:$0xff]
          %v3029 = vld [vmem:[#allocation12 + $0xa0] sm:$0xff]
          %v3030 = vld [vmem:[#allocation12 + $0xa8] sm:$0xff]
          %v3031 = vld [vmem:[#allocation12 + $0xb0] sm:$0xff]
          %v3032 = vld [vmem:[#allocation12 + $0xb8] sm:$0xff]
          %v3033 = vld [vmem:[#allocation12 + $0xc0] sm:$0xff]
          %v3034 = vld [vmem:[#allocation12 + $0xc8] sm:$0xff]
          %v3035 = vld [vmem:[#allocation12 + $0xd0] sm:$0xff]
          %v3036 = vld [vmem:[#allocation12 + $0xd8] sm:$0xff]
          %v3037 = vld [vmem:[#allocation12 + $0xe0] sm:$0xff]
          %v3038 = vld [vmem:[#allocation12 + $0xe8] sm:$0xff]
          %v3039 = vld [vmem:[#allocation12 + $0xf0] sm:$0xff]
          %v3040 = vld [vmem:[#allocation12 + $0xf8] sm:$0xff]
          %v3041 = vld [vmem:[#allocation12 + $0x100] sm:$0xff]
          %v3042 = vld [vmem:[#allocation12 + $0x108] sm:$0xff]
          %v3043 = vld [vmem:[#allocation12 + $0x110] sm:$0xff]
          %v3044 = vld [vmem:[#allocation12 + $0x118] sm:$0xff]
          %v3045 = vld [vmem:[#allocation12 + $0x120] sm:$0xff]
          %v3046 = vld [vmem:[#allocation12 + $0x128] sm:$0xff]
          %v3047 = vld [vmem:[#allocation12 + $0x130] sm:$0xff]
          %v3048 = vld [vmem:[#allocation12 + $0x138] sm:$0xff]
          %v3049 = vld [vmem:[#allocation12 + $0x140] sm:$0xff]
          %v3050 = vld [vmem:[#allocation12 + $0x148] sm:$0xff]
          %v3051 = vld [vmem:[#allocation12 + $0x150] sm:$0xff]
          %v3052 = vld [vmem:[#allocation12 + $0x158] sm:$0xff]
          %v3053 = vld [vmem:[#allocation12 + $0x160] sm:$0xff]
          %v3054 = vld [vmem:[#allocation12 + $0x168] sm:$0xff]
          %v3055 = vld [vmem:[#allocation12 + $0x170] sm:$0xff]
          %v3056 = vld [vmem:[#allocation12 + $0x178] sm:$0xff]
          %vm3057 = vcmp.ge.u32.totalorder %v3009, 858993459
          %vm3058 = vcmp.ge.u32.totalorder %v3010, 858993459
          %vm3059 = vcmp.ge.u32.totalorder %v3011, 858993459
          %vm3060 = vcmp.ge.u32.totalorder %v3012, 858993459
          %vm3061 = vcmp.ge.u32.totalorder %v3013, 858993459
          %vm3062 = vcmp.ge.u32.totalorder %v3014, 858993459
          %vm3063 = vcmp.ge.u32.totalorder %v3015, 858993459
          %vm3064 = vcmp.ge.u32.totalorder %v3016, 858993459
          %vm3065 = vcmp.ge.u32.totalorder %v3017, 858993459
          %vm3066 = vcmp.ge.u32.totalorder %v3018, 858993459
          %vm3067 = vcmp.ge.u32.totalorder %v3019, 858993459
          %vm3068 = vcmp.ge.u32.totalorder %v3020, 858993459
          %vm3069 = vcmp.ge.u32.totalorder %v3021, 858993459
          %vm3070 = vcmp.ge.u32.totalorder %v3022, 858993459
          %vm3071 = vcmp.ge.u32.totalorder %v3023, 858993459
          %vm3072 = vcmp.ge.u32.totalorder %v3024, 858993459
          %vm3073 = vcmp.ge.u32.totalorder %v3025, 858993459
          %vm3074 = vcmp.ge.u32.totalorder %v3026, 858993459
          %vm3075 = vcmp.ge.u32.totalorder %v3027, 858993459
          %vm3076 = vcmp.ge.u32.totalorder %v3028, 858993459
          %vm3077 = vcmp.ge.u32.totalorder %v3029, 858993459
          %vm3078 = vcmp.ge.u32.totalorder %v3030, 858993459
          %vm3079 = vcmp.ge.u32.totalorder %v3031, 858993459
          %vm3080 = vcmp.ge.u32.totalorder %v3032, 858993459
          %vm3081 = vcmp.ge.u32.totalorder %v3033, 858993459
          %vm3082 = vcmp.ge.u32.totalorder %v3034, 858993459
          %vm3083 = vcmp.ge.u32.totalorder %v3035, 858993459
          %vm3084 = vcmp.ge.u32.totalorder %v3036, 858993459
          %vm3085 = vcmp.ge.u32.totalorder %v3037, 858993459
          %vm3086 = vcmp.ge.u32.totalorder %v3038, 858993459
          %vm3087 = vcmp.ge.u32.totalorder %v3039, 858993459
          %vm3088 = vcmp.ge.u32.totalorder %v3040, 858993459
          %vm3089 = vcmp.ge.u32.totalorder %v3041, 858993459
          %vm3090 = vcmp.ge.u32.totalorder %v3042, 858993459
          %vm3091 = vcmp.ge.u32.totalorder %v3043, 858993459
          %vm3092 = vcmp.ge.u32.totalorder %v3044, 858993459
          %vm3093 = vcmp.ge.u32.totalorder %v3045, 858993459
          %vm3094 = vcmp.ge.u32.totalorder %v3046, 858993459
          %vm3095 = vcmp.ge.u32.totalorder %v3047, 858993459
          %vm3096 = vcmp.ge.u32.totalorder %v3048, 858993459
          %vm3097 = vcmp.ge.u32.totalorder %v3049, 858993459
          %vm3098 = vcmp.ge.u32.totalorder %v3050, 858993459
          %vm3099 = vcmp.ge.u32.totalorder %v3051, 858993459
          %vm3100 = vcmp.ge.u32.totalorder %v3052, 858993459
          %vm3101 = vcmp.ge.u32.totalorder %v3053, 858993459
          %vm3102 = vcmp.ge.u32.totalorder %v3054, 858993459
          %vm3103 = vcmp.ge.u32.totalorder %v3055, 858993459
          %vm3104 = vcmp.ge.u32.totalorder %v3056, 858993459
          %v3105 = vmul.f32 %v2961, 1.25
          %v3106 = vmul.f32 %v2962, 1.25
          %v3107 = vmul.f32 %v2963, 1.25
          %v3108 = vmul.f32 %v2964, 1.25
          %v3109 = vmul.f32 %v2965, 1.25
          %v3110 = vmul.f32 %v2966, 1.25
          %v3111 = vmul.f32 %v2967, 1.25
          %v3112 = vmul.f32 %v2968, 1.25
          %v3113 = vmul.f32 %v2969, 1.25
          %v3114 = vmul.f32 %v2970, 1.25
          %v3115 = vmul.f32 %v2971, 1.25
          %v3116 = vmul.f32 %v2972, 1.25
          %v3117 = vmul.f32 %v2973, 1.25
          %v3118 = vmul.f32 %v2974, 1.25
          %v3119 = vmul.f32 %v2975, 1.25
          %v3120 = vmul.f32 %v2976, 1.25
          %v3121 = vmul.f32 %v2977, 1.25
          %v3122 = vmul.f32 %v2978, 1.25
          %v3123 = vmul.f32 %v2979, 1.25
          %v3124 = vmul.f32 %v2980, 1.25
          %v3125 = vmul.f32 %v2981, 1.25
          %v3126 = vmul.f32 %v2982, 1.25
          %v3127 = vmul.f32 %v2983, 1.25
          %v3128 = vmul.f32 %v2984, 1.25
          %v3129 = vmul.f32 %v2985, 1.25
          %v3130 = vmul.f32 %v2986, 1.25
          %v3131 = vmul.f32 %v2987, 1.25
          %v3132 = vmul.f32 %v2988, 1.25
          %v3133 = vmul.f32 %v2989, 1.25
          %v3134 = vmul.f32 %v2990, 1.25
          %v3135 = vmul.f32 %v2991, 1.25
          %v3136 = vmul.f32 %v2992, 1.25
          %v3137 = vmul.f32 %v2993, 1.25
          %v3138 = vmul.f32 %v2994, 1.25
          %v3139 = vmul.f32 %v2995, 1.25
          %v3140 = vmul.f32 %v2996, 1.25
          %v3141 = vmul.f32 %v2997, 1.25
          %v3142 = vmul.f32 %v2998, 1.25
          %v3143 = vmul.f32 %v2999, 1.25
          %v3144 = vmul.f32 %v3000, 1.25
          %v3145 = vmul.f32 %v3001, 1.25
          %v3146 = vmul.f32 %v3002, 1.25
          %v3147 = vmul.f32 %v3003, 1.25
          %v3148 = vmul.f32 %v3004, 1.25
          %v3149 = vmul.f32 %v3005, 1.25
          %v3150 = vmul.f32 %v3006, 1.25
          %v3151 = vmul.f32 %v3007, 1.25
          %v3152 = vmul.f32 %v3008, 1.25
          %v3153 = vsel %vm3057, %v3105, 0.0
          %v3154 = vsel %vm3058, %v3106, 0.0
          %v3155 = vsel %vm3059, %v3107, 0.0
          %v3156 = vsel %vm3060, %v3108, 0.0
          %v3157 = vsel %vm3061, %v3109, 0.0
          %v3158 = vsel %vm3062, %v3110, 0.0
          %v3159 = vsel %vm3063, %v3111, 0.0
          %v3160 = vsel %vm3064, %v3112, 0.0
          %v3161 = vsel %vm3065, %v3113, 0.0
          %v3162 = vsel %vm3066, %v3114, 0.0
          %v3163 = vsel %vm3067, %v3115, 0.0
          %v3164 = vsel %vm3068, %v3116, 0.0
          %v3165 = vsel %vm3069, %v3117, 0.0
          %v3166 = vsel %vm3070, %v3118, 0.0
          %v3167 = vsel %vm3071, %v3119, 0.0
          %v3168 = vsel %vm3072, %v3120, 0.0
          %v3169 = vsel %vm3073, %v3121, 0.0
          %v3170 = vsel %vm3074, %v3122, 0.0
          %v3171 = vsel %vm3075, %v3123, 0.0
          %v3172 = vsel %vm3076, %v3124, 0.0
          %v3173 = vsel %vm3077, %v3125, 0.0
          %v3174 = vsel %vm3078, %v3126, 0.0
          %v3175 = vsel %vm3079, %v3127, 0.0
          %v3176 = vsel %vm3080, %v3128, 0.0
          %v3177 = vsel %vm3081, %v3129, 0.0
          %v3178 = vsel %vm3082, %v3130, 0.0
          %v3179 = vsel %vm3083, %v3131, 0.0
          %v3180 = vsel %vm3084, %v3132, 0.0
          %v3181 = vsel %vm3085, %v3133, 0.0
          %v3182 = vsel %vm3086, %v3134, 0.0
          %v3183 = vsel %vm3087, %v3135, 0.0
          %v3184 = vsel %vm3088, %v3136, 0.0
          %v3185 = vsel %vm3089, %v3137, 0.0
          %v3186 = vsel %vm3090, %v3138, 0.0
          %v3187 = vsel %vm3091, %v3139, 0.0
          %v3188 = vsel %vm3092, %v3140, 0.0
          %v3189 = vsel %vm3093, %v3141, 0.0
          %v3190 = vsel %vm3094, %v3142, 0.0
          %v3191 = vsel %vm3095, %v3143, 0.0
          %v3192 = vsel %vm3096, %v3144, 0.0
          %v3193 = vsel %vm3097, %v3145, 0.0
          %v3194 = vsel %vm3098, %v3146, 0.0
          %v3195 = vsel %vm3099, %v3147, 0.0
          %v3196 = vsel %vm3100, %v3148, 0.0
          %v3197 = vsel %vm3101, %v3149, 0.0
          %v3198 = vsel %vm3102, %v3150, 0.0
          %v3199 = vsel %vm3103, %v3151, 0.0
          %v3200 = vsel %vm3104, %v3152, 0.0
          %3201 = vst [vmem:[#allocation14] sm:$0xff] %v3153
          %3202 = vst [vmem:[#allocation14 + $0x8] sm:$0xff] %v3154
          %3203 = vst [vmem:[#allocation14 + $0x10] sm:$0xff] %v3155
          %3204 = vst [vmem:[#allocation14 + $0x18] sm:$0xff] %v3156
          %3205 = vst [vmem:[#allocation14 + $0x20] sm:$0xff] %v3157
          %3206 = vst [vmem:[#allocation14 + $0x28] sm:$0xff] %v3158
          %3207 = vst [vmem:[#allocation14 + $0x30] sm:$0xff] %v3159
          %3208 = vst [vmem:[#allocation14 + $0x38] sm:$0xff] %v3160
          %3209 = vst [vmem:[#allocation14 + $0x40] sm:$0xff] %v3161
          %3210 = vst [vmem:[#allocation14 + $0x48] sm:$0xff] %v3162
          %3211 = vst [vmem:[#allocation14 + $0x50] sm:$0xff] %v3163
          %3212 = vst [vmem:[#allocation14 + $0x58] sm:$0xff] %v3164
          %3213 = vst [vmem:[#allocation14 + $0x60] sm:$0xff] %v3165
          %3214 = vst [vmem:[#allocation14 + $0x68] sm:$0xff] %v3166
          %3215 = vst [vmem:[#allocation14 + $0x70] sm:$0xff] %v3167
          %3216 = vst [vmem:[#allocation14 + $0x78] sm:$0xff] %v3168
          %3217 = vst [vmem:[#allocation14 + $0x80] sm:$0xff] %v3169
          %3218 = vst [vmem:[#allocation14 + $0x88] sm:$0xff] %v3170
          %3219 = vst [vmem:[#allocation14 + $0x90] sm:$0xff] %v3171
          %3220 = vst [vmem:[#allocation14 + $0x98] sm:$0xff] %v3172
          %3221 = vst [vmem:[#allocation14 + $0xa0] sm:$0xff] %v3173
          %3222 = vst [vmem:[#allocation14 + $0xa8] sm:$0xff] %v3174
          %3223 = vst [vmem:[#allocation14 + $0xb0] sm:$0xff] %v3175
          %3224 = vst [vmem:[#allocation14 + $0xb8] sm:$0xff] %v3176
          %3225 = vst [vmem:[#allocation14 + $0xc0] sm:$0xff] %v3177
          %3226 = vst [vmem:[#allocation14 + $0xc8] sm:$0xff] %v3178
          %3227 = vst [vmem:[#allocation14 + $0xd0] sm:$0xff] %v3179
          %3228 = vst [vmem:[#allocation14 + $0xd8] sm:$0xff] %v3180
          %3229 = vst [vmem:[#allocation14 + $0xe0] sm:$0xff] %v3181
          %3230 = vst [vmem:[#allocation14 + $0xe8] sm:$0xff] %v3182
          %3231 = vst [vmem:[#allocation14 + $0xf0] sm:$0xff] %v3183
          %3232 = vst [vmem:[#allocation14 + $0xf8] sm:$0xff] %v3184
          %3233 = vst [vmem:[#allocation14 + $0x100] sm:$0xff] %v3185
          %3234 = vst [vmem:[#allocation14 + $0x108] sm:$0xff] %v3186
          %3235 = vst [vmem:[#allocation14 + $0x110] sm:$0xff] %v3187
          %3236 = vst [vmem:[#allocation14 + $0x118] sm:$0xff] %v3188
          %3237 = vst [vmem:[#allocation14 + $0x120] sm:$0xff] %v3189
          %3238 = vst [vmem:[#allocation14 + $0x128] sm:$0xff] %v3190
          %3239 = vst [vmem:[#allocation14 + $0x130] sm:$0xff] %v3191
          %3240 = vst [vmem:[#allocation14 + $0x138] sm:$0xff] %v3192
          %3241 = vst [vmem:[#allocation14 + $0x140] sm:$0xff] %v3193
          %3242 = vst [vmem:[#allocation14 + $0x148] sm:$0xff] %v3194
          %3243 = vst [vmem:[#allocation14 + $0x150] sm:$0xff] %v3195
          %3244 = vst [vmem:[#allocation14 + $0x158] sm:$0xff] %v3196
          %3245 = vst [vmem:[#allocation14 + $0x160] sm:$0xff] %v3197
          %3246 = vst [vmem:[#allocation14 + $0x168] sm:$0xff] %v3198
          %3247 = vst [vmem:[#allocation14 + $0x170] sm:$0xff] %v3199
          %3248 = vst [vmem:[#allocation14 + $0x178] sm:$0xff] %v3200
        $region76: #{tpu_custom_call.1} parent=43 // pred_fallthru
          _
        // Predicated region
        $region77: #{tpu_custom_call.1} parent=43 // pred_check
          %p3249 = pneg %p207
        $region78: #{tpu_custom_call.1} parent=43 // pred_check_branch
          %3251 = sbr.rel (%p3249) target = $region80
        $region79: #{tpu_custom_call.1} parent=43 // pred_region
          %s3252 = smul.u32 16, %s30
          %s3254 = ssub.s32 6144, 6144
          %3255 = vsyncadd [#allocation5], %s3254
          %s3256 = smul.addr %s3252, 3
          %s3257 = smul.addr %s3256, 128
          %s3258 = scalar_lea.hbm %s6, %s3257
          %s3259 = sshll.u32 [#allocation14], 4
          %s3260 = int_to_ptr.vmem [resolvable:$true] %s3259
          %3265 = dma.vmem_to_hbm [thread:$0]  %s3260, 6144, %s3258, [#allocation5], 384, 384, 24
        $region80: #{tpu_custom_call.1} parent=43 // pred_fallthru
          _
        // Predicated region
        $region81: #{tpu_custom_call.1} parent=43 // pred_check
          %p3266 = pneg %p207
        $region82: #{tpu_custom_call.1} parent=43 // pred_check_branch
          %3268 = sbr.rel (%p3266) target = $region84
        $region83: #{tpu_custom_call.1} parent=43 // pred_region
          %3269 = dma.done [#allocation5], 6144
        $region84: #{tpu_custom_call.1} parent=43 // pred_fallthru
          _
      $region44: #{tpu_custom_call.1} parent=5 // pred_fallthru
        _
      %p3270 = scmp.le.s32.totalorder 2, %s21
      // Predicated region
      $region85: #{tpu_custom_call.1} parent=5 // pred_check
        %p3271 = pneg %p3270
      $region86: #{tpu_custom_call.1} parent=5 // pred_check_branch
        %3273 = sbr.rel (%p3271) target = $region88
      $region87: #{tpu_custom_call.1} parent=5 // pred_region
        %s3274 = ssub.s32 %s21, 2
      $region88: #{tpu_custom_call.1} parent=5 // pred_fallthru
        _
    $region6: #{tpu_custom_call.1} parent=1 // loop_footer
      %s25 = sadd.s32 1, %s21
    $region7: #{tpu_custom_call.1} parent=1 // loop_footer_branch
      %20 = sbr.rel target = $region3
    $region8: #{tpu_custom_call.1} parent=1 // loop_exit
      _
    %3275 = vsyncpa [#allocation4], 1
    %s3276 = scalar_lea.sflag [#allocation4], 1
    %3277 = vsyncpa %s3276, 1
    %3278 = vsyncpa [#allocation7], 1
    %s3279 = scalar_lea.sflag [#allocation7], 1
    %3280 = vsyncpa %s3279, 1
    %3281 = vsyncpa [#allocation10], 1
    %s3282 = scalar_lea.sflag [#allocation10], 1
    %3283 = vsyncpa %s3282, 1
    %3284 = vsyncpa [#allocation13], 1
    %3285 = vsyncpa [#allocation5], 1
    %s3286 = scalar_lea.sflag [#allocation5], 1
    %3287 = vsyncpa %s3286, 1

</llo_original>
